<compile_context>
chip_gen: v6e
topology: v6e:2x2x1
jax: 0.10.0
libtpu: 0.0.40
codegen_flags: <defaults>
</compile_context>

<pallas_src>
import functools

import jax
import jax.numpy as jnp
import numpy as np
from jax import lax
from jax.experimental import pallas as pl
from jax.experimental.pallas import tpu as pltpu


# --------------------------- BlockSpec helpers ------------------------------
def _const_spec(shape):
    zeros = (0,) * len(shape)
    return pl.BlockSpec(shape, lambda i, _z=zeros: _z)
    # TODO(synk): once embedding tables get large, mark constant specs with
    # pipeline_mode=pl.Buffered(1) (or move tables to pl.ANY + DMA gather) to
    # avoid double-buffered copies of the weights on v7x's 64 MiB VMEM.


# ------------------------------ fused kernel --------------------------------
def _dlrm_fused_kernel(*refs, n_bot, n_top_hidden, bag, n_tables, vpad, d,
                       pairs):
    it = iter(refs)
    dense_ref = next(it)                       # (Bt, n_dense)               f32
    idx_ref = next(it)                         # (Bt, n_tables*bag)          i32
    emb_ref = next(it)                         # (n_tables*Vpad, n_tables*d) bf16 block-diag
    bot = [(next(it), next(it)) for _ in range(n_bot)]
    top = [(next(it), next(it)) for _ in range(n_top_hidden)]
    wlast_ref, blast_ref = next(it), next(it)  # (1, h_last) f32, (1, 1) f32
    out_ref = next(it)                         # (1, Bt)                     f32

    bf16, f32 = jnp.bfloat16, jnp.float32

    # ---------------- bottom MLP (bf16 MXU operands, f32 accum + VPU post) --
    x = dense_ref[...]
    for w_ref, b_ref in bot:
        x = jnp.maximum(
            jnp.dot(x.astype(bf16), w_ref[...], preferred_element_type=f32)
            + b_ref[...], 0.0)                 # create_mlp appends ReLU

    # ---- EmbeddingBag(mode='mean'): bag-loop one-hot counts, ONE MXU matmul
    # against the block-diagonal packed tables (no (Bt, bag, Vpad) tensor). --
    idx = idx_ref[...]
    bt = idx.shape[0]
    lane_ids = lax.broadcasted_iota(jnp.int32, (1, vpad), 1)
    counts_cols = []
    for k in range(n_tables):
        c = jnp.zeros((bt, vpad), f32)
        for j in range(bag):                   # static, small bag
            col = idx[:, k * bag + j:k * bag + j + 1]          # (Bt, 1) i32
            c = c + (col == lane_ids).astype(f32)
        counts_cols.append(c.astype(bf16))     # exact: counts <= bag << 256
    counts = jnp.concatenate(counts_cols, axis=1)     # (Bt, n_tables*Vpad) bf16
    pooled = jnp.dot(counts, emb_ref[...],
                     preferred_element_type=f32) * (1.0 / bag)  # (Bt, n_tables*d)

    # -------- 'dot' interaction: only the strict-lower pairs, computed
    # directly from live features (no VMEM scratch round-trip). ---------------
    feats = [x] + [pooled[:, k * d:(k + 1) * d] for k in range(n_tables)]
    zcols = [jnp.sum(feats[i] * feats[j], axis=-1, keepdims=True)
             for (i, j) in pairs]              # reference (li, lj) order
    r = jnp.concatenate([x] + zcols, axis=1)   # (Bt, d + n_pairs)

    # ----------------------------- top MLP ----------------------------------
    h = r
    for w_ref, b_ref in top:
        h = jnp.maximum(
            jnp.dot(h.astype(bf16), w_ref[...], preferred_element_type=f32)
            + b_ref[...], 0.0)

    # ------------- final (out_features == 1) layer on the VPU ---------------
    y = jnp.sum(h * wlast_ref[...], axis=-1)              # (Bt,)
    out_ref[...] = jnp.maximum(y.reshape(1, -1) + blast_ref[...], 0.0)


# ------------------------------- wrapper ------------------------------------
def dlrm_forward(dense_x, idx_flat, emb_bd, bot_params, top_hidden, top_last,
                 *, bag, n_tables, vpad, d, pairs, b_tile=128):
    """Fused DLRM forward. Returns a (B,) float32 vector (z.view([-1]))."""
    B, n_dense = dense_x.shape
    # TODO(synk): no tail handling; batch must be a multiple of b_tile.
    assert B % b_tile == 0

    flat = [dense_x, idx_flat, emb_bd]
    in_specs = [
        pl.BlockSpec((b_tile, n_dense), lambda i: (i, 0)),
        pl.BlockSpec((b_tile, n_tables * bag), lambda i: (i, 0)),
        _const_spec(emb_bd.shape),
    ]
    for w, b in bot_params:
        flat += [w, b]
        in_specs += [_const_spec(w.shape), _const_spec(b.shape)]
    for w, b in top_hidden:
        flat += [w, b]
        in_specs += [_const_spec(w.shape), _const_spec(b.shape)]
    w_last, b_last = top_last
    flat += [w_last, b_last]
    in_specs += [_const_spec(w_last.shape), _const_spec(b_last.shape)]

    # advisory cost hint for the XLA scheduler
    flops = 2 * B * (
        sum(int(w.shape[0]) * int(w.shape[1])
            for w, _ in list(bot_params) + list(top_hidden))
        + int(emb_bd.shape[0]) * int(emb_bd.shape[1])
        + len(pairs) * d
        + int(w_last.shape[1]))
    bytes_accessed = sum(int(a.size) * a.dtype.itemsize for a in flat) + B * 4

    kern = functools.partial(
        _dlrm_fused_kernel, n_bot=len(bot_params),
        n_top_hidden=len(top_hidden), bag=bag, n_tables=n_tables,
        vpad=vpad, d=d, pairs=tuple(pairs))

    out = pl.pallas_call(
        kern,
        grid=(B // b_tile,),
        in_specs=in_specs,
        out_specs=pl.BlockSpec((1, b_tile), lambda i: (0, i)),   # lane dense
        out_shape=jax.ShapeDtypeStruct((1, B), jnp.float32),
        compiler_params=pltpu.CompilerParams(
            dimension_semantics=("parallel",),
            vmem_limit_bytes=32 * 1024 * 1024),
        cost_estimate=pl.CostEstimate(flops=flops, transcendentals=0,
                                      bytes_accessed=bytes_accessed),
    )(*flat)
    return out.reshape(-1)


# ----------------------------- parameter setup ------------------------------
def init_mlp_params(key, ln):
    """kaiming_uniform_ weights (stored pre-transposed as (in, out)), default bias."""
    params = []
    for i in range(len(ln) - 1):
        n, m = int(ln[i]), int(ln[i + 1])
        key, kw, kb = jax.random.split(key, 3)
        bound_w = (6.0 / n) ** 0.5
        w_t = jax.random.uniform(kw, (n, m), jnp.float32, -bound_w, bound_w)
        bound_b = 1.0 / (n ** 0.5)
        b = jax.random.uniform(kb, (1, m), jnp.float32, -bound_b, bound_b)
        params.append((w_t, b))
    return params, key


def init_emb_tables(key, m_spa, ln_emb):
    tables = []
    for n in ln_emb:
        key, k = jax.random.split(key)
        r = (2.0 / (n + m_spa)) ** 0.5
        tables.append(jax.random.uniform(k, (n + 1, m_spa), jnp.float32, -r, r))
    return tables, key


def pack_emb_block_diag(tables, vpad, d):
    """Block-diagonal packing so all EmbeddingBag poolings are one matmul."""
    n_tables = len(tables)
    bd = jnp.zeros((n_tables * vpad, n_tables * d), jnp.float32)
    for k, t in enumerate(tables):
        bd = bd.at[k * vpad:k * vpad + t.shape[0], k * d:(k + 1) * d].set(t)
    return bd


# --------------------------------- driver -----------------------------------
if __name__ == "__main__":
    B = 512
    B_TILE = 128                       # large batch tile -> full-height MXU M
    M_SPA = 16                         # embedding dim d (== ln_bot[-1])
    LN_EMB = [50, 60, 70]              # 3 sparse feature tables
    LN_BOT = [13, 32, M_SPA]
    BAG = 4                            # fixed multi-hot bag size per sample
    N_TABLES = len(LN_EMB)
    NF = N_TABLES + 1
    # arch_interaction_itself=False -> strict lower triangle, reference order
    PAIRS = [(i, j) for i in range(NF) for j in range(i)]
    LN_TOP = [M_SPA + len(PAIRS), 64, 32, 1]

    key = jax.random.PRNGKey(0)
    bot_f32, key = init_mlp_params(key, LN_BOT)
    top_f32, key = init_mlp_params(key, LN_TOP)
    emb_f32, key = init_emb_tables(key, M_SPA, LN_EMB)

    # inputs
    key, kx = jax.random.split(key)
    dense_x = jax.random.normal(kx, (B, LN_BOT[0]), jnp.float32)
    idx_cols = []
    for n in LN_EMB:
        key, ki = jax.random.split(key)
        idx_cols.append(jax.random.randint(ki, (B, BAG), 0, n + 1,
                                           dtype=jnp.int32))
    idx = jnp.stack(idx_cols, axis=1)                  # (B, n_tables, bag) == torch lS_i per table
    idx_flat = idx.reshape(B, N_TABLES * BAG)          # lane-dense index slab for the kernel
    # lS_o equivalent: arange(B) * BAG per table (fixed-size bags).
    # TODO(synk): variable-length EmbeddingBag bags (ragged lS_o offsets) are not
    # supported; a fixed bag size per sample is assumed.
    # TODO(synk): the in-VMEM one-hot @ table gather assumes small vocabularies;
    # large DLRM tables would need memory_space=pl.ANY + scalar-prefetch DMA row
    # gather instead (and an explicit VMEM re-budget on v7x).

    # kernel-side parameter packing: bf16 MXU operands, f32 bias / VPU post-ops
    VPAD = max(128, -(-max(n + 1 for n in LN_EMB) // 128) * 128)
    emb_bd = pack_emb_block_diag(emb_f32, VPAD, M_SPA).astype(jnp.bfloat16)
    bot_k = [(w.astype(jnp.bfloat16), b) for w, b in bot_f32]
    top_hidden = [(w.astype(jnp.bfloat16), b) for w, b in top_f32[:-1]]
    top_last = (top_f32[-1][0].reshape(1, -1), top_f32[-1][1])   # (1, h_last) f32 row

    out = dlrm_forward(dense_x, idx_flat, emb_bd, bot_k, top_hidden, top_last,
                       bag=BAG, n_tables=N_TABLES, vpad=VPAD, d=M_SPA,
                       pairs=PAIRS, b_tile=B_TILE)
    out = jax.block_until_ready(out)
    assert out.shape == (B,) and out.dtype == jnp.float32

    # pure-JAX reference (same bf16-rounded weights/tables & activation casts).
    # Note: with the module defaults (sigmoid_top=-1) create_mlp appends ReLU
    # after every Linear, including the last one.
    def reference():
        bf16, f32 = jnp.bfloat16, jnp.float32
        rnd = lambda w: w.astype(bf16)
        x = dense_x
        for w, b in bot_f32:
            x = jnp.maximum(
                jnp.dot(x.astype(bf16), rnd(w), preferred_element_type=f32) + b, 0.0)
        pooled = [jnp.mean(rnd(emb_f32[k]).astype(f32)[idx[:, k, :]], axis=1)
                  for k in range(N_TABLES)]
        T = jnp.stack([x] + pooled, axis=1)                    # (B, nf, d)
        Z = jnp.sum(T[:, :, None, :] * T[:, None, :, :], axis=-1)
        li = jnp.array([p[0] for p in PAIRS])
        lj = jnp.array([p[1] for p in PAIRS])
        h = jnp.concatenate([x, Z[:, li, lj]], axis=1)
        n_top = len(top_f32)
        for layer_idx, (w, b) in enumerate(top_f32):
            if layer_idx < n_top - 1:
                h = jnp.maximum(
                    jnp.dot(h.astype(bf16), rnd(w), preferred_element_type=f32) + b, 0.0)
            else:
                h = jnp.maximum(h @ w + b, 0.0)                # final layer in f32
        return h.reshape(-1)

    ref = jax.block_until_ready(reference())
    np.testing.assert_allclose(np.asarray(out), np.asarray(ref),
                               rtol=2e-2, atol=3e-2)
    print("KERNEL_OK")
</pallas_src>

<mosaic_0001>
module attributes {stable_mosaic.version = 11 : i64} {
  func.func @_dlrm_fused_kernel(%arg0: i32, %arg1: memref<128x13xf32, #tpu.memory_space<vmem>>, %arg2: memref<128x12xi32, #tpu.memory_space<vmem>>, %arg3: memref<384x48xbf16, #tpu.memory_space<vmem>>, %arg4: memref<13x32xbf16, #tpu.memory_space<vmem>>, %arg5: memref<1x32xf32, #tpu.memory_space<vmem>>, %arg6: memref<32x16xbf16, #tpu.memory_space<vmem>>, %arg7: memref<1x16xf32, #tpu.memory_space<vmem>>, %arg8: memref<22x64xbf16, #tpu.memory_space<vmem>>, %arg9: memref<1x64xf32, #tpu.memory_space<vmem>>, %arg10: memref<64x32xbf16, #tpu.memory_space<vmem>>, %arg11: memref<1x32xf32, #tpu.memory_space<vmem>>, %arg12: memref<1x32xf32, #tpu.memory_space<vmem>>, %arg13: memref<1x1xf32, #tpu.memory_space<vmem>>, %arg14: memref<1x128xf32, #tpu.memory_space<vmem>>) attributes {dimension_semantics = [#tpu.dimension_semantics<parallel>], iteration_bounds = array<i64: 4>, scalar_prefetch = 0 : i64, scratch_operands = 0 : i64, tpu.core_type = #tpu.core_type<tc>, window_params = [{transform_indices = @transform_0, window_bounds = array<i64: 128, 13>}, {transform_indices = @transform_1, window_bounds = array<i64: 128, 12>}, {pipeline_mode = #tpu.pipeline_mode<synchronous>, transform_indices = @transform_2, window_bounds = array<i64: 384, 48>}, {pipeline_mode = #tpu.pipeline_mode<synchronous>, transform_indices = @transform_3, window_bounds = array<i64: 13, 32>}, {pipeline_mode = #tpu.pipeline_mode<synchronous>, transform_indices = @transform_4, window_bounds = array<i64: 1, 32>}, {pipeline_mode = #tpu.pipeline_mode<synchronous>, transform_indices = @transform_5, window_bounds = array<i64: 32, 16>}, {pipeline_mode = #tpu.pipeline_mode<synchronous>, transform_indices = @transform_6, window_bounds = array<i64: 1, 16>}, {pipeline_mode = #tpu.pipeline_mode<synchronous>, transform_indices = @transform_7, window_bounds = array<i64: 22, 64>}, {pipeline_mode = #tpu.pipeline_mode<synchronous>, transform_indices = @transform_8, window_bounds = array<i64: 1, 64>}, {pipeline_mode = #tpu.pipeline_mode<synchronous>, transform_indices = @transform_9, window_bounds = array<i64: 64, 32>}, {pipeline_mode = #tpu.pipeline_mode<synchronous>, transform_indices = @transform_10, window_bounds = array<i64: 1, 32>}, {pipeline_mode = #tpu.pipeline_mode<synchronous>, transform_indices = @transform_11, window_bounds = array<i64: 1, 32>}, {pipeline_mode = #tpu.pipeline_mode<synchronous>, transform_indices = @transform_12, window_bounds = array<i64: 1, 1>}, {transform_indices = @transform_13, window_bounds = array<i64: 1, 128>}]} {
    %c0 = arith.constant 0 : index
    %c0_0 = arith.constant 0 : index
    %0 = vector.load %arg1[%c0, %c0_0] : memref<128x13xf32, #tpu.memory_space<vmem>>, vector<128x13xf32>
    %1 = arith.truncf %0 : vector<128x13xf32> to vector<128x13xbf16>
    %c0_1 = arith.constant 0 : index
    %c0_2 = arith.constant 0 : index
    %2 = vector.load %arg4[%c0_1, %c0_2] : memref<13x32xbf16, #tpu.memory_space<vmem>>, vector<13x32xbf16>
    %cst = arith.constant dense<0.000000e+00> : vector<128x32xf32>
    %3 = tpu.matmul %1, %2, %cst {dimension_numbers = #tpu.dot_dimension_numbers<[1], [0], [0], [1], [0, 0, 1, 1], [], []>} : vector<128x13xbf16>, vector<13x32xbf16>, vector<128x32xf32> -> vector<128x32xf32>
    %c0_3 = arith.constant 0 : index
    %c0_4 = arith.constant 0 : index
    %4 = vector.load %arg5[%c0_3, %c0_4] : memref<1x32xf32, #tpu.memory_space<vmem>>, vector<1x32xf32>
    %5 = vector.broadcast %4 : vector<1x32xf32> to vector<128x32xf32>
    %6 = arith.addf %3, %5 : vector<128x32xf32>
    %cst_5 = arith.constant 0.000000e+00 : f32
    %7 = vector.broadcast %cst_5 : f32 to vector<128x32xf32>
    %8 = arith.maximumf %6, %7 : vector<128x32xf32>
    %9 = arith.truncf %8 : vector<128x32xf32> to vector<128x32xbf16>
    %c0_6 = arith.constant 0 : index
    %c0_7 = arith.constant 0 : index
    %10 = vector.load %arg6[%c0_6, %c0_7] : memref<32x16xbf16, #tpu.memory_space<vmem>>, vector<32x16xbf16>
    %cst_8 = arith.constant dense<0.000000e+00> : vector<128x16xf32>
    %11 = tpu.matmul %9, %10, %cst_8 {dimension_numbers = #tpu.dot_dimension_numbers<[1], [0], [0], [1], [0, 0, 1, 1], [], []>} : vector<128x32xbf16>, vector<32x16xbf16>, vector<128x16xf32> -> vector<128x16xf32>
    %c0_9 = arith.constant 0 : index
    %c0_10 = arith.constant 0 : index
    %12 = vector.load %arg7[%c0_9, %c0_10] : memref<1x16xf32, #tpu.memory_space<vmem>>, vector<1x16xf32>
    %13 = vector.broadcast %12 : vector<1x16xf32> to vector<128x16xf32>
    %14 = arith.addf %11, %13 : vector<128x16xf32>
    %cst_11 = arith.constant 0.000000e+00 : f32
    %15 = vector.broadcast %cst_11 : f32 to vector<128x16xf32>
    %16 = arith.maximumf %14, %15 : vector<128x16xf32>
    %c0_12 = arith.constant 0 : index
    %c0_13 = arith.constant 0 : index
    %17 = vector.load %arg2[%c0_12, %c0_13] : memref<128x12xi32, #tpu.memory_space<vmem>>, vector<128x12xi32>
    %18 = tpu.iota {dimensions = array<i32: 1>} : vector<1x128xi32>
    %cst_14 = arith.constant 0.000000e+00 : f32
    %19 = vector.broadcast %cst_14 : f32 to vector<128x128xf32>
    %20 = vector.extract_strided_slice %17 {offsets = [0, 0], sizes = [128, 1], strides = [1, 1]} : vector<128x12xi32> to vector<128x1xi32>
    %21 = vector.broadcast %20 : vector<128x1xi32> to vector<128x128xi32>
    %22 = vector.broadcast %18 : vector<1x128xi32> to vector<128x128xi32>
    %23 = arith.cmpi eq, %21, %22 : vector<128x128xi32>
    %24 = arith.extui %23 : vector<128x128xi1> to vector<128x128xi32>
    %25 = arith.sitofp %24 : vector<128x128xi32> to vector<128x128xf32>
    %26 = arith.addf %19, %25 : vector<128x128xf32>
    %27 = vector.extract_strided_slice %17 {offsets = [0, 1], sizes = [128, 1], strides = [1, 1]} : vector<128x12xi32> to vector<128x1xi32>
    %28 = vector.broadcast %27 : vector<128x1xi32> to vector<128x128xi32>
    %29 = vector.broadcast %18 : vector<1x128xi32> to vector<128x128xi32>
    %30 = arith.cmpi eq, %28, %29 : vector<128x128xi32>
    %31 = arith.extui %30 : vector<128x128xi1> to vector<128x128xi32>
    %32 = arith.sitofp %31 : vector<128x128xi32> to vector<128x128xf32>
    %33 = arith.addf %26, %32 : vector<128x128xf32>
    %34 = vector.extract_strided_slice %17 {offsets = [0, 2], sizes = [128, 1], strides = [1, 1]} : vector<128x12xi32> to vector<128x1xi32>
    %35 = vector.broadcast %34 : vector<128x1xi32> to vector<128x128xi32>
    %36 = vector.broadcast %18 : vector<1x128xi32> to vector<128x128xi32>
    %37 = arith.cmpi eq, %35, %36 : vector<128x128xi32>
    %38 = arith.extui %37 : vector<128x128xi1> to vector<128x128xi32>
    %39 = arith.sitofp %38 : vector<128x128xi32> to vector<128x128xf32>
    %40 = arith.addf %33, %39 : vector<128x128xf32>
    %41 = vector.extract_strided_slice %17 {offsets = [0, 3], sizes = [128, 1], strides = [1, 1]} : vector<128x12xi32> to vector<128x1xi32>
    %42 = vector.broadcast %41 : vector<128x1xi32> to vector<128x128xi32>
    %43 = vector.broadcast %18 : vector<1x128xi32> to vector<128x128xi32>
    %44 = arith.cmpi eq, %42, %43 : vector<128x128xi32>
    %45 = arith.extui %44 : vector<128x128xi1> to vector<128x128xi32>
    %46 = arith.sitofp %45 : vector<128x128xi32> to vector<128x128xf32>
    %47 = arith.addf %40, %46 : vector<128x128xf32>
    %48 = arith.truncf %47 : vector<128x128xf32> to vector<128x128xbf16>
    %cst_15 = arith.constant 0.000000e+00 : f32
    %49 = vector.broadcast %cst_15 : f32 to vector<128x128xf32>
    %50 = vector.extract_strided_slice %17 {offsets = [0, 4], sizes = [128, 1], strides = [1, 1]} : vector<128x12xi32> to vector<128x1xi32>
    %51 = vector.broadcast %50 : vector<128x1xi32> to vector<128x128xi32>
    %52 = vector.broadcast %18 : vector<1x128xi32> to vector<128x128xi32>
    %53 = arith.cmpi eq, %51, %52 : vector<128x128xi32>
    %54 = arith.extui %53 : vector<128x128xi1> to vector<128x128xi32>
    %55 = arith.sitofp %54 : vector<128x128xi32> to vector<128x128xf32>
    %56 = arith.addf %49, %55 : vector<128x128xf32>
    %57 = vector.extract_strided_slice %17 {offsets = [0, 5], sizes = [128, 1], strides = [1, 1]} : vector<128x12xi32> to vector<128x1xi32>
    %58 = vector.broadcast %57 : vector<128x1xi32> to vector<128x128xi32>
    %59 = vector.broadcast %18 : vector<1x128xi32> to vector<128x128xi32>
    %60 = arith.cmpi eq, %58, %59 : vector<128x128xi32>
    %61 = arith.extui %60 : vector<128x128xi1> to vector<128x128xi32>
    %62 = arith.sitofp %61 : vector<128x128xi32> to vector<128x128xf32>
    %63 = arith.addf %56, %62 : vector<128x128xf32>
    %64 = vector.extract_strided_slice %17 {offsets = [0, 6], sizes = [128, 1], strides = [1, 1]} : vector<128x12xi32> to vector<128x1xi32>
    %65 = vector.broadcast %64 : vector<128x1xi32> to vector<128x128xi32>
    %66 = vector.broadcast %18 : vector<1x128xi32> to vector<128x128xi32>
    %67 = arith.cmpi eq, %65, %66 : vector<128x128xi32>
    %68 = arith.extui %67 : vector<128x128xi1> to vector<128x128xi32>
    %69 = arith.sitofp %68 : vector<128x128xi32> to vector<128x128xf32>
    %70 = arith.addf %63, %69 : vector<128x128xf32>
    %71 = vector.extract_strided_slice %17 {offsets = [0, 7], sizes = [128, 1], strides = [1, 1]} : vector<128x12xi32> to vector<128x1xi32>
    %72 = vector.broadcast %71 : vector<128x1xi32> to vector<128x128xi32>
    %73 = vector.broadcast %18 : vector<1x128xi32> to vector<128x128xi32>
    %74 = arith.cmpi eq, %72, %73 : vector<128x128xi32>
    %75 = arith.extui %74 : vector<128x128xi1> to vector<128x128xi32>
    %76 = arith.sitofp %75 : vector<128x128xi32> to vector<128x128xf32>
    %77 = arith.addf %70, %76 : vector<128x128xf32>
    %78 = arith.truncf %77 : vector<128x128xf32> to vector<128x128xbf16>
    %cst_16 = arith.constant 0.000000e+00 : f32
    %79 = vector.broadcast %cst_16 : f32 to vector<128x128xf32>
    %80 = vector.extract_strided_slice %17 {offsets = [0, 8], sizes = [128, 1], strides = [1, 1]} : vector<128x12xi32> to vector<128x1xi32>
    %81 = vector.broadcast %80 : vector<128x1xi32> to vector<128x128xi32>
    %82 = vector.broadcast %18 : vector<1x128xi32> to vector<128x128xi32>
    %83 = arith.cmpi eq, %81, %82 : vector<128x128xi32>
    %84 = arith.extui %83 : vector<128x128xi1> to vector<128x128xi32>
    %85 = arith.sitofp %84 : vector<128x128xi32> to vector<128x128xf32>
    %86 = arith.addf %79, %85 : vector<128x128xf32>
    %87 = vector.extract_strided_slice %17 {offsets = [0, 9], sizes = [128, 1], strides = [1, 1]} : vector<128x12xi32> to vector<128x1xi32>
    %88 = vector.broadcast %87 : vector<128x1xi32> to vector<128x128xi32>
    %89 = vector.broadcast %18 : vector<1x128xi32> to vector<128x128xi32>
    %90 = arith.cmpi eq, %88, %89 : vector<128x128xi32>
    %91 = arith.extui %90 : vector<128x128xi1> to vector<128x128xi32>
    %92 = arith.sitofp %91 : vector<128x128xi32> to vector<128x128xf32>
    %93 = arith.addf %86, %92 : vector<128x128xf32>
    %94 = vector.extract_strided_slice %17 {offsets = [0, 10], sizes = [128, 1], strides = [1, 1]} : vector<128x12xi32> to vector<128x1xi32>
    %95 = vector.broadcast %94 : vector<128x1xi32> to vector<128x128xi32>
    %96 = vector.broadcast %18 : vector<1x128xi32> to vector<128x128xi32>
    %97 = arith.cmpi eq, %95, %96 : vector<128x128xi32>
    %98 = arith.extui %97 : vector<128x128xi1> to vector<128x128xi32>
    %99 = arith.sitofp %98 : vector<128x128xi32> to vector<128x128xf32>
    %100 = arith.addf %93, %99 : vector<128x128xf32>
    %101 = vector.extract_strided_slice %17 {offsets = [0, 11], sizes = [128, 1], strides = [1, 1]} : vector<128x12xi32> to vector<128x1xi32>
    %102 = vector.broadcast %101 : vector<128x1xi32> to vector<128x128xi32>
    %103 = vector.broadcast %18 : vector<1x128xi32> to vector<128x128xi32>
    %104 = arith.cmpi eq, %102, %103 : vector<128x128xi32>
    %105 = arith.extui %104 : vector<128x128xi1> to vector<128x128xi32>
    %106 = arith.sitofp %105 : vector<128x128xi32> to vector<128x128xf32>
    %107 = arith.addf %100, %106 : vector<128x128xf32>
    %108 = arith.truncf %107 : vector<128x128xf32> to vector<128x128xbf16>
    %109 = tpu.concatenate %48, %78, %108 in 1 : vector<128x128xbf16>, vector<128x128xbf16>, vector<128x128xbf16> -> vector<128x384xbf16>
    %c0_17 = arith.constant 0 : index
    %c0_18 = arith.constant 0 : index
    %110 = vector.load %arg3[%c0_17, %c0_18] : memref<384x48xbf16, #tpu.memory_space<vmem>>, vector<384x48xbf16>
    %cst_19 = arith.constant dense<0.000000e+00> : vector<128x48xf32>
    %111 = tpu.matmul %109, %110, %cst_19 {dimension_numbers = #tpu.dot_dimension_numbers<[1], [0], [0], [1], [0, 0, 1, 1], [], []>} : vector<128x384xbf16>, vector<384x48xbf16>, vector<128x48xf32> -> vector<128x48xf32>
    %cst_20 = arith.constant 2.500000e-01 : f32
    %112 = vector.broadcast %cst_20 : f32 to vector<128x48xf32>
    %113 = arith.mulf %111, %112 : vector<128x48xf32>
    %114 = vector.extract_strided_slice %113 {offsets = [0, 0], sizes = [128, 16], strides = [1, 1]} : vector<128x48xf32> to vector<128x16xf32>
    %115 = vector.extract_strided_slice %113 {offsets = [0, 16], sizes = [128, 16], strides = [1, 1]} : vector<128x48xf32> to vector<128x16xf32>
    %116 = vector.extract_strided_slice %113 {offsets = [0, 32], sizes = [128, 16], strides = [1, 1]} : vector<128x48xf32> to vector<128x16xf32>
    %117 = arith.mulf %114, %16 : vector<128x16xf32>
    %cst_21 = arith.constant dense<0.000000e+00> : vector<128xf32>
    %118 = vector.multi_reduction <add>, %117, %cst_21 [1] : vector<128x16xf32> to vector<128xf32>
    %119 = vector.shape_cast %118 : vector<128xf32> to vector<128x1xf32>
    %120 = arith.mulf %115, %16 : vector<128x16xf32>
    %cst_22 = arith.constant dense<0.000000e+00> : vector<128xf32>
    %121 = vector.multi_reduction <add>, %120, %cst_22 [1] : vector<128x16xf32> to vector<128xf32>
    %122 = vector.shape_cast %121 : vector<128xf32> to vector<128x1xf32>
    %123 = arith.mulf %115, %114 : vector<128x16xf32>
    %cst_23 = arith.constant dense<0.000000e+00> : vector<128xf32>
    %124 = vector.multi_reduction <add>, %123, %cst_23 [1] : vector<128x16xf32> to vector<128xf32>
    %125 = vector.shape_cast %124 : vector<128xf32> to vector<128x1xf32>
    %126 = arith.mulf %116, %16 : vector<128x16xf32>
    %cst_24 = arith.constant dense<0.000000e+00> : vector<128xf32>
    %127 = vector.multi_reduction <add>, %126, %cst_24 [1] : vector<128x16xf32> to vector<128xf32>
    %128 = vector.shape_cast %127 : vector<128xf32> to vector<128x1xf32>
    %129 = arith.mulf %116, %114 : vector<128x16xf32>
    %cst_25 = arith.constant dense<0.000000e+00> : vector<128xf32>
    %130 = vector.multi_reduction <add>, %129, %cst_25 [1] : vector<128x16xf32> to vector<128xf32>
    %131 = vector.shape_cast %130 : vector<128xf32> to vector<128x1xf32>
    %132 = arith.mulf %116, %115 : vector<128x16xf32>
    %cst_26 = arith.constant dense<0.000000e+00> : vector<128xf32>
    %133 = vector.multi_reduction <add>, %132, %cst_26 [1] : vector<128x16xf32> to vector<128xf32>
    %134 = vector.shape_cast %133 : vector<128xf32> to vector<128x1xf32>
    %135 = tpu.concatenate %16, %119, %122, %125, %128, %131, %134 in 1 : vector<128x16xf32>, vector<128x1xf32>, vector<128x1xf32>, vector<128x1xf32>, vector<128x1xf32>, vector<128x1xf32>, vector<128x1xf32> -> vector<128x22xf32>
    %136 = arith.truncf %135 : vector<128x22xf32> to vector<128x22xbf16>
    %c0_27 = arith.constant 0 : index
    %c0_28 = arith.constant 0 : index
    %137 = vector.load %arg8[%c0_27, %c0_28] : memref<22x64xbf16, #tpu.memory_space<vmem>>, vector<22x64xbf16>
    %cst_29 = arith.constant dense<0.000000e+00> : vector<128x64xf32>
    %138 = tpu.matmul %136, %137, %cst_29 {dimension_numbers = #tpu.dot_dimension_numbers<[1], [0], [0], [1], [0, 0, 1, 1], [], []>} : vector<128x22xbf16>, vector<22x64xbf16>, vector<128x64xf32> -> vector<128x64xf32>
    %c0_30 = arith.constant 0 : index
    %c0_31 = arith.constant 0 : index
    %139 = vector.load %arg9[%c0_30, %c0_31] : memref<1x64xf32, #tpu.memory_space<vmem>>, vector<1x64xf32>
    %140 = vector.broadcast %139 : vector<1x64xf32> to vector<128x64xf32>
    %141 = arith.addf %138, %140 : vector<128x64xf32>
    %cst_32 = arith.constant 0.000000e+00 : f32
    %142 = vector.broadcast %cst_32 : f32 to vector<128x64xf32>
    %143 = arith.maximumf %141, %142 : vector<128x64xf32>
    %144 = arith.truncf %143 : vector<128x64xf32> to vector<128x64xbf16>
    %c0_33 = arith.constant 0 : index
    %c0_34 = arith.constant 0 : index
    %145 = vector.load %arg10[%c0_33, %c0_34] : memref<64x32xbf16, #tpu.memory_space<vmem>>, vector<64x32xbf16>
    %cst_35 = arith.constant dense<0.000000e+00> : vector<128x32xf32>
    %146 = tpu.matmul %144, %145, %cst_35 {dimension_numbers = #tpu.dot_dimension_numbers<[1], [0], [0], [1], [0, 0, 1, 1], [], []>} : vector<128x64xbf16>, vector<64x32xbf16>, vector<128x32xf32> -> vector<128x32xf32>
    %c0_36 = arith.constant 0 : index
    %c0_37 = arith.constant 0 : index
    %147 = vector.load %arg11[%c0_36, %c0_37] : memref<1x32xf32, #tpu.memory_space<vmem>>, vector<1x32xf32>
    %148 = vector.broadcast %147 : vector<1x32xf32> to vector<128x32xf32>
    %149 = arith.addf %146, %148 : vector<128x32xf32>
    %cst_38 = arith.constant 0.000000e+00 : f32
    %150 = vector.broadcast %cst_38 : f32 to vector<128x32xf32>
    %151 = arith.maximumf %149, %150 : vector<128x32xf32>
    %c0_39 = arith.constant 0 : index
    %c0_40 = arith.constant 0 : index
    %152 = vector.load %arg12[%c0_39, %c0_40] : memref<1x32xf32, #tpu.memory_space<vmem>>, vector<1x32xf32>
    %153 = vector.broadcast %152 : vector<1x32xf32> to vector<128x32xf32>
    %154 = arith.mulf %151, %153 : vector<128x32xf32>
    %cst_41 = arith.constant dense<0.000000e+00> : vector<128xf32>
    %155 = vector.multi_reduction <add>, %154, %cst_41 [1] : vector<128x32xf32> to vector<128xf32>
    %156 = vector.shape_cast %155 : vector<128xf32> to vector<1x128xf32>
    %c0_42 = arith.constant 0 : index
    %c0_43 = arith.constant 0 : index
    %157 = vector.load %arg13[%c0_42, %c0_43] : memref<1x1xf32, #tpu.memory_space<vmem>>, vector<1x1xf32>
    %158 = vector.broadcast %157 : vector<1x1xf32> to vector<1x128xf32>
    %159 = arith.addf %156, %158 : vector<1x128xf32>
    %cst_44 = arith.constant 0.000000e+00 : f32
    %160 = vector.broadcast %cst_44 : f32 to vector<1x128xf32>
    %161 = arith.maximumf %159, %160 : vector<1x128xf32>
    %c0_45 = arith.constant 0 : index
    %c0_46 = arith.constant 0 : index
    %162 = vector.load %arg14[%c0_45, %c0_46] : memref<1x128xf32, #tpu.memory_space<vmem>>, vector<1x128xf32>
    tpu.vector_store %arg14[%c0_45, %c0_46], %161 {strides = array<i32>} : memref<1x128xf32, #tpu.memory_space<vmem>>, vector<1x128xf32>,
    return
  }
  func.func @transform_0(%arg0: i32) -> (i32, i32) {
    %c0_i32 = arith.constant 0 : i32
    %c0_i32_0 = arith.constant 0 : i32
    return %arg0, %c0_i32 : i32, i32
  }
  func.func @transform_1(%arg0: i32) -> (i32, i32) {
    %c0_i32 = arith.constant 0 : i32
    %c0_i32_0 = arith.constant 0 : i32
    return %arg0, %c0_i32 : i32, i32
  }
  func.func @transform_2(%arg0: i32) -> (i32, i32) {
    %c0_i32 = arith.constant 0 : i32
    %c0_i32_0 = arith.constant 0 : i32
    %c0_i32_1 = arith.constant 0 : i32
    return %c0_i32, %c0_i32_0 : i32, i32
  }
  func.func @transform_3(%arg0: i32) -> (i32, i32) {
    %c0_i32 = arith.constant 0 : i32
    %c0_i32_0 = arith.constant 0 : i32
    %c0_i32_1 = arith.constant 0 : i32
    return %c0_i32, %c0_i32_0 : i32, i32
  }
  func.func @transform_4(%arg0: i32) -> (i32, i32) {
    %c0_i32 = arith.constant 0 : i32
    %c0_i32_0 = arith.constant 0 : i32
    %c0_i32_1 = arith.constant 0 : i32
    return %c0_i32, %c0_i32_0 : i32, i32
  }
  func.func @transform_5(%arg0: i32) -> (i32, i32) {
    %c0_i32 = arith.constant 0 : i32
    %c0_i32_0 = arith.constant 0 : i32
    %c0_i32_1 = arith.constant 0 : i32
    return %c0_i32, %c0_i32_0 : i32, i32
  }
  func.func @transform_6(%arg0: i32) -> (i32, i32) {
    %c0_i32 = arith.constant 0 : i32
    %c0_i32_0 = arith.constant 0 : i32
    %c0_i32_1 = arith.constant 0 : i32
    return %c0_i32, %c0_i32_0 : i32, i32
  }
  func.func @transform_7(%arg0: i32) -> (i32, i32) {
    %c0_i32 = arith.constant 0 : i32
    %c0_i32_0 = arith.constant 0 : i32
    %c0_i32_1 = arith.constant 0 : i32
    return %c0_i32, %c0_i32_0 : i32, i32
  }
  func.func @transform_8(%arg0: i32) -> (i32, i32) {
    %c0_i32 = arith.constant 0 : i32
    %c0_i32_0 = arith.constant 0 : i32
    %c0_i32_1 = arith.constant 0 : i32
    return %c0_i32, %c0_i32_0 : i32, i32
  }
  func.func @transform_9(%arg0: i32) -> (i32, i32) {
    %c0_i32 = arith.constant 0 : i32
    %c0_i32_0 = arith.constant 0 : i32
    %c0_i32_1 = arith.constant 0 : i32
    return %c0_i32, %c0_i32_0 : i32, i32
  }
  func.func @transform_10(%arg0: i32) -> (i32, i32) {
    %c0_i32 = arith.constant 0 : i32
    %c0_i32_0 = arith.constant 0 : i32
    %c0_i32_1 = arith.constant 0 : i32
    return %c0_i32, %c0_i32_0 : i32, i32
  }
  func.func @transform_11(%arg0: i32) -> (i32, i32) {
    %c0_i32 = arith.constant 0 : i32
    %c0_i32_0 = arith.constant 0 : i32
    %c0_i32_1 = arith.constant 0 : i32
    return %c0_i32, %c0_i32_0 : i32, i32
  }
  func.func @transform_12(%arg0: i32) -> (i32, i32) {
    %c0_i32 = arith.constant 0 : i32
    %c0_i32_0 = arith.constant 0 : i32
    %c0_i32_1 = arith.constant 0 : i32
    return %c0_i32, %c0_i32_0 : i32, i32
  }
  func.func @transform_13(%arg0: i32) -> (i32, i32) {
    %c0_i32 = arith.constant 0 : i32
    %c0_i32_0 = arith.constant 0 : i32
    return %c0_i32, %arg0 : i32, i32
  }
}

</mosaic_0001>

<llo_original>
// kernel: tpu_custom_call.1
$region0: #{tpu_custom_call.1}
  #allocation0 [shape = 'u32[]', space=smem, size = 0x4, offset = 0x4, fixed_abs, tag = 'smem constant byte address 0x4 - core index']
  #allocation1 [shape = 'u32[144,128]{1,0:T(1,128)}', space=vmem, size = 0x12000, scoped, tag = 'internal scratch']
  #allocation2 [shape = 'f32[1,1]{1,0:T(1,128)S(1)}', space=vmem, size = 0x200, scoped, tag = 'scoped memory for tpu_custom_call.1']
  %s0 = inlined_call_operand.vmem [shape: f32[512,13], index: 0, kind: input, shape index: {}]
  %s1 = inlined_call_operand.vmem [shape: s32[512,12], index: 1, kind: input, shape index: {}]
  %s2 = inlined_call_operand.vmem [shape: bf16[384,48], index: 2, kind: input, shape index: {}]
  %s3 = inlined_call_operand.vmem [shape: bf16[13,32], index: 3, kind: input, shape index: {}]
  %s4 = inlined_call_operand.vmem [shape: f32[1,32], index: 4, kind: input, shape index: {}]
  %s5 = inlined_call_operand.vmem [shape: bf16[32,16], index: 5, kind: input, shape index: {}]
  %s6 = inlined_call_operand.vmem [shape: f32[1,16], index: 6, kind: input, shape index: {}]
  %s7 = inlined_call_operand.vmem [shape: bf16[22,64], index: 7, kind: input, shape index: {}]
  %s8 = inlined_call_operand.vmem [shape: f32[1,64], index: 8, kind: input, shape index: {}]
  %s9 = inlined_call_operand.vmem [shape: bf16[64,32], index: 9, kind: input, shape index: {}]
  %s10 = inlined_call_operand.vmem [shape: f32[1,32], index: 10, kind: input, shape index: {}]
  %s11 = inlined_call_operand.vmem [shape: f32[1,32], index: 11, kind: input, shape index: {}]
  %s12 = inlined_call_operand.<no memory space> [shape: f32[1,1], index: 12, kind: input, shape index: {}]
  %s13 = inlined_call_operand.hbm [shape: f32[1,512], index: 13, kind: output, shape index: {}]
  %s14 = sld [smem:[#allocation0]]
  $region85: #{tpu_custom_call.1} parent=0
    _
  %s16 = ssub.s32 1, %s14
  %s17 = scalar_select 0, %s16, %s14
  %v18 = vstv %s12
  %19 = vst [vmem:[#allocation2] sm:$0x1] %v18
  $region1: #{tpu_custom_call.1} parent=0
    #allocation3 [shape = 'u8[1024]{0}', space=vmem, size = 0x400, scoped, tag = 'output window, operand 0']
    #allocation4 [shape = 's32[2]{0}', space=sflag, size = 0x8, scoped, tag = 'scoped memory for tpu_custom_call.1']
    %20 = vsyncpa [#allocation4], 0
    %s21 = scalar_lea.sflag [#allocation4], 1
    %22 = vsyncpa %s21, 0
    loop: start=0, step=1, limit=6
    $region2: #{tpu_custom_call.1} parent=1 // loop_pre_header
      _
    $region3: #{tpu_custom_call.1} parent=1 // loop_header
      %s24 = sphi 0, %s28
      %p25 = scmp.ge.s32.totalorder %s24, 6
      %s34 = sphi 0, %s36
      %s37 = sphi 0, %s34
      %s38 = sphi 0, %s37
      %s54 = sphi 0, %s38
      %s60 = sphi 0, %s62
      %s63 = sphi 0, %s60
      %s64 = sphi 0, %s63
      %s80 = sphi 0, %s64
      %s84 = sphi 0, %s84
      %s86 = sphi 0, %s84
      %s87 = sphi 0, %s86
      %s101 = sphi 0, %s87
      %s105 = sphi 0, %s105
      %s107 = sphi 0, %s105
      %s108 = sphi 0, %s107
      %s122 = sphi 0, %s108
      %s126 = sphi 0, %s126
      %s128 = sphi 0, %s126
      %s129 = sphi 0, %s128
      %s143 = sphi 0, %s129
      %s147 = sphi 0, %s147
      %s149 = sphi 0, %s147
      %s150 = sphi 0, %s149
      %s164 = sphi 0, %s150
      %s168 = sphi 0, %s168
      %s170 = sphi 0, %s168
      %s171 = sphi 0, %s170
      %s185 = sphi 0, %s171
      %s189 = sphi 0, %s189
      %s191 = sphi 0, %s189
      %s192 = sphi 0, %s191
      %s206 = sphi 0, %s192
      %s210 = sphi 0, %s210
      %s212 = sphi 0, %s210
      %s213 = sphi 0, %s212
      %s227 = sphi 0, %s213
      %s231 = sphi 0, %s231
      %s233 = sphi 0, %s231
      %s234 = sphi 0, %s233
      %s248 = sphi 0, %s234
      %s252 = sphi 0, %s252
      %s254 = sphi 0, %s252
      %s255 = sphi 0, %s254
      %s269 = sphi 0, %s255
      %s273 = sphi 0, %s273
      %s275 = sphi 0, %s273
      %s276 = sphi 0, %s275
      %s290 = sphi 0, %s276
      %s294 = sphi 0, %s294
      %s296 = sphi 0, %s294
      %s297 = sphi 0, %s296
      %s311 = sphi 0, %s297
      %s317 = sphi 0, %s319
      %s320 = sphi 0, %s317
      %s321 = sphi 0, %s320
      %s337 = sphi 0, %s321
    $region4: #{tpu_custom_call.1} parent=1 // loop_header_branch
      %27 = sbr.rel (%p25) target = $region8
    $region5: #{tpu_custom_call.1} parent=1 // loop_body
      %s29 = ssub.s32 %s24, 1
      %s30 = ssub.s32 %s24, 2
      %s31 = sadd.s32 %s24, 1
      %s32 = ssub.s32 %s24, %s31
      %p33 = scmp.eq.s32.totalorder %s32, 0
      %s35 = sadd.s32 %s34, 1
      %s36 = scalar_select %p33, %s34, %s35
      %p39 = pneg %p33
      %p40 = scmp.eq.s32.totalorder %s24, 3
      %p41 = por %p39, %p40
      %p42 = scmp.ne.s32.totalorder %s34, %s37
      %p43 = scmp.eq.s32.totalorder %s24, 0
      %p44 = por %p42, %p43
      %p45 = scmp.ne.s32.totalorder %s34, %s37
      %p46 = scmp.eq.s32.totalorder %s29, 3
      %p47 = por %p45, %p46
      %p48 = scmp.ne.s32.totalorder %s37, %s38
      %p49 = scmp.eq.s32.totalorder %s29, 0
      %p50 = por %p48, %p49
      %p51 = scmp.ne.s32.totalorder %s37, %s38
      %p52 = scmp.eq.s32.totalorder %s30, 3
      %p53 = por %p51, %p52
      %p55 = scmp.ne.s32.totalorder %s38, %s54
      %p56 = scmp.eq.s32.totalorder %s30, 0
      %p57 = por %p55, %p56
      %s58 = ssub.s32 %s24, %s31
      %p59 = scmp.eq.s32.totalorder %s58, 0
      %s61 = sadd.s32 %s60, 1
      %s62 = scalar_select %p59, %s60, %s61
      %p65 = pneg %p59
      %p66 = scmp.eq.s32.totalorder %s24, 3
      %p67 = por %p65, %p66
      %p68 = scmp.ne.s32.totalorder %s60, %s63
      %p69 = scmp.eq.s32.totalorder %s24, 0
      %p70 = por %p68, %p69
      %p71 = scmp.ne.s32.totalorder %s60, %s63
      %p72 = scmp.eq.s32.totalorder %s29, 3
      %p73 = por %p71, %p72
      %p74 = scmp.ne.s32.totalorder %s63, %s64
      %p75 = scmp.eq.s32.totalorder %s29, 0
      %p76 = por %p74, %p75
      %p77 = scmp.ne.s32.totalorder %s63, %s64
      %p78 = scmp.eq.s32.totalorder %s30, 3
      %p79 = por %p77, %p78
      %p81 = scmp.ne.s32.totalorder %s64, %s80
      %p82 = scmp.eq.s32.totalorder %s30, 0
      %p83 = por %p81, %p82
      %s85 = sadd.s32 %s84, 1
      %p88 = scmp.eq.s32.totalorder %s24, 3
      %p89 = scmp.ne.s32.totalorder %s84, %s86
      %p90 = scmp.eq.s32.totalorder %s24, 0
      %p91 = por %p89, %p90
      %p92 = scmp.ne.s32.totalorder %s84, %s86
      %p93 = scmp.eq.s32.totalorder %s29, 3
      %p94 = por %p92, %p93
      %p95 = scmp.ne.s32.totalorder %s86, %s87
      %p96 = scmp.eq.s32.totalorder %s29, 0
      %p97 = por %p95, %p96
      %p98 = scmp.ne.s32.totalorder %s86, %s87
      %p99 = scmp.eq.s32.totalorder %s30, 3
      %p100 = por %p98, %p99
      %p102 = scmp.ne.s32.totalorder %s87, %s101
      %p103 = scmp.eq.s32.totalorder %s30, 0
      %p104 = por %p102, %p103
      %s106 = sadd.s32 %s105, 1
      %p109 = scmp.eq.s32.totalorder %s24, 3
      %p110 = scmp.ne.s32.totalorder %s105, %s107
      %p111 = scmp.eq.s32.totalorder %s24, 0
      %p112 = por %p110, %p111
      %p113 = scmp.ne.s32.totalorder %s105, %s107
      %p114 = scmp.eq.s32.totalorder %s29, 3
      %p115 = por %p113, %p114
      %p116 = scmp.ne.s32.totalorder %s107, %s108
      %p117 = scmp.eq.s32.totalorder %s29, 0
      %p118 = por %p116, %p117
      %p119 = scmp.ne.s32.totalorder %s107, %s108
      %p120 = scmp.eq.s32.totalorder %s30, 3
      %p121 = por %p119, %p120
      %p123 = scmp.ne.s32.totalorder %s108, %s122
      %p124 = scmp.eq.s32.totalorder %s30, 0
      %p125 = por %p123, %p124
      %s127 = sadd.s32 %s126, 1
      %p130 = scmp.eq.s32.totalorder %s24, 3
      %p131 = scmp.ne.s32.totalorder %s126, %s128
      %p132 = scmp.eq.s32.totalorder %s24, 0
      %p133 = por %p131, %p132
      %p134 = scmp.ne.s32.totalorder %s126, %s128
      %p135 = scmp.eq.s32.totalorder %s29, 3
      %p136 = por %p134, %p135
      %p137 = scmp.ne.s32.totalorder %s128, %s129
      %p138 = scmp.eq.s32.totalorder %s29, 0
      %p139 = por %p137, %p138
      %p140 = scmp.ne.s32.totalorder %s128, %s129
      %p141 = scmp.eq.s32.totalorder %s30, 3
      %p142 = por %p140, %p141
      %p144 = scmp.ne.s32.totalorder %s129, %s143
      %p145 = scmp.eq.s32.totalorder %s30, 0
      %p146 = por %p144, %p145
      %s148 = sadd.s32 %s147, 1
      %p151 = scmp.eq.s32.totalorder %s24, 3
      %p152 = scmp.ne.s32.totalorder %s147, %s149
      %p153 = scmp.eq.s32.totalorder %s24, 0
      %p154 = por %p152, %p153
      %p155 = scmp.ne.s32.totalorder %s147, %s149
      %p156 = scmp.eq.s32.totalorder %s29, 3
      %p157 = por %p155, %p156
      %p158 = scmp.ne.s32.totalorder %s149, %s150
      %p159 = scmp.eq.s32.totalorder %s29, 0
      %p160 = por %p158, %p159
      %p161 = scmp.ne.s32.totalorder %s149, %s150
      %p162 = scmp.eq.s32.totalorder %s30, 3
      %p163 = por %p161, %p162
      %p165 = scmp.ne.s32.totalorder %s150, %s164
      %p166 = scmp.eq.s32.totalorder %s30, 0
      %p167 = por %p165, %p166
      %s169 = sadd.s32 %s168, 1
      %p172 = scmp.eq.s32.totalorder %s24, 3
      %p173 = scmp.ne.s32.totalorder %s168, %s170
      %p174 = scmp.eq.s32.totalorder %s24, 0
      %p175 = por %p173, %p174
      %p176 = scmp.ne.s32.totalorder %s168, %s170
      %p177 = scmp.eq.s32.totalorder %s29, 3
      %p178 = por %p176, %p177
      %p179 = scmp.ne.s32.totalorder %s170, %s171
      %p180 = scmp.eq.s32.totalorder %s29, 0
      %p181 = por %p179, %p180
      %p182 = scmp.ne.s32.totalorder %s170, %s171
      %p183 = scmp.eq.s32.totalorder %s30, 3
      %p184 = por %p182, %p183
      %p186 = scmp.ne.s32.totalorder %s171, %s185
      %p187 = scmp.eq.s32.totalorder %s30, 0
      %p188 = por %p186, %p187
      %s190 = sadd.s32 %s189, 1
      %p193 = scmp.eq.s32.totalorder %s24, 3
      %p194 = scmp.ne.s32.totalorder %s189, %s191
      %p195 = scmp.eq.s32.totalorder %s24, 0
      %p196 = por %p194, %p195
      %p197 = scmp.ne.s32.totalorder %s189, %s191
      %p198 = scmp.eq.s32.totalorder %s29, 3
      %p199 = por %p197, %p198
      %p200 = scmp.ne.s32.totalorder %s191, %s192
      %p201 = scmp.eq.s32.totalorder %s29, 0
      %p202 = por %p200, %p201
      %p203 = scmp.ne.s32.totalorder %s191, %s192
      %p204 = scmp.eq.s32.totalorder %s30, 3
      %p205 = por %p203, %p204
      %p207 = scmp.ne.s32.totalorder %s192, %s206
      %p208 = scmp.eq.s32.totalorder %s30, 0
      %p209 = por %p207, %p208
      %s211 = sadd.s32 %s210, 1
      %p214 = scmp.eq.s32.totalorder %s24, 3
      %p215 = scmp.ne.s32.totalorder %s210, %s212
      %p216 = scmp.eq.s32.totalorder %s24, 0
      %p217 = por %p215, %p216
      %p218 = scmp.ne.s32.totalorder %s210, %s212
      %p219 = scmp.eq.s32.totalorder %s29, 3
      %p220 = por %p218, %p219
      %p221 = scmp.ne.s32.totalorder %s212, %s213
      %p222 = scmp.eq.s32.totalorder %s29, 0
      %p223 = por %p221, %p222
      %p224 = scmp.ne.s32.totalorder %s212, %s213
      %p225 = scmp.eq.s32.totalorder %s30, 3
      %p226 = por %p224, %p225
      %p228 = scmp.ne.s32.totalorder %s213, %s227
      %p229 = scmp.eq.s32.totalorder %s30, 0
      %p230 = por %p228, %p229
      %s232 = sadd.s32 %s231, 1
      %p235 = scmp.eq.s32.totalorder %s24, 3
      %p236 = scmp.ne.s32.totalorder %s231, %s233
      %p237 = scmp.eq.s32.totalorder %s24, 0
      %p238 = por %p236, %p237
      %p239 = scmp.ne.s32.totalorder %s231, %s233
      %p240 = scmp.eq.s32.totalorder %s29, 3
      %p241 = por %p239, %p240
      %p242 = scmp.ne.s32.totalorder %s233, %s234
      %p243 = scmp.eq.s32.totalorder %s29, 0
      %p244 = por %p242, %p243
      %p245 = scmp.ne.s32.totalorder %s233, %s234
      %p246 = scmp.eq.s32.totalorder %s30, 3
      %p247 = por %p245, %p246
      %p249 = scmp.ne.s32.totalorder %s234, %s248
      %p250 = scmp.eq.s32.totalorder %s30, 0
      %p251 = por %p249, %p250
      %s253 = sadd.s32 %s252, 1
      %p256 = scmp.eq.s32.totalorder %s24, 3
      %p257 = scmp.ne.s32.totalorder %s252, %s254
      %p258 = scmp.eq.s32.totalorder %s24, 0
      %p259 = por %p257, %p258
      %p260 = scmp.ne.s32.totalorder %s252, %s254
      %p261 = scmp.eq.s32.totalorder %s29, 3
      %p262 = por %p260, %p261
      %p263 = scmp.ne.s32.totalorder %s254, %s255
      %p264 = scmp.eq.s32.totalorder %s29, 0
      %p265 = por %p263, %p264
      %p266 = scmp.ne.s32.totalorder %s254, %s255
      %p267 = scmp.eq.s32.totalorder %s30, 3
      %p268 = por %p266, %p267
      %p270 = scmp.ne.s32.totalorder %s255, %s269
      %p271 = scmp.eq.s32.totalorder %s30, 0
      %p272 = por %p270, %p271
      %s274 = sadd.s32 %s273, 1
      %p277 = scmp.eq.s32.totalorder %s24, 3
      %p278 = scmp.ne.s32.totalorder %s273, %s275
      %p279 = scmp.eq.s32.totalorder %s24, 0
      %p280 = por %p278, %p279
      %p281 = scmp.ne.s32.totalorder %s273, %s275
      %p282 = scmp.eq.s32.totalorder %s29, 3
      %p283 = por %p281, %p282
      %p284 = scmp.ne.s32.totalorder %s275, %s276
      %p285 = scmp.eq.s32.totalorder %s29, 0
      %p286 = por %p284, %p285
      %p287 = scmp.ne.s32.totalorder %s275, %s276
      %p288 = scmp.eq.s32.totalorder %s30, 3
      %p289 = por %p287, %p288
      %p291 = scmp.ne.s32.totalorder %s276, %s290
      %p292 = scmp.eq.s32.totalorder %s30, 0
      %p293 = por %p291, %p292
      %s295 = sadd.s32 %s294, 1
      %p298 = scmp.eq.s32.totalorder %s24, 3
      %p299 = scmp.ne.s32.totalorder %s294, %s296
      %p300 = scmp.eq.s32.totalorder %s24, 0
      %p301 = por %p299, %p300
      %p302 = scmp.ne.s32.totalorder %s294, %s296
      %p303 = scmp.eq.s32.totalorder %s29, 3
      %p304 = por %p302, %p303
      %p305 = scmp.ne.s32.totalorder %s296, %s297
      %p306 = scmp.eq.s32.totalorder %s29, 0
      %p307 = por %p305, %p306
      %p308 = scmp.ne.s32.totalorder %s296, %s297
      %p309 = scmp.eq.s32.totalorder %s30, 3
      %p310 = por %p308, %p309
      %p312 = scmp.ne.s32.totalorder %s297, %s311
      %p313 = scmp.eq.s32.totalorder %s30, 0
      %p314 = por %p312, %p313
      %s315 = ssub.s32 %s24, %s31
      %p316 = scmp.eq.s32.totalorder %s315, 0
      %s318 = sadd.s32 %s317, 1
      %s319 = scalar_select %p316, %s317, %s318
      %p322 = pneg %p316
      %p323 = scmp.eq.s32.totalorder %s24, 3
      %p324 = por %p322, %p323
      %p325 = scmp.ne.s32.totalorder %s317, %s320
      %p326 = scmp.eq.s32.totalorder %s24, 0
      %p327 = por %p325, %p326
      %p328 = scmp.ne.s32.totalorder %s317, %s320
      %p329 = scmp.eq.s32.totalorder %s29, 3
      %p330 = por %p328, %p329
      %p331 = scmp.ne.s32.totalorder %s320, %s321
      %p332 = scmp.eq.s32.totalorder %s29, 0
      %p333 = por %p331, %p332
      %p334 = scmp.ne.s32.totalorder %s320, %s321
      %p335 = scmp.eq.s32.totalorder %s30, 3
      %p336 = por %p334, %p335
      %p338 = scmp.ne.s32.totalorder %s321, %s337
      %p339 = scmp.eq.s32.totalorder %s30, 0
      %p340 = por %p338, %p339
      %p341 = scmp.le.s32.totalorder 1, %s24
      %p342 = scmp.lt.s32.totalorder %s24, 5
      %p343 = pnand %p341, %p342
      %p344 = pneg %p343
      // Predicated region
      $region9: #{tpu_custom_call.1} parent=5 // pred_check
        _
      $region10: #{tpu_custom_call.1} parent=5 // pred_check_branch
        %346 = sbr.rel (%p343) target = $region12
      $region11: #{tpu_custom_call.1} parent=5 // pred_region
        %s347 = ssub.s32 %s24, 1
        // Predicated region
        $region13: #{tpu_custom_call.1} parent=11 // pred_check
          %p348 = pneg %p97
        $region14: #{tpu_custom_call.1} parent=11 // pred_check_branch
          %350 = sbr.rel (%p348) target = $region16
        $region15: #{tpu_custom_call.1} parent=11 // pred_region
          _
        $region16: #{tpu_custom_call.1} parent=11 // pred_fallthru
          _
        // Predicated region
        $region17: #{tpu_custom_call.1} parent=11 // pred_check
          %p351 = pneg %p118
        $region18: #{tpu_custom_call.1} parent=11 // pred_check_branch
          %353 = sbr.rel (%p351) target = $region20
        $region19: #{tpu_custom_call.1} parent=11 // pred_region
          _
        $region20: #{tpu_custom_call.1} parent=11 // pred_fallthru
          _
        // Predicated region
        $region21: #{tpu_custom_call.1} parent=11 // pred_check
          %p354 = pneg %p139
        $region22: #{tpu_custom_call.1} parent=11 // pred_check_branch
          %356 = sbr.rel (%p354) target = $region24
        $region23: #{tpu_custom_call.1} parent=11 // pred_region
          _
        $region24: #{tpu_custom_call.1} parent=11 // pred_fallthru
          _
        // Predicated region
        $region25: #{tpu_custom_call.1} parent=11 // pred_check
          %p357 = pneg %p160
        $region26: #{tpu_custom_call.1} parent=11 // pred_check_branch
          %359 = sbr.rel (%p357) target = $region28
        $region27: #{tpu_custom_call.1} parent=11 // pred_region
          _
        $region28: #{tpu_custom_call.1} parent=11 // pred_fallthru
          _
        // Predicated region
        $region29: #{tpu_custom_call.1} parent=11 // pred_check
          %p360 = pneg %p181
        $region30: #{tpu_custom_call.1} parent=11 // pred_check_branch
          %362 = sbr.rel (%p360) target = $region32
        $region31: #{tpu_custom_call.1} parent=11 // pred_region
          _
        $region32: #{tpu_custom_call.1} parent=11 // pred_fallthru
          _
        // Predicated region
        $region33: #{tpu_custom_call.1} parent=11 // pred_check
          %p363 = pneg %p202
        $region34: #{tpu_custom_call.1} parent=11 // pred_check_branch
          %365 = sbr.rel (%p363) target = $region36
        $region35: #{tpu_custom_call.1} parent=11 // pred_region
          _
        $region36: #{tpu_custom_call.1} parent=11 // pred_fallthru
          _
        // Predicated region
        $region37: #{tpu_custom_call.1} parent=11 // pred_check
          %p366 = pneg %p223
        $region38: #{tpu_custom_call.1} parent=11 // pred_check_branch
          %368 = sbr.rel (%p366) target = $region40
        $region39: #{tpu_custom_call.1} parent=11 // pred_region
          _
        $region40: #{tpu_custom_call.1} parent=11 // pred_fallthru
          _
        // Predicated region
        $region41: #{tpu_custom_call.1} parent=11 // pred_check
          %p369 = pneg %p244
        $region42: #{tpu_custom_call.1} parent=11 // pred_check_branch
          %371 = sbr.rel (%p369) target = $region44
        $region43: #{tpu_custom_call.1} parent=11 // pred_region
          _
        $region44: #{tpu_custom_call.1} parent=11 // pred_fallthru
          _
        // Predicated region
        $region45: #{tpu_custom_call.1} parent=11 // pred_check
          %p372 = pneg %p265
        $region46: #{tpu_custom_call.1} parent=11 // pred_check_branch
          %374 = sbr.rel (%p372) target = $region48
        $region47: #{tpu_custom_call.1} parent=11 // pred_region
          _
        $region48: #{tpu_custom_call.1} parent=11 // pred_fallthru
          _
        // Predicated region
        $region49: #{tpu_custom_call.1} parent=11 // pred_check
          %p375 = pneg %p286
        $region50: #{tpu_custom_call.1} parent=11 // pred_check_branch
          %377 = sbr.rel (%p375) target = $region52
        $region51: #{tpu_custom_call.1} parent=11 // pred_region
          _
        $region52: #{tpu_custom_call.1} parent=11 // pred_fallthru
          _
        // Predicated region
        $region53: #{tpu_custom_call.1} parent=11 // pred_check
          %p378 = pneg %p307
        $region54: #{tpu_custom_call.1} parent=11 // pred_check_branch
          %380 = sbr.rel (%p378) target = $region56
        $region55: #{tpu_custom_call.1} parent=11 // pred_region
          _
        $region56: #{tpu_custom_call.1} parent=11 // pred_fallthru
          _
      $region12: #{tpu_custom_call.1} parent=5 // pred_fallthru
        _
      %p381 = scmp.lt.s32.totalorder %s24, 4
      // Predicated region
      $region57: #{tpu_custom_call.1} parent=5 // pred_check
        %p382 = pneg %p381
      $region58: #{tpu_custom_call.1} parent=5 // pred_check_branch
        %384 = sbr.rel (%p382) target = $region60
      $region59: #{tpu_custom_call.1} parent=5 // pred_region
        // Predicated region
        $region61: #{tpu_custom_call.1} parent=59 // pred_check
          %p385 = pneg %p44
        $region62: #{tpu_custom_call.1} parent=59 // pred_check_branch
          %387 = sbr.rel (%p385) target = $region64
        $region63: #{tpu_custom_call.1} parent=59 // pred_region
          %s388 = smul.u32 16, %s24
          %p389 = scmp.lt.s32.totalorder %s388, 63
          %s390 = scalar_select %p389, %s388, 63
          %s391 = smul.addr %s390, 8
          %s392 = scalar_lea.vmem %s0, %s391
          %s393 = smul.u32 16, %s24
        $region64: #{tpu_custom_call.1} parent=59 // pred_fallthru
          _
        // Predicated region
        $region65: #{tpu_custom_call.1} parent=59 // pred_check
          %p394 = pneg %p70
        $region66: #{tpu_custom_call.1} parent=59 // pred_check_branch
          %396 = sbr.rel (%p394) target = $region68
        $region67: #{tpu_custom_call.1} parent=59 // pred_region
          %s397 = smul.u32 16, %s24
          %p398 = scmp.lt.s32.totalorder %s397, 63
          %s399 = scalar_select %p398, %s397, 63
          %s400 = smul.addr %s399, 8
          %s401 = scalar_lea.vmem %s1, %s400
          %s402 = smul.u32 16, %s24
        $region68: #{tpu_custom_call.1} parent=59 // pred_fallthru
          _
      $region60: #{tpu_custom_call.1} parent=5 // pred_fallthru
        _
      %p403 = scmp.le.s32.totalorder 1, %s24
      %p404 = scmp.lt.s32.totalorder %s24, 5
      %p405 = pnand %p403, %p404
      %p406 = pneg %p405
      // Predicated region
      $region69: #{tpu_custom_call.1} parent=5 // pred_check
        _
      $region70: #{tpu_custom_call.1} parent=5 // pred_check_branch
        %408 = sbr.rel (%p405) target = $region72
      $region71: #{tpu_custom_call.1} parent=5 // pred_region
        %s409 = ssub.s32 %s24, 1
        %s410 = smul.u32 16, %s29
        %p411 = scmp.lt.s32.totalorder %s410, 63
        %s412 = scalar_select %p411, %s410, 63
        %s413 = smul.addr %s412, 8
        %s414 = scalar_lea.vmem %s0, %s413
        %p415 = pneg %p50
        %p416 = pneg %p47
        %s417 = smul.u32 16, %s29
        %p418 = scmp.lt.s32.totalorder %s417, 63
        %s419 = scalar_select %p418, %s417, 63
        %s420 = smul.addr %s419, 8
        %s421 = scalar_lea.vmem %s1, %s420
        %p422 = pneg %p76
        %p423 = pneg %p73
        %p424 = pneg %p97
        %p425 = pneg %p94
        %p426 = pneg %p118
        %p427 = pneg %p115
        %p428 = pneg %p139
        %p429 = pneg %p136
        %p430 = pneg %p160
        %p431 = pneg %p157
        %p432 = pneg %p181
        %p433 = pneg %p178
        %p434 = pneg %p202
        %p435 = pneg %p199
        %p436 = pneg %p223
        %p437 = pneg %p220
        %p438 = pneg %p244
        %p439 = pneg %p241
        %p440 = pneg %p265
        %p441 = pneg %p262
        %p442 = pneg %p286
        %p443 = pneg %p283
        %p444 = pneg %p307
        %p445 = pneg %p304
        %p446 = pneg %p333
        %p447 = pneg %p330
        %s448 = sand.u32 %s320, 1
        %s449 = scalar_lea.sflag [#allocation4], %s448
        %s450 = sand.u32 %s320, 1
        %s451 = scalar_lea.vmem [#allocation3], %s450
        %s452 = smul.u32 16, %s29
        %p453 = scmp.lt.s32.totalorder %s452, 63
        %s454 = scalar_select %p453, %s452, 63
        %s455 = smul.addr %s454, 8
        %s456 = scalar_lea.vmem %s0, %s455
        %s457 = smul.u32 16, %s29
        %s458 = smul.u32 16, %s29
        %p459 = scmp.lt.s32.totalorder %s458, 63
        %s460 = scalar_select %p459, %s458, 63
        %s461 = smul.addr %s460, 8
        %s462 = scalar_lea.vmem %s1, %s461
        %s463 = smul.u32 16, %s29
        %v465 = vld [vmem:[%s456] sm:$0xff]
        %v466 = vld [vmem:[%s456 + $0x8] sm:$0xff]
        %v467 = vld [vmem:[%s456 + $0x10] sm:$0xff]
        %v468 = vld [vmem:[%s456 + $0x18] sm:$0xff]
        %v469 = vld [vmem:[%s456 + $0x20] sm:$0xff]
        %v470 = vld [vmem:[%s456 + $0x28] sm:$0xff]
        %v471 = vld [vmem:[%s456 + $0x30] sm:$0xff]
        %v472 = vld [vmem:[%s456 + $0x38] sm:$0xff]
        %v473 = vld [vmem:[%s456 + $0x40] sm:$0xff]
        %v474 = vld [vmem:[%s456 + $0x48] sm:$0xff]
        %v475 = vld [vmem:[%s456 + $0x50] sm:$0xff]
        %v476 = vld [vmem:[%s456 + $0x58] sm:$0xff]
        %v477 = vld [vmem:[%s456 + $0x60] sm:$0xff]
        %v478 = vld [vmem:[%s456 + $0x68] sm:$0xff]
        %v479 = vld [vmem:[%s456 + $0x70] sm:$0xff]
        %v480 = vld [vmem:[%s456 + $0x78] sm:$0xff]
        %v481 = vpack.c.bf16 %v466, %v465
        %v482 = vpack.c.bf16 %v468, %v467
        %v483 = vpack.c.bf16 %v470, %v469
        %v484 = vpack.c.bf16 %v472, %v471
        %v485 = vpack.c.bf16 %v474, %v473
        %v486 = vpack.c.bf16 %v476, %v475
        %v487 = vpack.c.bf16 %v478, %v477
        %v488 = vpack.c.bf16 %v480, %v479
        %v489 = vld [vmem:[%s3] sm:$0xf]
        %v490 = vld [vmem:[%s3 + $0x4] sm:$0x7]
        %v491 = vld [vmem:[%s4] sm:$0x1]
        %v493 = vlaneseq
        %v494 = vshrl.u32 %v493, 7
        %v495 = vsub.s32 0, %v494
        %v496 = vrot.slane %v491, %v495
        %v500 = vunpack.c.l.b16 %v489
        %v501 = vunpack.c.l.b16 %v490
        %v502 = vpack.c.b16 %v501, %v500
        %vm503 = vcmask 105472
        %v505 = vsel %vm503, %v481, 0
        %v508 = vsel %vm503, %v482, 0
        %v511 = vsel %vm503, %v483, 0
        %v514 = vsel %vm503, %v484, 0
        %v517 = vsel %vm503, %v485, 0
        %v520 = vsel %vm503, %v486, 0
        %v523 = vsel %vm503, %v487, 0
        %v526 = vsel %vm503, %v488, 0
        %vm528 = vcmask 1045504
        %vm529 = vcmask 1046528
        %v530 = vsel %vm528, 4294967295, 65535
        %v531 = vsel %vm529, %v530, 0
        %v533 = vand.u32 %v502, %v531
        %535 = vmatprep.subr.bf16.mxu0 0
        %536 = vmatpush1.bf16.msra.mxu0 0
        %537 = vmatprep.subr.bf16.mxu0 0
        %538 = vmatpush1.bf16.msra.mxu0 0
        %539 = vmatprep.subr.bf16.mxu0 0
        %540 = vmatpush1.bf16.msra.mxu0 0
        %541 = vmatprep.subr.bf16.mxu0 0
        %542 = vmatpush1.bf16.msra.mxu0 0
        %543 = vmatprep.subr.bf16.mxu0 0
        %544 = vmatpush1.bf16.msra.mxu0 0
        %545 = vmatprep.subr.bf16.mxu0 0
        %546 = vmatpush1.bf16.msra.mxu0 0
        %547 = vmatprep.subr.bf16.mxu0 0
        %548 = vmatpush1.bf16.msra.mxu0 0
        %549 = vmatprep.subr.bf16.mxu0 0
        %550 = vmatpush1.bf16.msra.mxu0 %v533
        %551 = vmatprep.subr.bf16.mxu0 0
        %552 = vmatpush2.bf16.msra.mxu0 0
        %553 = vmatprep.subr.bf16.mxu0 0
        %554 = vmatpush2.bf16.msra.mxu0 0
        %555 = vmatprep.subr.bf16.mxu0 0
        %556 = vmatpush2.bf16.msra.mxu0 0
        %557 = vmatprep.subr.bf16.mxu0 0
        %558 = vmatpush2.bf16.msra.mxu0 0
        %559 = vmatprep.subr.bf16.mxu0 0
        %560 = vmatpush2.bf16.msra.mxu0 0
        %561 = vmatprep.subr.bf16.mxu0 0
        %562 = vmatpush2.bf16.msra.mxu0 0
        %563 = vmatprep.subr.bf16.mxu0 0
        %564 = vmatpush2.bf16.msra.mxu0 0
        %565 = vmatprep.subr.bf16.mxu0 0
        %566 = vmatpush2.bf16.msra.mxu0 0
        %567 = vmatprep.mubr.bf16.mxu0 0
        %568 = vmatmul.mubr.bf16.gmra.mxu0 %v505
        %v569 = vpop.f32.mrf.mxu0
        %v570 = vadd.f32 %v496, %v569
        %v571 = vpop.f32.mrf.mxu0
        %v572 = vpop.f32.mrf.mxu0
        %v573 = vadd.f32 %v496, %v572
        %v574 = vpop.f32.mrf.mxu0
        %575 = vmatprep.mubr.bf16.mxu0 0
        %576 = vmatmul.mubr.bf16.gmra.mxu0 %v508
        %v577 = vpop.f32.mrf.mxu0
        %v578 = vadd.f32 %v496, %v577
        %v579 = vpop.f32.mrf.mxu0
        %v580 = vpop.f32.mrf.mxu0
        %v581 = vadd.f32 %v496, %v580
        %v582 = vpop.f32.mrf.mxu0
        %583 = vmatprep.mubr.bf16.mxu0 0
        %584 = vmatmul.mubr.bf16.gmra.mxu0 %v511
        %v585 = vpop.f32.mrf.mxu0
        %v586 = vadd.f32 %v496, %v585
        %v587 = vpop.f32.mrf.mxu0
        %v588 = vpop.f32.mrf.mxu0
        %v589 = vadd.f32 %v496, %v588
        %v590 = vpop.f32.mrf.mxu0
        %591 = vmatprep.mubr.bf16.mxu0 0
        %592 = vmatmul.mubr.bf16.gmra.mxu0 %v514
        %v593 = vpop.f32.mrf.mxu0
        %v594 = vadd.f32 %v496, %v593
        %v595 = vpop.f32.mrf.mxu0
        %v596 = vpop.f32.mrf.mxu0
        %v597 = vadd.f32 %v496, %v596
        %v598 = vpop.f32.mrf.mxu0
        %599 = vmatprep.mubr.bf16.mxu0 0
        %600 = vmatmul.mubr.bf16.gmra.mxu0 %v517
        %v601 = vpop.f32.mrf.mxu0
        %v602 = vadd.f32 %v496, %v601
        %v603 = vpop.f32.mrf.mxu0
        %v604 = vpop.f32.mrf.mxu0
        %v605 = vadd.f32 %v496, %v604
        %v606 = vpop.f32.mrf.mxu0
        %607 = vmatprep.mubr.bf16.mxu0 0
        %608 = vmatmul.mubr.bf16.gmra.mxu0 %v520
        %v609 = vpop.f32.mrf.mxu0
        %v610 = vadd.f32 %v496, %v609
        %v611 = vpop.f32.mrf.mxu0
        %v612 = vpop.f32.mrf.mxu0
        %v613 = vadd.f32 %v496, %v612
        %v614 = vpop.f32.mrf.mxu0
        %615 = vmatprep.mubr.bf16.mxu0 0
        %616 = vmatmul.mubr.bf16.gmra.mxu0 %v523
        %v617 = vpop.f32.mrf.mxu0
        %v618 = vadd.f32 %v496, %v617
        %v619 = vpop.f32.mrf.mxu0
        %v620 = vpop.f32.mrf.mxu0
        %v621 = vadd.f32 %v496, %v620
        %v622 = vpop.f32.mrf.mxu0
        %623 = vmatprep.mubr.bf16.mxu0 0
        %624 = vmatmul.mubr.bf16.gmra.mxu0 %v526
        %v625 = vpop.f32.mrf.mxu0
        %v626 = vadd.f32 %v496, %v625
        %v627 = vpop.f32.mrf.mxu0
        %v628 = vpop.f32.mrf.mxu0
        %v629 = vadd.f32 %v496, %v628
        %v630 = vpop.f32.mrf.mxu0
        %631 = vdwg.mxu0
        %v632 = vmax.f32 %v570, 0.0
        %v633 = vmax.f32 %v573, 0.0
        %v634 = vmax.f32 %v578, 0.0
        %v635 = vmax.f32 %v581, 0.0
        %v636 = vmax.f32 %v586, 0.0
        %v637 = vmax.f32 %v589, 0.0
        %v638 = vmax.f32 %v594, 0.0
        %v639 = vmax.f32 %v597, 0.0
        %v640 = vmax.f32 %v602, 0.0
        %v641 = vmax.f32 %v605, 0.0
        %v642 = vmax.f32 %v610, 0.0
        %v643 = vmax.f32 %v613, 0.0
        %v644 = vmax.f32 %v618, 0.0
        %v645 = vmax.f32 %v621, 0.0
        %v646 = vmax.f32 %v626, 0.0
        %v647 = vmax.f32 %v629, 0.0
        %v648 = vpack.c.bf16 %v633, %v632
        %v649 = vpack.c.bf16 %v635, %v634
        %v650 = vpack.c.bf16 %v637, %v636
        %v651 = vpack.c.bf16 %v639, %v638
        %v652 = vpack.c.bf16 %v641, %v640
        %v653 = vpack.c.bf16 %v643, %v642
        %v654 = vpack.c.bf16 %v645, %v644
        %v655 = vpack.c.bf16 %v647, %v646
        %v656 = vld [vmem:[%s5] sm:$0xf]
        %v657 = vld [vmem:[%s5 + $0x4] sm:$0xf]
        %v658 = vld [vmem:[%s5 + $0x8] sm:$0xf]
        %v659 = vld [vmem:[%s5 + $0xc] sm:$0xf]
        %v660 = vld [vmem:[%s6] sm:$0x1]
        %v662 = vlaneseq
        %v663 = vshrl.u32 %v662, 7
        %v664 = vsub.s32 0, %v663
        %v665 = vrot.slane %v660, %v664
        %v671 = vunpack.c.l.b16 %v656
        %v672 = vunpack.c.l.b16 %v657
        %v673 = vunpack.c.l.b16 %v658
        %v674 = vunpack.c.l.b16 %v659
        %v675 = vpack.c.b16 %v672, %v671
        %v676 = vpack.c.b16 %v674, %v673
        %vm679 = vcmask 261120
        %v681 = vsel %vm679, %v648, 0
        %v684 = vsel %vm679, %v649, 0
        %v687 = vsel %vm679, %v650, 0
        %v690 = vsel %vm679, %v651, 0
        %v693 = vsel %vm679, %v652, 0
        %v696 = vsel %vm679, %v653, 0
        %v699 = vsel %vm679, %v654, 0
        %v702 = vsel %vm679, %v655, 0
        %704 = vmatprep.subr.bf16.mxu0 0
        %705 = vmatpush1.bf16.msra.mxu0 0
        %706 = vmatprep.subr.bf16.mxu0 0
        %707 = vmatpush1.bf16.msra.mxu0 0
        %708 = vmatprep.subr.bf16.mxu0 0
        %709 = vmatpush1.bf16.msra.mxu0 0
        %710 = vmatprep.subr.bf16.mxu0 0
        %711 = vmatpush1.bf16.msra.mxu0 0
        %712 = vmatprep.subr.bf16.mxu0 0
        %713 = vmatpush1.bf16.msra.mxu0 0
        %714 = vmatprep.subr.bf16.mxu0 0
        %715 = vmatpush1.bf16.msra.mxu0 0
        %716 = vmatprep.subr.bf16.mxu0 0
        %717 = vmatpush1.bf16.msra.mxu0 %v676
        %718 = vmatprep.subr.bf16.mxu0 0
        %719 = vmatpush1.bf16.msra.mxu0 %v675
        %720 = vmatprep.subr.bf16.mxu0 0
        %721 = vmatpush2.bf16.msra.mxu0 0
        %722 = vmatprep.subr.bf16.mxu0 0
        %723 = vmatpush2.bf16.msra.mxu0 0
        %724 = vmatprep.subr.bf16.mxu0 0
        %725 = vmatpush2.bf16.msra.mxu0 0
        %726 = vmatprep.subr.bf16.mxu0 0
        %727 = vmatpush2.bf16.msra.mxu0 0
        %728 = vmatprep.subr.bf16.mxu0 0
        %729 = vmatpush2.bf16.msra.mxu0 0
        %730 = vmatprep.subr.bf16.mxu0 0
        %731 = vmatpush2.bf16.msra.mxu0 0
        %732 = vmatprep.subr.bf16.mxu0 0
        %733 = vmatpush2.bf16.msra.mxu0 0
        %734 = vmatprep.subr.bf16.mxu0 0
        %735 = vmatpush2.bf16.msra.mxu0 0
        %736 = vmatprep.mubr.bf16.mxu0 0
        %737 = vmatmul.mubr.bf16.gmra.mxu0 %v681
        %v738 = vpop.f32.mrf.mxu0
        %v739 = vadd.f32 %v665, %v738
        %v740 = vpop.f32.mrf.mxu0
        %v741 = vpop.f32.mrf.mxu0
        %v742 = vadd.f32 %v665, %v741
        %v743 = vpop.f32.mrf.mxu0
        %744 = vmatprep.mubr.bf16.mxu0 0
        %745 = vmatmul.mubr.bf16.gmra.mxu0 %v684
        %v746 = vpop.f32.mrf.mxu0
        %v747 = vadd.f32 %v665, %v746
        %v748 = vpop.f32.mrf.mxu0
        %v749 = vpop.f32.mrf.mxu0
        %v750 = vadd.f32 %v665, %v749
        %v751 = vpop.f32.mrf.mxu0
        %752 = vmatprep.mubr.bf16.mxu0 0
        %753 = vmatmul.mubr.bf16.gmra.mxu0 %v687
        %v754 = vpop.f32.mrf.mxu0
        %v755 = vadd.f32 %v665, %v754
        %v756 = vpop.f32.mrf.mxu0
        %v757 = vpop.f32.mrf.mxu0
        %v758 = vadd.f32 %v665, %v757
        %v759 = vpop.f32.mrf.mxu0
        %760 = vmatprep.mubr.bf16.mxu0 0
        %761 = vmatmul.mubr.bf16.gmra.mxu0 %v690
        %v762 = vpop.f32.mrf.mxu0
        %v763 = vadd.f32 %v665, %v762
        %v764 = vpop.f32.mrf.mxu0
        %v765 = vpop.f32.mrf.mxu0
        %v766 = vadd.f32 %v665, %v765
        %v767 = vpop.f32.mrf.mxu0
        %768 = vmatprep.mubr.bf16.mxu0 0
        %769 = vmatmul.mubr.bf16.gmra.mxu0 %v693
        %v770 = vpop.f32.mrf.mxu0
        %v771 = vadd.f32 %v665, %v770
        %v772 = vpop.f32.mrf.mxu0
        %v773 = vpop.f32.mrf.mxu0
        %v774 = vadd.f32 %v665, %v773
        %v775 = vpop.f32.mrf.mxu0
        %776 = vmatprep.mubr.bf16.mxu0 0
        %777 = vmatmul.mubr.bf16.gmra.mxu0 %v696
        %v778 = vpop.f32.mrf.mxu0
        %v779 = vadd.f32 %v665, %v778
        %v780 = vpop.f32.mrf.mxu0
        %v781 = vpop.f32.mrf.mxu0
        %v782 = vadd.f32 %v665, %v781
        %v783 = vpop.f32.mrf.mxu0
        %784 = vmatprep.mubr.bf16.mxu0 0
        %785 = vmatmul.mubr.bf16.gmra.mxu0 %v699
        %v786 = vpop.f32.mrf.mxu0
        %v787 = vadd.f32 %v665, %v786
        %v788 = vpop.f32.mrf.mxu0
        %v789 = vpop.f32.mrf.mxu0
        %v790 = vadd.f32 %v665, %v789
        %v791 = vpop.f32.mrf.mxu0
        %792 = vmatprep.mubr.bf16.mxu0 0
        %793 = vmatmul.mubr.bf16.gmra.mxu0 %v702
        %v794 = vpop.f32.mrf.mxu0
        %v795 = vadd.f32 %v665, %v794
        %v796 = vpop.f32.mrf.mxu0
        %v797 = vpop.f32.mrf.mxu0
        %v798 = vadd.f32 %v665, %v797
        %v799 = vpop.f32.mrf.mxu0
        %800 = vdwg.mxu0
        %v801 = vmax.f32 %v739, 0.0
        %v802 = vmax.f32 %v742, 0.0
        %v803 = vmax.f32 %v747, 0.0
        %v804 = vmax.f32 %v750, 0.0
        %v805 = vmax.f32 %v755, 0.0
        %v806 = vmax.f32 %v758, 0.0
        %v807 = vmax.f32 %v763, 0.0
        %v808 = vmax.f32 %v766, 0.0
        %v809 = vmax.f32 %v771, 0.0
        %v810 = vmax.f32 %v774, 0.0
        %v811 = vmax.f32 %v779, 0.0
        %v812 = vmax.f32 %v782, 0.0
        %v813 = vmax.f32 %v787, 0.0
        %v814 = vmax.f32 %v790, 0.0
        %v815 = vmax.f32 %v795, 0.0
        %v816 = vmax.f32 %v798, 0.0
        %v817 = vld [vmem:[%s462] sm:$0xff]
        %v818 = vld [vmem:[%s462 + $0x8] sm:$0xff]
        %v819 = vld [vmem:[%s462 + $0x10] sm:$0xff]
        %v820 = vld [vmem:[%s462 + $0x18] sm:$0xff]
        %v821 = vld [vmem:[%s462 + $0x20] sm:$0xff]
        %v822 = vld [vmem:[%s462 + $0x28] sm:$0xff]
        %v823 = vld [vmem:[%s462 + $0x30] sm:$0xff]
        %v824 = vld [vmem:[%s462 + $0x38] sm:$0xff]
        %v825 = vld [vmem:[%s462 + $0x40] sm:$0xff]
        %v826 = vld [vmem:[%s462 + $0x48] sm:$0xff]
        %v827 = vld [vmem:[%s462 + $0x50] sm:$0xff]
        %v828 = vld [vmem:[%s462 + $0x58] sm:$0xff]
        %v829 = vld [vmem:[%s462 + $0x60] sm:$0xff]
        %v830 = vld [vmem:[%s462 + $0x68] sm:$0xff]
        %v831 = vld [vmem:[%s462 + $0x70] sm:$0xff]
        %v832 = vld [vmem:[%s462 + $0x78] sm:$0xff]
        %v833 = vlaneseq
        %v834 = vand.u32 %v833, 127
        %835 = vset.pattern.permute.xlu0 0
        %836 = vperm.xlu0 %835, %v817
        %v837 = vpop.permute.xlu0 %836
        %838 = vset.pattern.permute.xlu0 0
        %839 = vperm.xlu0 %838, %v818
        %v840 = vpop.permute.xlu0 %839
        %841 = vset.pattern.permute.xlu0 0
        %842 = vperm.xlu0 %841, %v819
        %v843 = vpop.permute.xlu0 %842
        %844 = vset.pattern.permute.xlu0 0
        %845 = vperm.xlu0 %844, %v820
        %v846 = vpop.permute.xlu0 %845
        %847 = vset.pattern.permute.xlu0 0
        %848 = vperm.xlu0 %847, %v821
        %v849 = vpop.permute.xlu0 %848
        %850 = vset.pattern.permute.xlu0 0
        %851 = vperm.xlu0 %850, %v822
        %v852 = vpop.permute.xlu0 %851
        %853 = vset.pattern.permute.xlu0 0
        %854 = vperm.xlu0 %853, %v823
        %v855 = vpop.permute.xlu0 %854
        %856 = vset.pattern.permute.xlu0 0
        %857 = vperm.xlu0 %856, %v824
        %v858 = vpop.permute.xlu0 %857
        %859 = vset.pattern.permute.xlu0 0
        %860 = vperm.xlu0 %859, %v825
        %v861 = vpop.permute.xlu0 %860
        %862 = vset.pattern.permute.xlu0 0
        %863 = vperm.xlu0 %862, %v826
        %v864 = vpop.permute.xlu0 %863
        %865 = vset.pattern.permute.xlu0 0
        %866 = vperm.xlu0 %865, %v827
        %v867 = vpop.permute.xlu0 %866
        %868 = vset.pattern.permute.xlu0 0
        %869 = vperm.xlu0 %868, %v828
        %v870 = vpop.permute.xlu0 %869
        %871 = vset.pattern.permute.xlu0 0
        %872 = vperm.xlu0 %871, %v829
        %v873 = vpop.permute.xlu0 %872
        %874 = vset.pattern.permute.xlu0 0
        %875 = vperm.xlu0 %874, %v830
        %v876 = vpop.permute.xlu0 %875
        %877 = vset.pattern.permute.xlu0 0
        %878 = vperm.xlu0 %877, %v831
        %v879 = vpop.permute.xlu0 %878
        %880 = vset.pattern.permute.xlu0 0
        %881 = vperm.xlu0 %880, %v832
        %v882 = vpop.permute.xlu0 %881
        %vm883 = vcmp.eq.s32.totalorder %v837, %v834
        %vm884 = vcmp.eq.s32.totalorder %v840, %v834
        %vm885 = vcmp.eq.s32.totalorder %v843, %v834
        %vm886 = vcmp.eq.s32.totalorder %v846, %v834
        %vm887 = vcmp.eq.s32.totalorder %v849, %v834
        %vm888 = vcmp.eq.s32.totalorder %v852, %v834
        %vm889 = vcmp.eq.s32.totalorder %v855, %v834
        %vm890 = vcmp.eq.s32.totalorder %v858, %v834
        %vm891 = vcmp.eq.s32.totalorder %v861, %v834
        %vm892 = vcmp.eq.s32.totalorder %v864, %v834
        %vm893 = vcmp.eq.s32.totalorder %v867, %v834
        %vm894 = vcmp.eq.s32.totalorder %v870, %v834
        %vm895 = vcmp.eq.s32.totalorder %v873, %v834
        %vm896 = vcmp.eq.s32.totalorder %v876, %v834
        %vm897 = vcmp.eq.s32.totalorder %v879, %v834
        %vm898 = vcmp.eq.s32.totalorder %v882, %v834
        %v899 = vsel %vm883, 1, 0
        %v900 = vsel %vm884, 1, 0
        %v901 = vsel %vm885, 1, 0
        %v902 = vsel %vm886, 1, 0
        %v903 = vsel %vm887, 1, 0
        %v904 = vsel %vm888, 1, 0
        %v905 = vsel %vm889, 1, 0
        %v906 = vsel %vm890, 1, 0
        %v907 = vsel %vm891, 1, 0
        %v908 = vsel %vm892, 1, 0
        %v909 = vsel %vm893, 1, 0
        %v910 = vsel %vm894, 1, 0
        %v911 = vsel %vm895, 1, 0
        %v912 = vsel %vm896, 1, 0
        %v913 = vsel %vm897, 1, 0
        %v914 = vsel %vm898, 1, 0
        %v915 = vcvt.s32.f32 %v899
        %v916 = vcvt.s32.f32 %v900
        %v917 = vcvt.s32.f32 %v901
        %v918 = vcvt.s32.f32 %v902
        %v919 = vcvt.s32.f32 %v903
        %v920 = vcvt.s32.f32 %v904
        %v921 = vcvt.s32.f32 %v905
        %v922 = vcvt.s32.f32 %v906
        %v923 = vcvt.s32.f32 %v907
        %v924 = vcvt.s32.f32 %v908
        %v925 = vcvt.s32.f32 %v909
        %v926 = vcvt.s32.f32 %v910
        %v927 = vcvt.s32.f32 %v911
        %v928 = vcvt.s32.f32 %v912
        %v929 = vcvt.s32.f32 %v913
        %v930 = vcvt.s32.f32 %v914
        %v931 = vadd.f32 %v915, 0.0
        %v932 = vadd.f32 %v916, 0.0
        %v933 = vadd.f32 %v917, 0.0
        %v934 = vadd.f32 %v918, 0.0
        %v935 = vadd.f32 %v919, 0.0
        %v936 = vadd.f32 %v920, 0.0
        %v937 = vadd.f32 %v921, 0.0
        %v938 = vadd.f32 %v922, 0.0
        %v939 = vadd.f32 %v923, 0.0
        %v940 = vadd.f32 %v924, 0.0
        %v941 = vadd.f32 %v925, 0.0
        %v942 = vadd.f32 %v926, 0.0
        %v943 = vadd.f32 %v927, 0.0
        %v944 = vadd.f32 %v928, 0.0
        %v945 = vadd.f32 %v929, 0.0
        %v946 = vadd.f32 %v930, 0.0
        %947 = vset.pattern.permute.xlu0 1
        %948 = vperm.xlu0 %947, %v817
        %v949 = vpop.permute.xlu0 %948
        %950 = vset.pattern.permute.xlu0 1
        %951 = vperm.xlu0 %950, %v818
        %v952 = vpop.permute.xlu0 %951
        %953 = vset.pattern.permute.xlu0 1
        %954 = vperm.xlu0 %953, %v819
        %v955 = vpop.permute.xlu0 %954
        %956 = vset.pattern.permute.xlu0 1
        %957 = vperm.xlu0 %956, %v820
        %v958 = vpop.permute.xlu0 %957
        %959 = vset.pattern.permute.xlu0 1
        %960 = vperm.xlu0 %959, %v821
        %v961 = vpop.permute.xlu0 %960
        %962 = vset.pattern.permute.xlu0 1
        %963 = vperm.xlu0 %962, %v822
        %v964 = vpop.permute.xlu0 %963
        %965 = vset.pattern.permute.xlu0 1
        %966 = vperm.xlu0 %965, %v823
        %v967 = vpop.permute.xlu0 %966
        %968 = vset.pattern.permute.xlu0 1
        %969 = vperm.xlu0 %968, %v824
        %v970 = vpop.permute.xlu0 %969
        %971 = vset.pattern.permute.xlu0 1
        %972 = vperm.xlu0 %971, %v825
        %v973 = vpop.permute.xlu0 %972
        %974 = vset.pattern.permute.xlu0 1
        %975 = vperm.xlu0 %974, %v826
        %v976 = vpop.permute.xlu0 %975
        %977 = vset.pattern.permute.xlu0 1
        %978 = vperm.xlu0 %977, %v827
        %v979 = vpop.permute.xlu0 %978
        %980 = vset.pattern.permute.xlu0 1
        %981 = vperm.xlu0 %980, %v828
        %v982 = vpop.permute.xlu0 %981
        %983 = vset.pattern.permute.xlu0 1
        %984 = vperm.xlu0 %983, %v829
        %v985 = vpop.permute.xlu0 %984
        %986 = vset.pattern.permute.xlu0 1
        %987 = vperm.xlu0 %986, %v830
        %v988 = vpop.permute.xlu0 %987
        %989 = vset.pattern.permute.xlu0 1
        %990 = vperm.xlu0 %989, %v831
        %v991 = vpop.permute.xlu0 %990
        %992 = vset.pattern.permute.xlu0 1
        %993 = vperm.xlu0 %992, %v832
        %v994 = vpop.permute.xlu0 %993
        %vm995 = vcmp.eq.s32.totalorder %v949, %v834
        %vm996 = vcmp.eq.s32.totalorder %v952, %v834
        %vm997 = vcmp.eq.s32.totalorder %v955, %v834
        %vm998 = vcmp.eq.s32.totalorder %v958, %v834
        %vm999 = vcmp.eq.s32.totalorder %v961, %v834
        %vm1000 = vcmp.eq.s32.totalorder %v964, %v834
        %vm1001 = vcmp.eq.s32.totalorder %v967, %v834
        %vm1002 = vcmp.eq.s32.totalorder %v970, %v834
        %vm1003 = vcmp.eq.s32.totalorder %v973, %v834
        %vm1004 = vcmp.eq.s32.totalorder %v976, %v834
        %vm1005 = vcmp.eq.s32.totalorder %v979, %v834
        %vm1006 = vcmp.eq.s32.totalorder %v982, %v834
        %vm1007 = vcmp.eq.s32.totalorder %v985, %v834
        %vm1008 = vcmp.eq.s32.totalorder %v988, %v834
        %vm1009 = vcmp.eq.s32.totalorder %v991, %v834
        %vm1010 = vcmp.eq.s32.totalorder %v994, %v834
        %v1011 = vsel %vm995, 1, 0
        %v1012 = vsel %vm996, 1, 0
        %v1013 = vsel %vm997, 1, 0
        %v1014 = vsel %vm998, 1, 0
        %v1015 = vsel %vm999, 1, 0
        %v1016 = vsel %vm1000, 1, 0
        %v1017 = vsel %vm1001, 1, 0
        %v1018 = vsel %vm1002, 1, 0
        %v1019 = vsel %vm1003, 1, 0
        %v1020 = vsel %vm1004, 1, 0
        %v1021 = vsel %vm1005, 1, 0
        %v1022 = vsel %vm1006, 1, 0
        %v1023 = vsel %vm1007, 1, 0
        %v1024 = vsel %vm1008, 1, 0
        %v1025 = vsel %vm1009, 1, 0
        %v1026 = vsel %vm1010, 1, 0
        %v1027 = vcvt.s32.f32 %v1011
        %v1028 = vcvt.s32.f32 %v1012
        %v1029 = vcvt.s32.f32 %v1013
        %v1030 = vcvt.s32.f32 %v1014
        %v1031 = vcvt.s32.f32 %v1015
        %v1032 = vcvt.s32.f32 %v1016
        %v1033 = vcvt.s32.f32 %v1017
        %v1034 = vcvt.s32.f32 %v1018
        %v1035 = vcvt.s32.f32 %v1019
        %v1036 = vcvt.s32.f32 %v1020
        %v1037 = vcvt.s32.f32 %v1021
        %v1038 = vcvt.s32.f32 %v1022
        %v1039 = vcvt.s32.f32 %v1023
        %v1040 = vcvt.s32.f32 %v1024
        %v1041 = vcvt.s32.f32 %v1025
        %v1042 = vcvt.s32.f32 %v1026
        %v1043 = vadd.f32 %v931, %v1027
        %v1044 = vadd.f32 %v932, %v1028
        %v1045 = vadd.f32 %v933, %v1029
        %v1046 = vadd.f32 %v934, %v1030
        %v1047 = vadd.f32 %v935, %v1031
        %v1048 = vadd.f32 %v936, %v1032
        %v1049 = vadd.f32 %v937, %v1033
        %v1050 = vadd.f32 %v938, %v1034
        %v1051 = vadd.f32 %v939, %v1035
        %v1052 = vadd.f32 %v940, %v1036
        %v1053 = vadd.f32 %v941, %v1037
        %v1054 = vadd.f32 %v942, %v1038
        %v1055 = vadd.f32 %v943, %v1039
        %v1056 = vadd.f32 %v944, %v1040
        %v1057 = vadd.f32 %v945, %v1041
        %v1058 = vadd.f32 %v946, %v1042
        %1059 = vset.pattern.permute.xlu0 2
        %1060 = vperm.xlu0 %1059, %v817
        %v1061 = vpop.permute.xlu0 %1060
        %1062 = vset.pattern.permute.xlu0 2
        %1063 = vperm.xlu0 %1062, %v818
        %v1064 = vpop.permute.xlu0 %1063
        %1065 = vset.pattern.permute.xlu0 2
        %1066 = vperm.xlu0 %1065, %v819
        %v1067 = vpop.permute.xlu0 %1066
        %1068 = vset.pattern.permute.xlu0 2
        %1069 = vperm.xlu0 %1068, %v820
        %v1070 = vpop.permute.xlu0 %1069
        %1071 = vset.pattern.permute.xlu0 2
        %1072 = vperm.xlu0 %1071, %v821
        %v1073 = vpop.permute.xlu0 %1072
        %1074 = vset.pattern.permute.xlu0 2
        %1075 = vperm.xlu0 %1074, %v822
        %v1076 = vpop.permute.xlu0 %1075
        %1077 = vset.pattern.permute.xlu0 2
        %1078 = vperm.xlu0 %1077, %v823
        %v1079 = vpop.permute.xlu0 %1078
        %1080 = vset.pattern.permute.xlu0 2
        %1081 = vperm.xlu0 %1080, %v824
        %v1082 = vpop.permute.xlu0 %1081
        %1083 = vset.pattern.permute.xlu0 2
        %1084 = vperm.xlu0 %1083, %v825
        %v1085 = vpop.permute.xlu0 %1084
        %1086 = vset.pattern.permute.xlu0 2
        %1087 = vperm.xlu0 %1086, %v826
        %v1088 = vpop.permute.xlu0 %1087
        %1089 = vset.pattern.permute.xlu0 2
        %1090 = vperm.xlu0 %1089, %v827
        %v1091 = vpop.permute.xlu0 %1090
        %1092 = vset.pattern.permute.xlu0 2
        %1093 = vperm.xlu0 %1092, %v828
        %v1094 = vpop.permute.xlu0 %1093
        %1095 = vset.pattern.permute.xlu0 2
        %1096 = vperm.xlu0 %1095, %v829
        %v1097 = vpop.permute.xlu0 %1096
        %1098 = vset.pattern.permute.xlu0 2
        %1099 = vperm.xlu0 %1098, %v830
        %v1100 = vpop.permute.xlu0 %1099
        %1101 = vset.pattern.permute.xlu0 2
        %1102 = vperm.xlu0 %1101, %v831
        %v1103 = vpop.permute.xlu0 %1102
        %1104 = vset.pattern.permute.xlu0 2
        %1105 = vperm.xlu0 %1104, %v832
        %v1106 = vpop.permute.xlu0 %1105
        %vm1107 = vcmp.eq.s32.totalorder %v1061, %v834
        %vm1108 = vcmp.eq.s32.totalorder %v1064, %v834
        %vm1109 = vcmp.eq.s32.totalorder %v1067, %v834
        %vm1110 = vcmp.eq.s32.totalorder %v1070, %v834
        %vm1111 = vcmp.eq.s32.totalorder %v1073, %v834
        %vm1112 = vcmp.eq.s32.totalorder %v1076, %v834
        %vm1113 = vcmp.eq.s32.totalorder %v1079, %v834
        %vm1114 = vcmp.eq.s32.totalorder %v1082, %v834
        %vm1115 = vcmp.eq.s32.totalorder %v1085, %v834
        %vm1116 = vcmp.eq.s32.totalorder %v1088, %v834
        %vm1117 = vcmp.eq.s32.totalorder %v1091, %v834
        %vm1118 = vcmp.eq.s32.totalorder %v1094, %v834
        %vm1119 = vcmp.eq.s32.totalorder %v1097, %v834
        %vm1120 = vcmp.eq.s32.totalorder %v1100, %v834
        %vm1121 = vcmp.eq.s32.totalorder %v1103, %v834
        %vm1122 = vcmp.eq.s32.totalorder %v1106, %v834
        %v1123 = vsel %vm1107, 1, 0
        %v1124 = vsel %vm1108, 1, 0
        %v1125 = vsel %vm1109, 1, 0
        %v1126 = vsel %vm1110, 1, 0
        %v1127 = vsel %vm1111, 1, 0
        %v1128 = vsel %vm1112, 1, 0
        %v1129 = vsel %vm1113, 1, 0
        %v1130 = vsel %vm1114, 1, 0
        %v1131 = vsel %vm1115, 1, 0
        %v1132 = vsel %vm1116, 1, 0
        %v1133 = vsel %vm1117, 1, 0
        %v1134 = vsel %vm1118, 1, 0
        %v1135 = vsel %vm1119, 1, 0
        %v1136 = vsel %vm1120, 1, 0
        %v1137 = vsel %vm1121, 1, 0
        %v1138 = vsel %vm1122, 1, 0
        %v1139 = vcvt.s32.f32 %v1123
        %v1140 = vcvt.s32.f32 %v1124
        %v1141 = vcvt.s32.f32 %v1125
        %v1142 = vcvt.s32.f32 %v1126
        %v1143 = vcvt.s32.f32 %v1127
        %v1144 = vcvt.s32.f32 %v1128
        %v1145 = vcvt.s32.f32 %v1129
        %v1146 = vcvt.s32.f32 %v1130
        %v1147 = vcvt.s32.f32 %v1131
        %v1148 = vcvt.s32.f32 %v1132
        %v1149 = vcvt.s32.f32 %v1133
        %v1150 = vcvt.s32.f32 %v1134
        %v1151 = vcvt.s32.f32 %v1135
        %v1152 = vcvt.s32.f32 %v1136
        %v1153 = vcvt.s32.f32 %v1137
        %v1154 = vcvt.s32.f32 %v1138
        %v1155 = vadd.f32 %v1043, %v1139
        %v1156 = vadd.f32 %v1044, %v1140
        %v1157 = vadd.f32 %v1045, %v1141
        %v1158 = vadd.f32 %v1046, %v1142
        %v1159 = vadd.f32 %v1047, %v1143
        %v1160 = vadd.f32 %v1048, %v1144
        %v1161 = vadd.f32 %v1049, %v1145
        %v1162 = vadd.f32 %v1050, %v1146
        %v1163 = vadd.f32 %v1051, %v1147
        %v1164 = vadd.f32 %v1052, %v1148
        %v1165 = vadd.f32 %v1053, %v1149
        %v1166 = vadd.f32 %v1054, %v1150
        %v1167 = vadd.f32 %v1055, %v1151
        %v1168 = vadd.f32 %v1056, %v1152
        %v1169 = vadd.f32 %v1057, %v1153
        %v1170 = vadd.f32 %v1058, %v1154
        %1171 = vset.pattern.permute.xlu0 3
        %1172 = vperm.xlu0 %1171, %v817
        %v1173 = vpop.permute.xlu0 %1172
        %1174 = vset.pattern.permute.xlu0 3
        %1175 = vperm.xlu0 %1174, %v818
        %v1176 = vpop.permute.xlu0 %1175
        %1177 = vset.pattern.permute.xlu0 3
        %1178 = vperm.xlu0 %1177, %v819
        %v1179 = vpop.permute.xlu0 %1178
        %1180 = vset.pattern.permute.xlu0 3
        %1181 = vperm.xlu0 %1180, %v820
        %v1182 = vpop.permute.xlu0 %1181
        %1183 = vset.pattern.permute.xlu0 3
        %1184 = vperm.xlu0 %1183, %v821
        %v1185 = vpop.permute.xlu0 %1184
        %1186 = vset.pattern.permute.xlu0 3
        %1187 = vperm.xlu0 %1186, %v822
        %v1188 = vpop.permute.xlu0 %1187
        %1189 = vset.pattern.permute.xlu0 3
        %1190 = vperm.xlu0 %1189, %v823
        %v1191 = vpop.permute.xlu0 %1190
        %1192 = vset.pattern.permute.xlu0 3
        %1193 = vperm.xlu0 %1192, %v824
        %v1194 = vpop.permute.xlu0 %1193
        %1195 = vset.pattern.permute.xlu0 3
        %1196 = vperm.xlu0 %1195, %v825
        %v1197 = vpop.permute.xlu0 %1196
        %1198 = vset.pattern.permute.xlu0 3
        %1199 = vperm.xlu0 %1198, %v826
        %v1200 = vpop.permute.xlu0 %1199
        %1201 = vset.pattern.permute.xlu0 3
        %1202 = vperm.xlu0 %1201, %v827
        %v1203 = vpop.permute.xlu0 %1202
        %1204 = vset.pattern.permute.xlu0 3
        %1205 = vperm.xlu0 %1204, %v828
        %v1206 = vpop.permute.xlu0 %1205
        %1207 = vset.pattern.permute.xlu0 3
        %1208 = vperm.xlu0 %1207, %v829
        %v1209 = vpop.permute.xlu0 %1208
        %1210 = vset.pattern.permute.xlu0 3
        %1211 = vperm.xlu0 %1210, %v830
        %v1212 = vpop.permute.xlu0 %1211
        %1213 = vset.pattern.permute.xlu0 3
        %1214 = vperm.xlu0 %1213, %v831
        %v1215 = vpop.permute.xlu0 %1214
        %1216 = vset.pattern.permute.xlu0 3
        %1217 = vperm.xlu0 %1216, %v832
        %v1218 = vpop.permute.xlu0 %1217
        %vm1219 = vcmp.eq.s32.totalorder %v1173, %v834
        %vm1220 = vcmp.eq.s32.totalorder %v1176, %v834
        %vm1221 = vcmp.eq.s32.totalorder %v1179, %v834
        %vm1222 = vcmp.eq.s32.totalorder %v1182, %v834
        %vm1223 = vcmp.eq.s32.totalorder %v1185, %v834
        %vm1224 = vcmp.eq.s32.totalorder %v1188, %v834
        %vm1225 = vcmp.eq.s32.totalorder %v1191, %v834
        %vm1226 = vcmp.eq.s32.totalorder %v1194, %v834
        %vm1227 = vcmp.eq.s32.totalorder %v1197, %v834
        %vm1228 = vcmp.eq.s32.totalorder %v1200, %v834
        %vm1229 = vcmp.eq.s32.totalorder %v1203, %v834
        %vm1230 = vcmp.eq.s32.totalorder %v1206, %v834
        %vm1231 = vcmp.eq.s32.totalorder %v1209, %v834
        %vm1232 = vcmp.eq.s32.totalorder %v1212, %v834
        %vm1233 = vcmp.eq.s32.totalorder %v1215, %v834
        %vm1234 = vcmp.eq.s32.totalorder %v1218, %v834
        %v1235 = vsel %vm1219, 1, 0
        %v1236 = vsel %vm1220, 1, 0
        %v1237 = vsel %vm1221, 1, 0
        %v1238 = vsel %vm1222, 1, 0
        %v1239 = vsel %vm1223, 1, 0
        %v1240 = vsel %vm1224, 1, 0
        %v1241 = vsel %vm1225, 1, 0
        %v1242 = vsel %vm1226, 1, 0
        %v1243 = vsel %vm1227, 1, 0
        %v1244 = vsel %vm1228, 1, 0
        %v1245 = vsel %vm1229, 1, 0
        %v1246 = vsel %vm1230, 1, 0
        %v1247 = vsel %vm1231, 1, 0
        %v1248 = vsel %vm1232, 1, 0
        %v1249 = vsel %vm1233, 1, 0
        %v1250 = vsel %vm1234, 1, 0
        %v1251 = vcvt.s32.f32 %v1235
        %v1252 = vcvt.s32.f32 %v1236
        %v1253 = vcvt.s32.f32 %v1237
        %v1254 = vcvt.s32.f32 %v1238
        %v1255 = vcvt.s32.f32 %v1239
        %v1256 = vcvt.s32.f32 %v1240
        %v1257 = vcvt.s32.f32 %v1241
        %v1258 = vcvt.s32.f32 %v1242
        %v1259 = vcvt.s32.f32 %v1243
        %v1260 = vcvt.s32.f32 %v1244
        %v1261 = vcvt.s32.f32 %v1245
        %v1262 = vcvt.s32.f32 %v1246
        %v1263 = vcvt.s32.f32 %v1247
        %v1264 = vcvt.s32.f32 %v1248
        %v1265 = vcvt.s32.f32 %v1249
        %v1266 = vcvt.s32.f32 %v1250
        %v1267 = vadd.f32 %v1155, %v1251
        %v1268 = vadd.f32 %v1156, %v1252
        %v1269 = vadd.f32 %v1157, %v1253
        %v1270 = vadd.f32 %v1158, %v1254
        %v1271 = vadd.f32 %v1159, %v1255
        %v1272 = vadd.f32 %v1160, %v1256
        %v1273 = vadd.f32 %v1161, %v1257
        %v1274 = vadd.f32 %v1162, %v1258
        %v1275 = vadd.f32 %v1163, %v1259
        %v1276 = vadd.f32 %v1164, %v1260
        %v1277 = vadd.f32 %v1165, %v1261
        %v1278 = vadd.f32 %v1166, %v1262
        %v1279 = vadd.f32 %v1167, %v1263
        %v1280 = vadd.f32 %v1168, %v1264
        %v1281 = vadd.f32 %v1169, %v1265
        %v1282 = vadd.f32 %v1170, %v1266
        %v1283 = vpack.c.bf16 %v1268, %v1267
        %v1284 = vpack.c.bf16 %v1270, %v1269
        %v1285 = vpack.c.bf16 %v1272, %v1271
        %v1286 = vpack.c.bf16 %v1274, %v1273
        %v1287 = vpack.c.bf16 %v1276, %v1275
        %v1288 = vpack.c.bf16 %v1278, %v1277
        %v1289 = vpack.c.bf16 %v1280, %v1279
        %v1290 = vpack.c.bf16 %v1282, %v1281
        %1291 = vset.pattern.permute.xlu0 4
        %1292 = vperm.xlu0 %1291, %v817
        %v1293 = vpop.permute.xlu0 %1292
        %1294 = vset.pattern.permute.xlu0 4
        %1295 = vperm.xlu0 %1294, %v818
        %v1296 = vpop.permute.xlu0 %1295
        %1297 = vset.pattern.permute.xlu0 4
        %1298 = vperm.xlu0 %1297, %v819
        %v1299 = vpop.permute.xlu0 %1298
        %1300 = vset.pattern.permute.xlu0 4
        %1301 = vperm.xlu0 %1300, %v820
        %v1302 = vpop.permute.xlu0 %1301
        %1303 = vset.pattern.permute.xlu0 4
        %1304 = vperm.xlu0 %1303, %v821
        %v1305 = vpop.permute.xlu0 %1304
        %1306 = vset.pattern.permute.xlu0 4
        %1307 = vperm.xlu0 %1306, %v822
        %v1308 = vpop.permute.xlu0 %1307
        %1309 = vset.pattern.permute.xlu0 4
        %1310 = vperm.xlu0 %1309, %v823
        %v1311 = vpop.permute.xlu0 %1310
        %1312 = vset.pattern.permute.xlu0 4
        %1313 = vperm.xlu0 %1312, %v824
        %v1314 = vpop.permute.xlu0 %1313
        %1315 = vset.pattern.permute.xlu0 4
        %1316 = vperm.xlu0 %1315, %v825
        %v1317 = vpop.permute.xlu0 %1316
        %1318 = vset.pattern.permute.xlu0 4
        %1319 = vperm.xlu0 %1318, %v826
        %v1320 = vpop.permute.xlu0 %1319
        %1321 = vset.pattern.permute.xlu0 4
        %1322 = vperm.xlu0 %1321, %v827
        %v1323 = vpop.permute.xlu0 %1322
        %1324 = vset.pattern.permute.xlu0 4
        %1325 = vperm.xlu0 %1324, %v828
        %v1326 = vpop.permute.xlu0 %1325
        %1327 = vset.pattern.permute.xlu0 4
        %1328 = vperm.xlu0 %1327, %v829
        %v1329 = vpop.permute.xlu0 %1328
        %1330 = vset.pattern.permute.xlu0 4
        %1331 = vperm.xlu0 %1330, %v830
        %v1332 = vpop.permute.xlu0 %1331
        %1333 = vset.pattern.permute.xlu0 4
        %1334 = vperm.xlu0 %1333, %v831
        %v1335 = vpop.permute.xlu0 %1334
        %1336 = vset.pattern.permute.xlu0 4
        %1337 = vperm.xlu0 %1336, %v832
        %v1338 = vpop.permute.xlu0 %1337
        %vm1339 = vcmp.eq.s32.totalorder %v1293, %v834
        %vm1340 = vcmp.eq.s32.totalorder %v1296, %v834
        %vm1341 = vcmp.eq.s32.totalorder %v1299, %v834
        %vm1342 = vcmp.eq.s32.totalorder %v1302, %v834
        %vm1343 = vcmp.eq.s32.totalorder %v1305, %v834
        %vm1344 = vcmp.eq.s32.totalorder %v1308, %v834
        %vm1345 = vcmp.eq.s32.totalorder %v1311, %v834
        %vm1346 = vcmp.eq.s32.totalorder %v1314, %v834
        %vm1347 = vcmp.eq.s32.totalorder %v1317, %v834
        %vm1348 = vcmp.eq.s32.totalorder %v1320, %v834
        %vm1349 = vcmp.eq.s32.totalorder %v1323, %v834
        %vm1350 = vcmp.eq.s32.totalorder %v1326, %v834
        %vm1351 = vcmp.eq.s32.totalorder %v1329, %v834
        %vm1352 = vcmp.eq.s32.totalorder %v1332, %v834
        %vm1353 = vcmp.eq.s32.totalorder %v1335, %v834
        %vm1354 = vcmp.eq.s32.totalorder %v1338, %v834
        %v1355 = vsel %vm1339, 1, 0
        %v1356 = vsel %vm1340, 1, 0
        %v1357 = vsel %vm1341, 1, 0
        %v1358 = vsel %vm1342, 1, 0
        %v1359 = vsel %vm1343, 1, 0
        %v1360 = vsel %vm1344, 1, 0
        %v1361 = vsel %vm1345, 1, 0
        %v1362 = vsel %vm1346, 1, 0
        %v1363 = vsel %vm1347, 1, 0
        %v1364 = vsel %vm1348, 1, 0
        %v1365 = vsel %vm1349, 1, 0
        %v1366 = vsel %vm1350, 1, 0
        %v1367 = vsel %vm1351, 1, 0
        %v1368 = vsel %vm1352, 1, 0
        %v1369 = vsel %vm1353, 1, 0
        %v1370 = vsel %vm1354, 1, 0
        %v1371 = vcvt.s32.f32 %v1355
        %v1372 = vcvt.s32.f32 %v1356
        %v1373 = vcvt.s32.f32 %v1357
        %v1374 = vcvt.s32.f32 %v1358
        %v1375 = vcvt.s32.f32 %v1359
        %v1376 = vcvt.s32.f32 %v1360
        %v1377 = vcvt.s32.f32 %v1361
        %v1378 = vcvt.s32.f32 %v1362
        %v1379 = vcvt.s32.f32 %v1363
        %v1380 = vcvt.s32.f32 %v1364
        %v1381 = vcvt.s32.f32 %v1365
        %v1382 = vcvt.s32.f32 %v1366
        %v1383 = vcvt.s32.f32 %v1367
        %v1384 = vcvt.s32.f32 %v1368
        %v1385 = vcvt.s32.f32 %v1369
        %v1386 = vcvt.s32.f32 %v1370
        %v1387 = vadd.f32 %v1371, 0.0
        %v1388 = vadd.f32 %v1372, 0.0
        %v1389 = vadd.f32 %v1373, 0.0
        %v1390 = vadd.f32 %v1374, 0.0
        %v1391 = vadd.f32 %v1375, 0.0
        %v1392 = vadd.f32 %v1376, 0.0
        %v1393 = vadd.f32 %v1377, 0.0
        %v1394 = vadd.f32 %v1378, 0.0
        %v1395 = vadd.f32 %v1379, 0.0
        %v1396 = vadd.f32 %v1380, 0.0
        %v1397 = vadd.f32 %v1381, 0.0
        %v1398 = vadd.f32 %v1382, 0.0
        %v1399 = vadd.f32 %v1383, 0.0
        %v1400 = vadd.f32 %v1384, 0.0
        %v1401 = vadd.f32 %v1385, 0.0
        %v1402 = vadd.f32 %v1386, 0.0
        %1403 = vset.pattern.permute.xlu0 5
        %1404 = vperm.xlu0 %1403, %v817
        %v1405 = vpop.permute.xlu0 %1404
        %1406 = vset.pattern.permute.xlu0 5
        %1407 = vperm.xlu0 %1406, %v818
        %v1408 = vpop.permute.xlu0 %1407
        %1409 = vset.pattern.permute.xlu0 5
        %1410 = vperm.xlu0 %1409, %v819
        %v1411 = vpop.permute.xlu0 %1410
        %1412 = vset.pattern.permute.xlu0 5
        %1413 = vperm.xlu0 %1412, %v820
        %v1414 = vpop.permute.xlu0 %1413
        %1415 = vset.pattern.permute.xlu0 5
        %1416 = vperm.xlu0 %1415, %v821
        %v1417 = vpop.permute.xlu0 %1416
        %1418 = vset.pattern.permute.xlu0 5
        %1419 = vperm.xlu0 %1418, %v822
        %v1420 = vpop.permute.xlu0 %1419
        %1421 = vset.pattern.permute.xlu0 5
        %1422 = vperm.xlu0 %1421, %v823
        %v1423 = vpop.permute.xlu0 %1422
        %1424 = vset.pattern.permute.xlu0 5
        %1425 = vperm.xlu0 %1424, %v824
        %v1426 = vpop.permute.xlu0 %1425
        %1427 = vset.pattern.permute.xlu0 5
        %1428 = vperm.xlu0 %1427, %v825
        %v1429 = vpop.permute.xlu0 %1428
        %1430 = vset.pattern.permute.xlu0 5
        %1431 = vperm.xlu0 %1430, %v826
        %v1432 = vpop.permute.xlu0 %1431
        %1433 = vset.pattern.permute.xlu0 5
        %1434 = vperm.xlu0 %1433, %v827
        %v1435 = vpop.permute.xlu0 %1434
        %1436 = vset.pattern.permute.xlu0 5
        %1437 = vperm.xlu0 %1436, %v828
        %v1438 = vpop.permute.xlu0 %1437
        %1439 = vset.pattern.permute.xlu0 5
        %1440 = vperm.xlu0 %1439, %v829
        %v1441 = vpop.permute.xlu0 %1440
        %1442 = vset.pattern.permute.xlu0 5
        %1443 = vperm.xlu0 %1442, %v830
        %v1444 = vpop.permute.xlu0 %1443
        %1445 = vset.pattern.permute.xlu0 5
        %1446 = vperm.xlu0 %1445, %v831
        %v1447 = vpop.permute.xlu0 %1446
        %1448 = vset.pattern.permute.xlu0 5
        %1449 = vperm.xlu0 %1448, %v832
        %v1450 = vpop.permute.xlu0 %1449
        %vm1451 = vcmp.eq.s32.totalorder %v1405, %v834
        %vm1452 = vcmp.eq.s32.totalorder %v1408, %v834
        %vm1453 = vcmp.eq.s32.totalorder %v1411, %v834
        %vm1454 = vcmp.eq.s32.totalorder %v1414, %v834
        %vm1455 = vcmp.eq.s32.totalorder %v1417, %v834
        %vm1456 = vcmp.eq.s32.totalorder %v1420, %v834
        %vm1457 = vcmp.eq.s32.totalorder %v1423, %v834
        %vm1458 = vcmp.eq.s32.totalorder %v1426, %v834
        %vm1459 = vcmp.eq.s32.totalorder %v1429, %v834
        %vm1460 = vcmp.eq.s32.totalorder %v1432, %v834
        %vm1461 = vcmp.eq.s32.totalorder %v1435, %v834
        %vm1462 = vcmp.eq.s32.totalorder %v1438, %v834
        %vm1463 = vcmp.eq.s32.totalorder %v1441, %v834
        %vm1464 = vcmp.eq.s32.totalorder %v1444, %v834
        %vm1465 = vcmp.eq.s32.totalorder %v1447, %v834
        %vm1466 = vcmp.eq.s32.totalorder %v1450, %v834
        %v1467 = vsel %vm1451, 1, 0
        %v1468 = vsel %vm1452, 1, 0
        %v1469 = vsel %vm1453, 1, 0
        %v1470 = vsel %vm1454, 1, 0
        %v1471 = vsel %vm1455, 1, 0
        %v1472 = vsel %vm1456, 1, 0
        %v1473 = vsel %vm1457, 1, 0
        %v1474 = vsel %vm1458, 1, 0
        %v1475 = vsel %vm1459, 1, 0
        %v1476 = vsel %vm1460, 1, 0
        %v1477 = vsel %vm1461, 1, 0
        %v1478 = vsel %vm1462, 1, 0
        %v1479 = vsel %vm1463, 1, 0
        %v1480 = vsel %vm1464, 1, 0
        %v1481 = vsel %vm1465, 1, 0
        %v1482 = vsel %vm1466, 1, 0
        %v1483 = vcvt.s32.f32 %v1467
        %v1484 = vcvt.s32.f32 %v1468
        %v1485 = vcvt.s32.f32 %v1469
        %v1486 = vcvt.s32.f32 %v1470
        %v1487 = vcvt.s32.f32 %v1471
        %v1488 = vcvt.s32.f32 %v1472
        %v1489 = vcvt.s32.f32 %v1473
        %v1490 = vcvt.s32.f32 %v1474
        %v1491 = vcvt.s32.f32 %v1475
        %v1492 = vcvt.s32.f32 %v1476
        %v1493 = vcvt.s32.f32 %v1477
        %v1494 = vcvt.s32.f32 %v1478
        %v1495 = vcvt.s32.f32 %v1479
        %v1496 = vcvt.s32.f32 %v1480
        %v1497 = vcvt.s32.f32 %v1481
        %v1498 = vcvt.s32.f32 %v1482
        %v1499 = vadd.f32 %v1387, %v1483
        %v1500 = vadd.f32 %v1388, %v1484
        %v1501 = vadd.f32 %v1389, %v1485
        %v1502 = vadd.f32 %v1390, %v1486
        %v1503 = vadd.f32 %v1391, %v1487
        %v1504 = vadd.f32 %v1392, %v1488
        %v1505 = vadd.f32 %v1393, %v1489
        %v1506 = vadd.f32 %v1394, %v1490
        %v1507 = vadd.f32 %v1395, %v1491
        %v1508 = vadd.f32 %v1396, %v1492
        %v1509 = vadd.f32 %v1397, %v1493
        %v1510 = vadd.f32 %v1398, %v1494
        %v1511 = vadd.f32 %v1399, %v1495
        %v1512 = vadd.f32 %v1400, %v1496
        %v1513 = vadd.f32 %v1401, %v1497
        %v1514 = vadd.f32 %v1402, %v1498
        %1515 = vset.pattern.permute.xlu0 6
        %1516 = vperm.xlu0 %1515, %v817
        %v1517 = vpop.permute.xlu0 %1516
        %1518 = vset.pattern.permute.xlu0 6
        %1519 = vperm.xlu0 %1518, %v818
        %v1520 = vpop.permute.xlu0 %1519
        %1521 = vset.pattern.permute.xlu0 6
        %1522 = vperm.xlu0 %1521, %v819
        %v1523 = vpop.permute.xlu0 %1522
        %1524 = vset.pattern.permute.xlu0 6
        %1525 = vperm.xlu0 %1524, %v820
        %v1526 = vpop.permute.xlu0 %1525
        %1527 = vset.pattern.permute.xlu0 6
        %1528 = vperm.xlu0 %1527, %v821
        %v1529 = vpop.permute.xlu0 %1528
        %1530 = vset.pattern.permute.xlu0 6
        %1531 = vperm.xlu0 %1530, %v822
        %v1532 = vpop.permute.xlu0 %1531
        %1533 = vset.pattern.permute.xlu0 6
        %1534 = vperm.xlu0 %1533, %v823
        %v1535 = vpop.permute.xlu0 %1534
        %1536 = vset.pattern.permute.xlu0 6
        %1537 = vperm.xlu0 %1536, %v824
        %v1538 = vpop.permute.xlu0 %1537
        %1539 = vset.pattern.permute.xlu0 6
        %1540 = vperm.xlu0 %1539, %v825
        %v1541 = vpop.permute.xlu0 %1540
        %1542 = vset.pattern.permute.xlu0 6
        %1543 = vperm.xlu0 %1542, %v826
        %v1544 = vpop.permute.xlu0 %1543
        %1545 = vset.pattern.permute.xlu0 6
        %1546 = vperm.xlu0 %1545, %v827
        %v1547 = vpop.permute.xlu0 %1546
        %1548 = vset.pattern.permute.xlu0 6
        %1549 = vperm.xlu0 %1548, %v828
        %v1550 = vpop.permute.xlu0 %1549
        %1551 = vset.pattern.permute.xlu0 6
        %1552 = vperm.xlu0 %1551, %v829
        %v1553 = vpop.permute.xlu0 %1552
        %1554 = vset.pattern.permute.xlu0 6
        %1555 = vperm.xlu0 %1554, %v830
        %v1556 = vpop.permute.xlu0 %1555
        %1557 = vset.pattern.permute.xlu0 6
        %1558 = vperm.xlu0 %1557, %v831
        %v1559 = vpop.permute.xlu0 %1558
        %1560 = vset.pattern.permute.xlu0 6
        %1561 = vperm.xlu0 %1560, %v832
        %v1562 = vpop.permute.xlu0 %1561
        %vm1563 = vcmp.eq.s32.totalorder %v1517, %v834
        %vm1564 = vcmp.eq.s32.totalorder %v1520, %v834
        %vm1565 = vcmp.eq.s32.totalorder %v1523, %v834
        %vm1566 = vcmp.eq.s32.totalorder %v1526, %v834
        %vm1567 = vcmp.eq.s32.totalorder %v1529, %v834
        %vm1568 = vcmp.eq.s32.totalorder %v1532, %v834
        %vm1569 = vcmp.eq.s32.totalorder %v1535, %v834
        %vm1570 = vcmp.eq.s32.totalorder %v1538, %v834
        %vm1571 = vcmp.eq.s32.totalorder %v1541, %v834
        %vm1572 = vcmp.eq.s32.totalorder %v1544, %v834
        %vm1573 = vcmp.eq.s32.totalorder %v1547, %v834
        %vm1574 = vcmp.eq.s32.totalorder %v1550, %v834
        %vm1575 = vcmp.eq.s32.totalorder %v1553, %v834
        %vm1576 = vcmp.eq.s32.totalorder %v1556, %v834
        %vm1577 = vcmp.eq.s32.totalorder %v1559, %v834
        %vm1578 = vcmp.eq.s32.totalorder %v1562, %v834
        %v1579 = vsel %vm1563, 1, 0
        %v1580 = vsel %vm1564, 1, 0
        %v1581 = vsel %vm1565, 1, 0
        %v1582 = vsel %vm1566, 1, 0
        %v1583 = vsel %vm1567, 1, 0
        %v1584 = vsel %vm1568, 1, 0
        %v1585 = vsel %vm1569, 1, 0
        %v1586 = vsel %vm1570, 1, 0
        %v1587 = vsel %vm1571, 1, 0
        %v1588 = vsel %vm1572, 1, 0
        %v1589 = vsel %vm1573, 1, 0
        %v1590 = vsel %vm1574, 1, 0
        %v1591 = vsel %vm1575, 1, 0
        %v1592 = vsel %vm1576, 1, 0
        %v1593 = vsel %vm1577, 1, 0
        %v1594 = vsel %vm1578, 1, 0
        %v1595 = vcvt.s32.f32 %v1579
        %v1596 = vcvt.s32.f32 %v1580
        %v1597 = vcvt.s32.f32 %v1581
        %v1598 = vcvt.s32.f32 %v1582
        %v1599 = vcvt.s32.f32 %v1583
        %v1600 = vcvt.s32.f32 %v1584
        %v1601 = vcvt.s32.f32 %v1585
        %v1602 = vcvt.s32.f32 %v1586
        %v1603 = vcvt.s32.f32 %v1587
        %v1604 = vcvt.s32.f32 %v1588
        %v1605 = vcvt.s32.f32 %v1589
        %v1606 = vcvt.s32.f32 %v1590
        %v1607 = vcvt.s32.f32 %v1591
        %v1608 = vcvt.s32.f32 %v1592
        %v1609 = vcvt.s32.f32 %v1593
        %v1610 = vcvt.s32.f32 %v1594
        %v1611 = vadd.f32 %v1499, %v1595
        %v1612 = vadd.f32 %v1500, %v1596
        %v1613 = vadd.f32 %v1501, %v1597
        %v1614 = vadd.f32 %v1502, %v1598
        %v1615 = vadd.f32 %v1503, %v1599
        %v1616 = vadd.f32 %v1504, %v1600
        %v1617 = vadd.f32 %v1505, %v1601
        %v1618 = vadd.f32 %v1506, %v1602
        %v1619 = vadd.f32 %v1507, %v1603
        %v1620 = vadd.f32 %v1508, %v1604
        %v1621 = vadd.f32 %v1509, %v1605
        %v1622 = vadd.f32 %v1510, %v1606
        %v1623 = vadd.f32 %v1511, %v1607
        %v1624 = vadd.f32 %v1512, %v1608
        %v1625 = vadd.f32 %v1513, %v1609
        %v1626 = vadd.f32 %v1514, %v1610
        %1627 = vset.pattern.permute.xlu0 7
        %1628 = vperm.xlu0 %1627, %v817
        %v1629 = vpop.permute.xlu0 %1628
        %1630 = vset.pattern.permute.xlu0 7
        %1631 = vperm.xlu0 %1630, %v818
        %v1632 = vpop.permute.xlu0 %1631
        %1633 = vset.pattern.permute.xlu0 7
        %1634 = vperm.xlu0 %1633, %v819
        %v1635 = vpop.permute.xlu0 %1634
        %1636 = vset.pattern.permute.xlu0 7
        %1637 = vperm.xlu0 %1636, %v820
        %v1638 = vpop.permute.xlu0 %1637
        %1639 = vset.pattern.permute.xlu0 7
        %1640 = vperm.xlu0 %1639, %v821
        %v1641 = vpop.permute.xlu0 %1640
        %1642 = vset.pattern.permute.xlu0 7
        %1643 = vperm.xlu0 %1642, %v822
        %v1644 = vpop.permute.xlu0 %1643
        %1645 = vset.pattern.permute.xlu0 7
        %1646 = vperm.xlu0 %1645, %v823
        %v1647 = vpop.permute.xlu0 %1646
        %1648 = vset.pattern.permute.xlu0 7
        %1649 = vperm.xlu0 %1648, %v824
        %v1650 = vpop.permute.xlu0 %1649
        %1651 = vset.pattern.permute.xlu0 7
        %1652 = vperm.xlu0 %1651, %v825
        %v1653 = vpop.permute.xlu0 %1652
        %1654 = vset.pattern.permute.xlu0 7
        %1655 = vperm.xlu0 %1654, %v826
        %v1656 = vpop.permute.xlu0 %1655
        %1657 = vset.pattern.permute.xlu0 7
        %1658 = vperm.xlu0 %1657, %v827
        %v1659 = vpop.permute.xlu0 %1658
        %1660 = vset.pattern.permute.xlu0 7
        %1661 = vperm.xlu0 %1660, %v828
        %v1662 = vpop.permute.xlu0 %1661
        %1663 = vset.pattern.permute.xlu0 7
        %1664 = vperm.xlu0 %1663, %v829
        %v1665 = vpop.permute.xlu0 %1664
        %1666 = vset.pattern.permute.xlu0 7
        %1667 = vperm.xlu0 %1666, %v830
        %v1668 = vpop.permute.xlu0 %1667
        %1669 = vset.pattern.permute.xlu0 7
        %1670 = vperm.xlu0 %1669, %v831
        %v1671 = vpop.permute.xlu0 %1670
        %1672 = vset.pattern.permute.xlu0 7
        %1673 = vperm.xlu0 %1672, %v832
        %v1674 = vpop.permute.xlu0 %1673
        %vm1675 = vcmp.eq.s32.totalorder %v1629, %v834
        %vm1676 = vcmp.eq.s32.totalorder %v1632, %v834
        %vm1677 = vcmp.eq.s32.totalorder %v1635, %v834
        %vm1678 = vcmp.eq.s32.totalorder %v1638, %v834
        %vm1679 = vcmp.eq.s32.totalorder %v1641, %v834
        %vm1680 = vcmp.eq.s32.totalorder %v1644, %v834
        %vm1681 = vcmp.eq.s32.totalorder %v1647, %v834
        %vm1682 = vcmp.eq.s32.totalorder %v1650, %v834
        %vm1683 = vcmp.eq.s32.totalorder %v1653, %v834
        %vm1684 = vcmp.eq.s32.totalorder %v1656, %v834
        %vm1685 = vcmp.eq.s32.totalorder %v1659, %v834
        %vm1686 = vcmp.eq.s32.totalorder %v1662, %v834
        %vm1687 = vcmp.eq.s32.totalorder %v1665, %v834
        %vm1688 = vcmp.eq.s32.totalorder %v1668, %v834
        %vm1689 = vcmp.eq.s32.totalorder %v1671, %v834
        %vm1690 = vcmp.eq.s32.totalorder %v1674, %v834
        %v1691 = vsel %vm1675, 1, 0
        %v1692 = vsel %vm1676, 1, 0
        %v1693 = vsel %vm1677, 1, 0
        %v1694 = vsel %vm1678, 1, 0
        %v1695 = vsel %vm1679, 1, 0
        %v1696 = vsel %vm1680, 1, 0
        %v1697 = vsel %vm1681, 1, 0
        %v1698 = vsel %vm1682, 1, 0
        %v1699 = vsel %vm1683, 1, 0
        %v1700 = vsel %vm1684, 1, 0
        %v1701 = vsel %vm1685, 1, 0
        %v1702 = vsel %vm1686, 1, 0
        %v1703 = vsel %vm1687, 1, 0
        %v1704 = vsel %vm1688, 1, 0
        %v1705 = vsel %vm1689, 1, 0
        %v1706 = vsel %vm1690, 1, 0
        %v1707 = vcvt.s32.f32 %v1691
        %v1708 = vcvt.s32.f32 %v1692
        %v1709 = vcvt.s32.f32 %v1693
        %v1710 = vcvt.s32.f32 %v1694
        %v1711 = vcvt.s32.f32 %v1695
        %v1712 = vcvt.s32.f32 %v1696
        %v1713 = vcvt.s32.f32 %v1697
        %v1714 = vcvt.s32.f32 %v1698
        %v1715 = vcvt.s32.f32 %v1699
        %v1716 = vcvt.s32.f32 %v1700
        %v1717 = vcvt.s32.f32 %v1701
        %v1718 = vcvt.s32.f32 %v1702
        %v1719 = vcvt.s32.f32 %v1703
        %v1720 = vcvt.s32.f32 %v1704
        %v1721 = vcvt.s32.f32 %v1705
        %v1722 = vcvt.s32.f32 %v1706
        %v1723 = vadd.f32 %v1611, %v1707
        %v1724 = vadd.f32 %v1612, %v1708
        %v1725 = vadd.f32 %v1613, %v1709
        %v1726 = vadd.f32 %v1614, %v1710
        %v1727 = vadd.f32 %v1615, %v1711
        %v1728 = vadd.f32 %v1616, %v1712
        %v1729 = vadd.f32 %v1617, %v1713
        %v1730 = vadd.f32 %v1618, %v1714
        %v1731 = vadd.f32 %v1619, %v1715
        %v1732 = vadd.f32 %v1620, %v1716
        %v1733 = vadd.f32 %v1621, %v1717
        %v1734 = vadd.f32 %v1622, %v1718
        %v1735 = vadd.f32 %v1623, %v1719
        %v1736 = vadd.f32 %v1624, %v1720
        %v1737 = vadd.f32 %v1625, %v1721
        %v1738 = vadd.f32 %v1626, %v1722
        %v1739 = vpack.c.bf16 %v1724, %v1723
        %v1740 = vpack.c.bf16 %v1726, %v1725
        %v1741 = vpack.c.bf16 %v1728, %v1727
        %v1742 = vpack.c.bf16 %v1730, %v1729
        %v1743 = vpack.c.bf16 %v1732, %v1731
        %v1744 = vpack.c.bf16 %v1734, %v1733
        %v1745 = vpack.c.bf16 %v1736, %v1735
        %v1746 = vpack.c.bf16 %v1738, %v1737
        %1747 = vset.pattern.permute.xlu0 8
        %1748 = vperm.xlu0 %1747, %v817
        %v1749 = vpop.permute.xlu0 %1748
        %1750 = vset.pattern.permute.xlu0 8
        %1751 = vperm.xlu0 %1750, %v818
        %v1752 = vpop.permute.xlu0 %1751
        %1753 = vset.pattern.permute.xlu0 8
        %1754 = vperm.xlu0 %1753, %v819
        %v1755 = vpop.permute.xlu0 %1754
        %1756 = vset.pattern.permute.xlu0 8
        %1757 = vperm.xlu0 %1756, %v820
        %v1758 = vpop.permute.xlu0 %1757
        %1759 = vset.pattern.permute.xlu0 8
        %1760 = vperm.xlu0 %1759, %v821
        %v1761 = vpop.permute.xlu0 %1760
        %1762 = vset.pattern.permute.xlu0 8
        %1763 = vperm.xlu0 %1762, %v822
        %v1764 = vpop.permute.xlu0 %1763
        %1765 = vset.pattern.permute.xlu0 8
        %1766 = vperm.xlu0 %1765, %v823
        %v1767 = vpop.permute.xlu0 %1766
        %1768 = vset.pattern.permute.xlu0 8
        %1769 = vperm.xlu0 %1768, %v824
        %v1770 = vpop.permute.xlu0 %1769
        %1771 = vset.pattern.permute.xlu0 8
        %1772 = vperm.xlu0 %1771, %v825
        %v1773 = vpop.permute.xlu0 %1772
        %1774 = vset.pattern.permute.xlu0 8
        %1775 = vperm.xlu0 %1774, %v826
        %v1776 = vpop.permute.xlu0 %1775
        %1777 = vset.pattern.permute.xlu0 8
        %1778 = vperm.xlu0 %1777, %v827
        %v1779 = vpop.permute.xlu0 %1778
        %1780 = vset.pattern.permute.xlu0 8
        %1781 = vperm.xlu0 %1780, %v828
        %v1782 = vpop.permute.xlu0 %1781
        %1783 = vset.pattern.permute.xlu0 8
        %1784 = vperm.xlu0 %1783, %v829
        %v1785 = vpop.permute.xlu0 %1784
        %1786 = vset.pattern.permute.xlu0 8
        %1787 = vperm.xlu0 %1786, %v830
        %v1788 = vpop.permute.xlu0 %1787
        %1789 = vset.pattern.permute.xlu0 8
        %1790 = vperm.xlu0 %1789, %v831
        %v1791 = vpop.permute.xlu0 %1790
        %1792 = vset.pattern.permute.xlu0 8
        %1793 = vperm.xlu0 %1792, %v832
        %v1794 = vpop.permute.xlu0 %1793
        %vm1795 = vcmp.eq.s32.totalorder %v1749, %v834
        %vm1796 = vcmp.eq.s32.totalorder %v1752, %v834
        %vm1797 = vcmp.eq.s32.totalorder %v1755, %v834
        %vm1798 = vcmp.eq.s32.totalorder %v1758, %v834
        %vm1799 = vcmp.eq.s32.totalorder %v1761, %v834
        %vm1800 = vcmp.eq.s32.totalorder %v1764, %v834
        %vm1801 = vcmp.eq.s32.totalorder %v1767, %v834
        %vm1802 = vcmp.eq.s32.totalorder %v1770, %v834
        %vm1803 = vcmp.eq.s32.totalorder %v1773, %v834
        %vm1804 = vcmp.eq.s32.totalorder %v1776, %v834
        %vm1805 = vcmp.eq.s32.totalorder %v1779, %v834
        %vm1806 = vcmp.eq.s32.totalorder %v1782, %v834
        %vm1807 = vcmp.eq.s32.totalorder %v1785, %v834
        %vm1808 = vcmp.eq.s32.totalorder %v1788, %v834
        %vm1809 = vcmp.eq.s32.totalorder %v1791, %v834
        %vm1810 = vcmp.eq.s32.totalorder %v1794, %v834
        %v1811 = vsel %vm1795, 1, 0
        %v1812 = vsel %vm1796, 1, 0
        %v1813 = vsel %vm1797, 1, 0
        %v1814 = vsel %vm1798, 1, 0
        %v1815 = vsel %vm1799, 1, 0
        %v1816 = vsel %vm1800, 1, 0
        %v1817 = vsel %vm1801, 1, 0
        %v1818 = vsel %vm1802, 1, 0
        %v1819 = vsel %vm1803, 1, 0
        %v1820 = vsel %vm1804, 1, 0
        %v1821 = vsel %vm1805, 1, 0
        %v1822 = vsel %vm1806, 1, 0
        %v1823 = vsel %vm1807, 1, 0
        %v1824 = vsel %vm1808, 1, 0
        %v1825 = vsel %vm1809, 1, 0
        %v1826 = vsel %vm1810, 1, 0
        %v1827 = vcvt.s32.f32 %v1811
        %v1828 = vcvt.s32.f32 %v1812
        %v1829 = vcvt.s32.f32 %v1813
        %v1830 = vcvt.s32.f32 %v1814
        %v1831 = vcvt.s32.f32 %v1815
        %v1832 = vcvt.s32.f32 %v1816
        %v1833 = vcvt.s32.f32 %v1817
        %v1834 = vcvt.s32.f32 %v1818
        %v1835 = vcvt.s32.f32 %v1819
        %v1836 = vcvt.s32.f32 %v1820
        %v1837 = vcvt.s32.f32 %v1821
        %v1838 = vcvt.s32.f32 %v1822
        %v1839 = vcvt.s32.f32 %v1823
        %v1840 = vcvt.s32.f32 %v1824
        %v1841 = vcvt.s32.f32 %v1825
        %v1842 = vcvt.s32.f32 %v1826
        %v1843 = vadd.f32 %v1827, 0.0
        %v1844 = vadd.f32 %v1828, 0.0
        %v1845 = vadd.f32 %v1829, 0.0
        %v1846 = vadd.f32 %v1830, 0.0
        %v1847 = vadd.f32 %v1831, 0.0
        %v1848 = vadd.f32 %v1832, 0.0
        %v1849 = vadd.f32 %v1833, 0.0
        %v1850 = vadd.f32 %v1834, 0.0
        %v1851 = vadd.f32 %v1835, 0.0
        %v1852 = vadd.f32 %v1836, 0.0
        %v1853 = vadd.f32 %v1837, 0.0
        %v1854 = vadd.f32 %v1838, 0.0
        %v1855 = vadd.f32 %v1839, 0.0
        %v1856 = vadd.f32 %v1840, 0.0
        %v1857 = vadd.f32 %v1841, 0.0
        %v1858 = vadd.f32 %v1842, 0.0
        %1859 = vset.pattern.permute.xlu0 9
        %1860 = vperm.xlu0 %1859, %v817
        %v1861 = vpop.permute.xlu0 %1860
        %1862 = vset.pattern.permute.xlu0 9
        %1863 = vperm.xlu0 %1862, %v818
        %v1864 = vpop.permute.xlu0 %1863
        %1865 = vset.pattern.permute.xlu0 9
        %1866 = vperm.xlu0 %1865, %v819
        %v1867 = vpop.permute.xlu0 %1866
        %1868 = vset.pattern.permute.xlu0 9
        %1869 = vperm.xlu0 %1868, %v820
        %v1870 = vpop.permute.xlu0 %1869
        %1871 = vset.pattern.permute.xlu0 9
        %1872 = vperm.xlu0 %1871, %v821
        %v1873 = vpop.permute.xlu0 %1872
        %1874 = vset.pattern.permute.xlu0 9
        %1875 = vperm.xlu0 %1874, %v822
        %v1876 = vpop.permute.xlu0 %1875
        %1877 = vset.pattern.permute.xlu0 9
        %1878 = vperm.xlu0 %1877, %v823
        %v1879 = vpop.permute.xlu0 %1878
        %1880 = vset.pattern.permute.xlu0 9
        %1881 = vperm.xlu0 %1880, %v824
        %v1882 = vpop.permute.xlu0 %1881
        %1883 = vset.pattern.permute.xlu0 9
        %1884 = vperm.xlu0 %1883, %v825
        %v1885 = vpop.permute.xlu0 %1884
        %1886 = vset.pattern.permute.xlu0 9
        %1887 = vperm.xlu0 %1886, %v826
        %v1888 = vpop.permute.xlu0 %1887
        %1889 = vset.pattern.permute.xlu0 9
        %1890 = vperm.xlu0 %1889, %v827
        %v1891 = vpop.permute.xlu0 %1890
        %1892 = vset.pattern.permute.xlu0 9
        %1893 = vperm.xlu0 %1892, %v828
        %v1894 = vpop.permute.xlu0 %1893
        %1895 = vset.pattern.permute.xlu0 9
        %1896 = vperm.xlu0 %1895, %v829
        %v1897 = vpop.permute.xlu0 %1896
        %1898 = vset.pattern.permute.xlu0 9
        %1899 = vperm.xlu0 %1898, %v830
        %v1900 = vpop.permute.xlu0 %1899
        %1901 = vset.pattern.permute.xlu0 9
        %1902 = vperm.xlu0 %1901, %v831
        %v1903 = vpop.permute.xlu0 %1902
        %1904 = vset.pattern.permute.xlu0 9
        %1905 = vperm.xlu0 %1904, %v832
        %v1906 = vpop.permute.xlu0 %1905
        %vm1907 = vcmp.eq.s32.totalorder %v1861, %v834
        %vm1908 = vcmp.eq.s32.totalorder %v1864, %v834
        %vm1909 = vcmp.eq.s32.totalorder %v1867, %v834
        %vm1910 = vcmp.eq.s32.totalorder %v1870, %v834
        %vm1911 = vcmp.eq.s32.totalorder %v1873, %v834
        %vm1912 = vcmp.eq.s32.totalorder %v1876, %v834
        %vm1913 = vcmp.eq.s32.totalorder %v1879, %v834
        %vm1914 = vcmp.eq.s32.totalorder %v1882, %v834
        %vm1915 = vcmp.eq.s32.totalorder %v1885, %v834
        %vm1916 = vcmp.eq.s32.totalorder %v1888, %v834
        %vm1917 = vcmp.eq.s32.totalorder %v1891, %v834
        %vm1918 = vcmp.eq.s32.totalorder %v1894, %v834
        %vm1919 = vcmp.eq.s32.totalorder %v1897, %v834
        %vm1920 = vcmp.eq.s32.totalorder %v1900, %v834
        %vm1921 = vcmp.eq.s32.totalorder %v1903, %v834
        %vm1922 = vcmp.eq.s32.totalorder %v1906, %v834
        %v1923 = vsel %vm1907, 1, 0
        %v1924 = vsel %vm1908, 1, 0
        %v1925 = vsel %vm1909, 1, 0
        %v1926 = vsel %vm1910, 1, 0
        %v1927 = vsel %vm1911, 1, 0
        %v1928 = vsel %vm1912, 1, 0
        %v1929 = vsel %vm1913, 1, 0
        %v1930 = vsel %vm1914, 1, 0
        %v1931 = vsel %vm1915, 1, 0
        %v1932 = vsel %vm1916, 1, 0
        %v1933 = vsel %vm1917, 1, 0
        %v1934 = vsel %vm1918, 1, 0
        %v1935 = vsel %vm1919, 1, 0
        %v1936 = vsel %vm1920, 1, 0
        %v1937 = vsel %vm1921, 1, 0
        %v1938 = vsel %vm1922, 1, 0
        %v1939 = vcvt.s32.f32 %v1923
        %v1940 = vcvt.s32.f32 %v1924
        %v1941 = vcvt.s32.f32 %v1925
        %v1942 = vcvt.s32.f32 %v1926
        %v1943 = vcvt.s32.f32 %v1927
        %v1944 = vcvt.s32.f32 %v1928
        %v1945 = vcvt.s32.f32 %v1929
        %v1946 = vcvt.s32.f32 %v1930
        %v1947 = vcvt.s32.f32 %v1931
        %v1948 = vcvt.s32.f32 %v1932
        %v1949 = vcvt.s32.f32 %v1933
        %v1950 = vcvt.s32.f32 %v1934
        %v1951 = vcvt.s32.f32 %v1935
        %v1952 = vcvt.s32.f32 %v1936
        %v1953 = vcvt.s32.f32 %v1937
        %v1954 = vcvt.s32.f32 %v1938
        %v1955 = vadd.f32 %v1843, %v1939
        %v1956 = vadd.f32 %v1844, %v1940
        %v1957 = vadd.f32 %v1845, %v1941
        %v1958 = vadd.f32 %v1846, %v1942
        %v1959 = vadd.f32 %v1847, %v1943
        %v1960 = vadd.f32 %v1848, %v1944
        %v1961 = vadd.f32 %v1849, %v1945
        %v1962 = vadd.f32 %v1850, %v1946
        %v1963 = vadd.f32 %v1851, %v1947
        %v1964 = vadd.f32 %v1852, %v1948
        %v1965 = vadd.f32 %v1853, %v1949
        %v1966 = vadd.f32 %v1854, %v1950
        %v1967 = vadd.f32 %v1855, %v1951
        %v1968 = vadd.f32 %v1856, %v1952
        %v1969 = vadd.f32 %v1857, %v1953
        %v1970 = vadd.f32 %v1858, %v1954
        %1971 = vset.pattern.permute.xlu0 10
        %1972 = vperm.xlu0 %1971, %v817
        %v1973 = vpop.permute.xlu0 %1972
        %1974 = vset.pattern.permute.xlu0 10
        %1975 = vperm.xlu0 %1974, %v818
        %v1976 = vpop.permute.xlu0 %1975
        %1977 = vset.pattern.permute.xlu0 10
        %1978 = vperm.xlu0 %1977, %v819
        %v1979 = vpop.permute.xlu0 %1978
        %1980 = vset.pattern.permute.xlu0 10
        %1981 = vperm.xlu0 %1980, %v820
        %v1982 = vpop.permute.xlu0 %1981
        %1983 = vset.pattern.permute.xlu0 10
        %1984 = vperm.xlu0 %1983, %v821
        %v1985 = vpop.permute.xlu0 %1984
        %1986 = vset.pattern.permute.xlu0 10
        %1987 = vperm.xlu0 %1986, %v822
        %v1988 = vpop.permute.xlu0 %1987
        %1989 = vset.pattern.permute.xlu0 10
        %1990 = vperm.xlu0 %1989, %v823
        %v1991 = vpop.permute.xlu0 %1990
        %1992 = vset.pattern.permute.xlu0 10
        %1993 = vperm.xlu0 %1992, %v824
        %v1994 = vpop.permute.xlu0 %1993
        %1995 = vset.pattern.permute.xlu0 10
        %1996 = vperm.xlu0 %1995, %v825
        %v1997 = vpop.permute.xlu0 %1996
        %1998 = vset.pattern.permute.xlu0 10
        %1999 = vperm.xlu0 %1998, %v826
        %v2000 = vpop.permute.xlu0 %1999
        %2001 = vset.pattern.permute.xlu0 10
        %2002 = vperm.xlu0 %2001, %v827
        %v2003 = vpop.permute.xlu0 %2002
        %2004 = vset.pattern.permute.xlu0 10
        %2005 = vperm.xlu0 %2004, %v828
        %v2006 = vpop.permute.xlu0 %2005
        %2007 = vset.pattern.permute.xlu0 10
        %2008 = vperm.xlu0 %2007, %v829
        %v2009 = vpop.permute.xlu0 %2008
        %2010 = vset.pattern.permute.xlu0 10
        %2011 = vperm.xlu0 %2010, %v830
        %v2012 = vpop.permute.xlu0 %2011
        %2013 = vset.pattern.permute.xlu0 10
        %2014 = vperm.xlu0 %2013, %v831
        %v2015 = vpop.permute.xlu0 %2014
        %2016 = vset.pattern.permute.xlu0 10
        %2017 = vperm.xlu0 %2016, %v832
        %v2018 = vpop.permute.xlu0 %2017
        %vm2019 = vcmp.eq.s32.totalorder %v1973, %v834
        %vm2020 = vcmp.eq.s32.totalorder %v1976, %v834
        %vm2021 = vcmp.eq.s32.totalorder %v1979, %v834
        %vm2022 = vcmp.eq.s32.totalorder %v1982, %v834
        %vm2023 = vcmp.eq.s32.totalorder %v1985, %v834
        %vm2024 = vcmp.eq.s32.totalorder %v1988, %v834
        %vm2025 = vcmp.eq.s32.totalorder %v1991, %v834
        %vm2026 = vcmp.eq.s32.totalorder %v1994, %v834
        %vm2027 = vcmp.eq.s32.totalorder %v1997, %v834
        %vm2028 = vcmp.eq.s32.totalorder %v2000, %v834
        %vm2029 = vcmp.eq.s32.totalorder %v2003, %v834
        %vm2030 = vcmp.eq.s32.totalorder %v2006, %v834
        %vm2031 = vcmp.eq.s32.totalorder %v2009, %v834
        %vm2032 = vcmp.eq.s32.totalorder %v2012, %v834
        %vm2033 = vcmp.eq.s32.totalorder %v2015, %v834
        %vm2034 = vcmp.eq.s32.totalorder %v2018, %v834
        %v2035 = vsel %vm2019, 1, 0
        %v2036 = vsel %vm2020, 1, 0
        %v2037 = vsel %vm2021, 1, 0
        %v2038 = vsel %vm2022, 1, 0
        %v2039 = vsel %vm2023, 1, 0
        %v2040 = vsel %vm2024, 1, 0
        %v2041 = vsel %vm2025, 1, 0
        %v2042 = vsel %vm2026, 1, 0
        %v2043 = vsel %vm2027, 1, 0
        %v2044 = vsel %vm2028, 1, 0
        %v2045 = vsel %vm2029, 1, 0
        %v2046 = vsel %vm2030, 1, 0
        %v2047 = vsel %vm2031, 1, 0
        %v2048 = vsel %vm2032, 1, 0
        %v2049 = vsel %vm2033, 1, 0
        %v2050 = vsel %vm2034, 1, 0
        %v2051 = vcvt.s32.f32 %v2035
        %v2052 = vcvt.s32.f32 %v2036
        %v2053 = vcvt.s32.f32 %v2037
        %v2054 = vcvt.s32.f32 %v2038
        %v2055 = vcvt.s32.f32 %v2039
        %v2056 = vcvt.s32.f32 %v2040
        %v2057 = vcvt.s32.f32 %v2041
        %v2058 = vcvt.s32.f32 %v2042
        %v2059 = vcvt.s32.f32 %v2043
        %v2060 = vcvt.s32.f32 %v2044
        %v2061 = vcvt.s32.f32 %v2045
        %v2062 = vcvt.s32.f32 %v2046
        %v2063 = vcvt.s32.f32 %v2047
        %v2064 = vcvt.s32.f32 %v2048
        %v2065 = vcvt.s32.f32 %v2049
        %v2066 = vcvt.s32.f32 %v2050
        %v2067 = vadd.f32 %v1955, %v2051
        %v2068 = vadd.f32 %v1956, %v2052
        %v2069 = vadd.f32 %v1957, %v2053
        %v2070 = vadd.f32 %v1958, %v2054
        %v2071 = vadd.f32 %v1959, %v2055
        %v2072 = vadd.f32 %v1960, %v2056
        %v2073 = vadd.f32 %v1961, %v2057
        %v2074 = vadd.f32 %v1962, %v2058
        %v2075 = vadd.f32 %v1963, %v2059
        %v2076 = vadd.f32 %v1964, %v2060
        %v2077 = vadd.f32 %v1965, %v2061
        %v2078 = vadd.f32 %v1966, %v2062
        %v2079 = vadd.f32 %v1967, %v2063
        %v2080 = vadd.f32 %v1968, %v2064
        %v2081 = vadd.f32 %v1969, %v2065
        %v2082 = vadd.f32 %v1970, %v2066
        %2083 = vset.pattern.permute.xlu0 11
        %2084 = vperm.xlu0 %2083, %v817
        %v2085 = vpop.permute.xlu0 %2084
        %2086 = vset.pattern.permute.xlu0 11
        %2087 = vperm.xlu0 %2086, %v818
        %v2088 = vpop.permute.xlu0 %2087
        %2089 = vset.pattern.permute.xlu0 11
        %2090 = vperm.xlu0 %2089, %v819
        %v2091 = vpop.permute.xlu0 %2090
        %2092 = vset.pattern.permute.xlu0 11
        %2093 = vperm.xlu0 %2092, %v820
        %v2094 = vpop.permute.xlu0 %2093
        %2095 = vset.pattern.permute.xlu0 11
        %2096 = vperm.xlu0 %2095, %v821
        %v2097 = vpop.permute.xlu0 %2096
        %2098 = vset.pattern.permute.xlu0 11
        %2099 = vperm.xlu0 %2098, %v822
        %v2100 = vpop.permute.xlu0 %2099
        %2101 = vset.pattern.permute.xlu0 11
        %2102 = vperm.xlu0 %2101, %v823
        %v2103 = vpop.permute.xlu0 %2102
        %2104 = vset.pattern.permute.xlu0 11
        %2105 = vperm.xlu0 %2104, %v824
        %v2106 = vpop.permute.xlu0 %2105
        %2107 = vset.pattern.permute.xlu0 11
        %2108 = vperm.xlu0 %2107, %v825
        %v2109 = vpop.permute.xlu0 %2108
        %2110 = vset.pattern.permute.xlu0 11
        %2111 = vperm.xlu0 %2110, %v826
        %v2112 = vpop.permute.xlu0 %2111
        %2113 = vset.pattern.permute.xlu0 11
        %2114 = vperm.xlu0 %2113, %v827
        %v2115 = vpop.permute.xlu0 %2114
        %2116 = vset.pattern.permute.xlu0 11
        %2117 = vperm.xlu0 %2116, %v828
        %v2118 = vpop.permute.xlu0 %2117
        %2119 = vset.pattern.permute.xlu0 11
        %2120 = vperm.xlu0 %2119, %v829
        %v2121 = vpop.permute.xlu0 %2120
        %2122 = vset.pattern.permute.xlu0 11
        %2123 = vperm.xlu0 %2122, %v830
        %v2124 = vpop.permute.xlu0 %2123
        %2125 = vset.pattern.permute.xlu0 11
        %2126 = vperm.xlu0 %2125, %v831
        %v2127 = vpop.permute.xlu0 %2126
        %2128 = vset.pattern.permute.xlu0 11
        %2129 = vperm.xlu0 %2128, %v832
        %v2130 = vpop.permute.xlu0 %2129
        %vm2131 = vcmp.eq.s32.totalorder %v2085, %v834
        %vm2132 = vcmp.eq.s32.totalorder %v2088, %v834
        %vm2133 = vcmp.eq.s32.totalorder %v2091, %v834
        %vm2134 = vcmp.eq.s32.totalorder %v2094, %v834
        %vm2135 = vcmp.eq.s32.totalorder %v2097, %v834
        %vm2136 = vcmp.eq.s32.totalorder %v2100, %v834
        %vm2137 = vcmp.eq.s32.totalorder %v2103, %v834
        %vm2138 = vcmp.eq.s32.totalorder %v2106, %v834
        %vm2139 = vcmp.eq.s32.totalorder %v2109, %v834
        %vm2140 = vcmp.eq.s32.totalorder %v2112, %v834
        %vm2141 = vcmp.eq.s32.totalorder %v2115, %v834
        %vm2142 = vcmp.eq.s32.totalorder %v2118, %v834
        %vm2143 = vcmp.eq.s32.totalorder %v2121, %v834
        %vm2144 = vcmp.eq.s32.totalorder %v2124, %v834
        %vm2145 = vcmp.eq.s32.totalorder %v2127, %v834
        %vm2146 = vcmp.eq.s32.totalorder %v2130, %v834
        %v2147 = vsel %vm2131, 1, 0
        %v2148 = vsel %vm2132, 1, 0
        %v2149 = vsel %vm2133, 1, 0
        %v2150 = vsel %vm2134, 1, 0
        %v2151 = vsel %vm2135, 1, 0
        %v2152 = vsel %vm2136, 1, 0
        %v2153 = vsel %vm2137, 1, 0
        %v2154 = vsel %vm2138, 1, 0
        %v2155 = vsel %vm2139, 1, 0
        %v2156 = vsel %vm2140, 1, 0
        %v2157 = vsel %vm2141, 1, 0
        %v2158 = vsel %vm2142, 1, 0
        %v2159 = vsel %vm2143, 1, 0
        %v2160 = vsel %vm2144, 1, 0
        %v2161 = vsel %vm2145, 1, 0
        %v2162 = vsel %vm2146, 1, 0
        %v2163 = vcvt.s32.f32 %v2147
        %v2164 = vcvt.s32.f32 %v2148
        %v2165 = vcvt.s32.f32 %v2149
        %v2166 = vcvt.s32.f32 %v2150
        %v2167 = vcvt.s32.f32 %v2151
        %v2168 = vcvt.s32.f32 %v2152
        %v2169 = vcvt.s32.f32 %v2153
        %v2170 = vcvt.s32.f32 %v2154
        %v2171 = vcvt.s32.f32 %v2155
        %v2172 = vcvt.s32.f32 %v2156
        %v2173 = vcvt.s32.f32 %v2157
        %v2174 = vcvt.s32.f32 %v2158
        %v2175 = vcvt.s32.f32 %v2159
        %v2176 = vcvt.s32.f32 %v2160
        %v2177 = vcvt.s32.f32 %v2161
        %v2178 = vcvt.s32.f32 %v2162
        %v2179 = vadd.f32 %v2067, %v2163
        %v2180 = vadd.f32 %v2068, %v2164
        %v2181 = vadd.f32 %v2069, %v2165
        %v2182 = vadd.f32 %v2070, %v2166
        %v2183 = vadd.f32 %v2071, %v2167
        %v2184 = vadd.f32 %v2072, %v2168
        %v2185 = vadd.f32 %v2073, %v2169
        %v2186 = vadd.f32 %v2074, %v2170
        %v2187 = vadd.f32 %v2075, %v2171
        %v2188 = vadd.f32 %v2076, %v2172
        %v2189 = vadd.f32 %v2077, %v2173
        %v2190 = vadd.f32 %v2078, %v2174
        %v2191 = vadd.f32 %v2079, %v2175
        %v2192 = vadd.f32 %v2080, %v2176
        %v2193 = vadd.f32 %v2081, %v2177
        %v2194 = vadd.f32 %v2082, %v2178
        %v2195 = vpack.c.bf16 %v2180, %v2179
        %v2196 = vpack.c.bf16 %v2182, %v2181
        %v2197 = vpack.c.bf16 %v2184, %v2183
        %v2198 = vpack.c.bf16 %v2186, %v2185
        %v2199 = vpack.c.bf16 %v2188, %v2187
        %v2200 = vpack.c.bf16 %v2190, %v2189
        %v2201 = vpack.c.bf16 %v2192, %v2191
        %v2202 = vpack.c.bf16 %v2194, %v2193
        %v2203 = vld [vmem:[%s2] sm:$0xf]
        %v2204 = vld [vmem:[%s2 + $0x4] sm:$0xf]
        %v2205 = vld [vmem:[%s2 + $0x8] sm:$0xf]
        %v2206 = vld [vmem:[%s2 + $0xc] sm:$0xf]
        %v2207 = vld [vmem:[%s2 + $0x10] sm:$0xf]
        %v2208 = vld [vmem:[%s2 + $0x14] sm:$0xf]
        %v2209 = vld [vmem:[%s2 + $0x18] sm:$0xf]
        %v2210 = vld [vmem:[%s2 + $0x1c] sm:$0xf]
        %v2211 = vld [vmem:[%s2 + $0x20] sm:$0xf]
        %v2212 = vld [vmem:[%s2 + $0x24] sm:$0xf]
        %v2213 = vld [vmem:[%s2 + $0x28] sm:$0xf]
        %v2214 = vld [vmem:[%s2 + $0x2c] sm:$0xf]
        %v2215 = vld [vmem:[%s2 + $0x30] sm:$0xf]
        %v2216 = vld [vmem:[%s2 + $0x34] sm:$0xf]
        %v2217 = vld [vmem:[%s2 + $0x38] sm:$0xf]
        %v2218 = vld [vmem:[%s2 + $0x3c] sm:$0xf]
        %v2219 = vld [vmem:[%s2 + $0x40] sm:$0xf]
        %v2220 = vld [vmem:[%s2 + $0x44] sm:$0xf]
        %v2221 = vld [vmem:[%s2 + $0x48] sm:$0xf]
        %v2222 = vld [vmem:[%s2 + $0x4c] sm:$0xf]
        %v2223 = vld [vmem:[%s2 + $0x50] sm:$0xf]
        %v2224 = vld [vmem:[%s2 + $0x54] sm:$0xf]
        %v2225 = vld [vmem:[%s2 + $0x58] sm:$0xf]
        %v2226 = vld [vmem:[%s2 + $0x5c] sm:$0xf]
        %v2227 = vld [vmem:[%s2 + $0x60] sm:$0xf]
        %v2228 = vld [vmem:[%s2 + $0x64] sm:$0xf]
        %v2229 = vld [vmem:[%s2 + $0x68] sm:$0xf]
        %v2230 = vld [vmem:[%s2 + $0x6c] sm:$0xf]
        %v2231 = vld [vmem:[%s2 + $0x70] sm:$0xf]
        %v2232 = vld [vmem:[%s2 + $0x74] sm:$0xf]
        %v2233 = vld [vmem:[%s2 + $0x78] sm:$0xf]
        %v2234 = vld [vmem:[%s2 + $0x7c] sm:$0xf]
        %v2235 = vld [vmem:[%s2 + $0x80] sm:$0xf]
        %v2236 = vld [vmem:[%s2 + $0x84] sm:$0xf]
        %v2237 = vld [vmem:[%s2 + $0x88] sm:$0xf]
        %v2238 = vld [vmem:[%s2 + $0x8c] sm:$0xf]
        %v2239 = vld [vmem:[%s2 + $0x90] sm:$0xf]
        %v2240 = vld [vmem:[%s2 + $0x94] sm:$0xf]
        %v2241 = vld [vmem:[%s2 + $0x98] sm:$0xf]
        %v2242 = vld [vmem:[%s2 + $0x9c] sm:$0xf]
        %v2243 = vld [vmem:[%s2 + $0xa0] sm:$0xf]
        %v2244 = vld [vmem:[%s2 + $0xa4] sm:$0xf]
        %v2245 = vld [vmem:[%s2 + $0xa8] sm:$0xf]
        %v2246 = vld [vmem:[%s2 + $0xac] sm:$0xf]
        %v2247 = vld [vmem:[%s2 + $0xb0] sm:$0xf]
        %v2248 = vld [vmem:[%s2 + $0xb4] sm:$0xf]
        %v2249 = vld [vmem:[%s2 + $0xb8] sm:$0xf]
        %v2250 = vld [vmem:[%s2 + $0xbc] sm:$0xf]
        %v2299 = vunpack.c.l.b16 %v2203
        %v2300 = vunpack.c.l.b16 %v2204
        %v2301 = vunpack.c.l.b16 %v2205
        %v2302 = vunpack.c.l.b16 %v2206
        %v2303 = vunpack.c.l.b16 %v2207
        %v2304 = vunpack.c.l.b16 %v2208
        %v2305 = vunpack.c.l.b16 %v2209
        %v2306 = vunpack.c.l.b16 %v2210
        %v2307 = vunpack.c.l.b16 %v2211
        %v2308 = vunpack.c.l.b16 %v2212
        %v2309 = vunpack.c.l.b16 %v2213
        %v2310 = vunpack.c.l.b16 %v2214
        %v2311 = vunpack.c.l.b16 %v2215
        %v2312 = vunpack.c.l.b16 %v2216
        %v2313 = vunpack.c.l.b16 %v2217
        %v2314 = vunpack.c.l.b16 %v2218
        %v2315 = vunpack.c.l.b16 %v2219
        %v2316 = vunpack.c.l.b16 %v2220
        %v2317 = vunpack.c.l.b16 %v2221
        %v2318 = vunpack.c.l.b16 %v2222
        %v2319 = vunpack.c.l.b16 %v2223
        %v2320 = vunpack.c.l.b16 %v2224
        %v2321 = vunpack.c.l.b16 %v2225
        %v2322 = vunpack.c.l.b16 %v2226
        %v2323 = vunpack.c.l.b16 %v2227
        %v2324 = vunpack.c.l.b16 %v2228
        %v2325 = vunpack.c.l.b16 %v2229
        %v2326 = vunpack.c.l.b16 %v2230
        %v2327 = vunpack.c.l.b16 %v2231
        %v2328 = vunpack.c.l.b16 %v2232
        %v2329 = vunpack.c.l.b16 %v2233
        %v2330 = vunpack.c.l.b16 %v2234
        %v2331 = vunpack.c.l.b16 %v2235
        %v2332 = vunpack.c.l.b16 %v2236
        %v2333 = vunpack.c.l.b16 %v2237
        %v2334 = vunpack.c.l.b16 %v2238
        %v2335 = vunpack.c.l.b16 %v2239
        %v2336 = vunpack.c.l.b16 %v2240
        %v2337 = vunpack.c.l.b16 %v2241
        %v2338 = vunpack.c.l.b16 %v2242
        %v2339 = vunpack.c.l.b16 %v2243
        %v2340 = vunpack.c.l.b16 %v2244
        %v2341 = vunpack.c.l.b16 %v2245
        %v2342 = vunpack.c.l.b16 %v2246
        %v2343 = vunpack.c.l.b16 %v2247
        %v2344 = vunpack.c.l.b16 %v2248
        %v2345 = vunpack.c.l.b16 %v2249
        %v2346 = vunpack.c.l.b16 %v2250
        %v2347 = vpack.c.b16 %v2300, %v2299
        %v2348 = vpack.c.b16 %v2302, %v2301
        %v2349 = vpack.c.b16 %v2304, %v2303
        %v2350 = vpack.c.b16 %v2306, %v2305
        %v2351 = vpack.c.b16 %v2308, %v2307
        %v2352 = vpack.c.b16 %v2310, %v2309
        %v2353 = vpack.c.b16 %v2312, %v2311
        %v2354 = vpack.c.b16 %v2314, %v2313
        %v2355 = vpack.c.b16 %v2316, %v2315
        %v2356 = vpack.c.b16 %v2318, %v2317
        %v2357 = vpack.c.b16 %v2320, %v2319
        %v2358 = vpack.c.b16 %v2322, %v2321
        %v2359 = vpack.c.b16 %v2324, %v2323
        %v2360 = vpack.c.b16 %v2326, %v2325
        %v2361 = vpack.c.b16 %v2328, %v2327
        %v2362 = vpack.c.b16 %v2330, %v2329
        %v2363 = vpack.c.b16 %v2332, %v2331
        %v2364 = vpack.c.b16 %v2334, %v2333
        %v2365 = vpack.c.b16 %v2336, %v2335
        %v2366 = vpack.c.b16 %v2338, %v2337
        %v2367 = vpack.c.b16 %v2340, %v2339
        %v2368 = vpack.c.b16 %v2342, %v2341
        %v2369 = vpack.c.b16 %v2344, %v2343
        %v2370 = vpack.c.b16 %v2346, %v2345
        %2395 = vmatprep.subr.bf16.mxu0 0
        %2396 = vmatpush1.bf16.msra.mxu0 %v2354
        %2397 = vmatprep.subr.bf16.mxu0 0
        %2398 = vmatpush1.bf16.msra.mxu0 %v2353
        %2399 = vmatprep.subr.bf16.mxu0 0
        %2400 = vmatpush1.bf16.msra.mxu0 %v2352
        %2401 = vmatprep.subr.bf16.mxu0 0
        %2402 = vmatpush1.bf16.msra.mxu0 %v2351
        %2403 = vmatprep.subr.bf16.mxu0 0
        %2404 = vmatpush1.bf16.msra.mxu0 %v2350
        %2405 = vmatprep.subr.bf16.mxu0 0
        %2406 = vmatpush1.bf16.msra.mxu0 %v2349
        %2407 = vmatprep.subr.bf16.mxu0 0
        %2408 = vmatpush1.bf16.msra.mxu0 %v2348
        %2409 = vmatprep.subr.bf16.mxu0 0
        %2410 = vmatpush1.bf16.msra.mxu0 %v2347
        %2411 = vmatprep.subr.bf16.mxu0 0
        %2412 = vmatpush2.bf16.msra.mxu0 %v2362
        %2413 = vmatprep.subr.bf16.mxu0 0
        %2414 = vmatpush2.bf16.msra.mxu0 %v2361
        %2415 = vmatprep.subr.bf16.mxu0 0
        %2416 = vmatpush2.bf16.msra.mxu0 %v2360
        %2417 = vmatprep.subr.bf16.mxu0 0
        %2418 = vmatpush2.bf16.msra.mxu0 %v2359
        %2419 = vmatprep.subr.bf16.mxu0 0
        %2420 = vmatpush2.bf16.msra.mxu0 %v2358
        %2421 = vmatprep.subr.bf16.mxu0 0
        %2422 = vmatpush2.bf16.msra.mxu0 %v2357
        %2423 = vmatprep.subr.bf16.mxu0 0
        %2424 = vmatpush2.bf16.msra.mxu0 %v2356
        %2425 = vmatprep.subr.bf16.mxu0 0
        %2426 = vmatpush2.bf16.msra.mxu0 %v2355
        %2427 = vmatprep.mubr.bf16.mxu0 %v1739
        %2428 = vmatmul.mubr.bf16.gmra.mxu0 %v1283
        %v2429 = vpop.f32.mrf.mxu0
        %v2430 = vadd.f32 0.0, %v2429
        %v2431 = vpop.f32.mrf.mxu0
        %v2432 = vpop.f32.mrf.mxu0
        %v2433 = vadd.f32 0.0, %v2432
        %v2434 = vpop.f32.mrf.mxu0
        %2435 = vmatprep.mubr.bf16.mxu0 %v1740
        %2436 = vmatmul.mubr.bf16.gmra.mxu0 %v1284
        %v2437 = vpop.f32.mrf.mxu0
        %v2438 = vadd.f32 0.0, %v2437
        %v2439 = vpop.f32.mrf.mxu0
        %v2440 = vpop.f32.mrf.mxu0
        %v2441 = vadd.f32 0.0, %v2440
        %v2442 = vpop.f32.mrf.mxu0
        %2443 = vmatprep.mubr.bf16.mxu0 %v1741
        %2444 = vmatmul.mubr.bf16.gmra.mxu0 %v1285
        %v2445 = vpop.f32.mrf.mxu0
        %v2446 = vadd.f32 0.0, %v2445
        %v2447 = vpop.f32.mrf.mxu0
        %v2448 = vpop.f32.mrf.mxu0
        %v2449 = vadd.f32 0.0, %v2448
        %v2450 = vpop.f32.mrf.mxu0
        %2451 = vmatprep.mubr.bf16.mxu0 %v1742
        %2452 = vmatmul.mubr.bf16.gmra.mxu0 %v1286
        %v2453 = vpop.f32.mrf.mxu0
        %v2454 = vadd.f32 0.0, %v2453
        %v2455 = vpop.f32.mrf.mxu0
        %v2456 = vpop.f32.mrf.mxu0
        %v2457 = vadd.f32 0.0, %v2456
        %v2458 = vpop.f32.mrf.mxu0
        %2459 = vmatprep.mubr.bf16.mxu0 %v1743
        %2460 = vmatmul.mubr.bf16.gmra.mxu0 %v1287
        %v2461 = vpop.f32.mrf.mxu0
        %v2462 = vadd.f32 0.0, %v2461
        %v2463 = vpop.f32.mrf.mxu0
        %v2464 = vpop.f32.mrf.mxu0
        %v2465 = vadd.f32 0.0, %v2464
        %v2466 = vpop.f32.mrf.mxu0
        %2467 = vmatprep.mubr.bf16.mxu0 %v1744
        %2468 = vmatmul.mubr.bf16.gmra.mxu0 %v1288
        %v2469 = vpop.f32.mrf.mxu0
        %v2470 = vadd.f32 0.0, %v2469
        %v2471 = vpop.f32.mrf.mxu0
        %v2472 = vpop.f32.mrf.mxu0
        %v2473 = vadd.f32 0.0, %v2472
        %v2474 = vpop.f32.mrf.mxu0
        %2475 = vmatprep.mubr.bf16.mxu0 %v1745
        %2476 = vmatmul.mubr.bf16.gmra.mxu0 %v1289
        %v2477 = vpop.f32.mrf.mxu0
        %v2478 = vadd.f32 0.0, %v2477
        %v2479 = vpop.f32.mrf.mxu0
        %v2480 = vpop.f32.mrf.mxu0
        %v2481 = vadd.f32 0.0, %v2480
        %v2482 = vpop.f32.mrf.mxu0
        %2483 = vmatprep.mubr.bf16.mxu0 %v1746
        %2484 = vmatmul.mubr.bf16.gmra.mxu0 %v1290
        %v2485 = vpop.f32.mrf.mxu0
        %v2486 = vadd.f32 0.0, %v2485
        %v2487 = vpop.f32.mrf.mxu0
        %v2488 = vpop.f32.mrf.mxu0
        %v2489 = vadd.f32 0.0, %v2488
        %v2490 = vpop.f32.mrf.mxu0
        %2491 = vdwg.mxu0
        %2492 = vmatprep.subr.bf16.mxu0 0
        %2493 = vmatpush1.bf16.msra.mxu0 %v2370
        %2494 = vmatprep.subr.bf16.mxu0 0
        %2495 = vmatpush1.bf16.msra.mxu0 %v2369
        %2496 = vmatprep.subr.bf16.mxu0 0
        %2497 = vmatpush1.bf16.msra.mxu0 %v2368
        %2498 = vmatprep.subr.bf16.mxu0 0
        %2499 = vmatpush1.bf16.msra.mxu0 %v2367
        %2500 = vmatprep.subr.bf16.mxu0 0
        %2501 = vmatpush1.bf16.msra.mxu0 %v2366
        %2502 = vmatprep.subr.bf16.mxu0 0
        %2503 = vmatpush1.bf16.msra.mxu0 %v2365
        %2504 = vmatprep.subr.bf16.mxu0 0
        %2505 = vmatpush1.bf16.msra.mxu0 %v2364
        %2506 = vmatprep.subr.bf16.mxu0 0
        %2507 = vmatpush1.bf16.msra.mxu0 %v2363
        %2508 = vmatprep.subr.bf16.mxu0 0
        %2509 = vmatpush2.bf16.msra.mxu0 0
        %2510 = vmatprep.subr.bf16.mxu0 0
        %2511 = vmatpush2.bf16.msra.mxu0 0
        %2512 = vmatprep.subr.bf16.mxu0 0
        %2513 = vmatpush2.bf16.msra.mxu0 0
        %2514 = vmatprep.subr.bf16.mxu0 0
        %2515 = vmatpush2.bf16.msra.mxu0 0
        %2516 = vmatprep.subr.bf16.mxu0 0
        %2517 = vmatpush2.bf16.msra.mxu0 0
        %2518 = vmatprep.subr.bf16.mxu0 0
        %2519 = vmatpush2.bf16.msra.mxu0 0
        %2520 = vmatprep.subr.bf16.mxu0 0
        %2521 = vmatpush2.bf16.msra.mxu0 0
        %2522 = vmatprep.subr.bf16.mxu0 0
        %2523 = vmatpush2.bf16.msra.mxu0 0
        %2524 = vmatprep.mubr.bf16.mxu0 0
        %2525 = vmatmul.mubr.bf16.gmra.mxu0 %v2195
        %v2526 = vpop.f32.mrf.mxu0
        %v2527 = vadd.f32 %v2430, %v2526
        %v2528 = vpop.f32.mrf.mxu0
        %v2529 = vpop.f32.mrf.mxu0
        %v2530 = vadd.f32 %v2433, %v2529
        %v2531 = vpop.f32.mrf.mxu0
        %2532 = vmatprep.mubr.bf16.mxu0 0
        %2533 = vmatmul.mubr.bf16.gmra.mxu0 %v2196
        %v2534 = vpop.f32.mrf.mxu0
        %v2535 = vadd.f32 %v2438, %v2534
        %v2536 = vpop.f32.mrf.mxu0
        %v2537 = vpop.f32.mrf.mxu0
        %v2538 = vadd.f32 %v2441, %v2537
        %v2539 = vpop.f32.mrf.mxu0
        %2540 = vmatprep.mubr.bf16.mxu0 0
        %2541 = vmatmul.mubr.bf16.gmra.mxu0 %v2197
        %v2542 = vpop.f32.mrf.mxu0
        %v2543 = vadd.f32 %v2446, %v2542
        %v2544 = vpop.f32.mrf.mxu0
        %v2545 = vpop.f32.mrf.mxu0
        %v2546 = vadd.f32 %v2449, %v2545
        %v2547 = vpop.f32.mrf.mxu0
        %2548 = vmatprep.mubr.bf16.mxu0 0
        %2549 = vmatmul.mubr.bf16.gmra.mxu0 %v2198
        %v2550 = vpop.f32.mrf.mxu0
        %v2551 = vadd.f32 %v2454, %v2550
        %v2552 = vpop.f32.mrf.mxu0
        %v2553 = vpop.f32.mrf.mxu0
        %v2554 = vadd.f32 %v2457, %v2553
        %v2555 = vpop.f32.mrf.mxu0
        %2556 = vmatprep.mubr.bf16.mxu0 0
        %2557 = vmatmul.mubr.bf16.gmra.mxu0 %v2199
        %v2558 = vpop.f32.mrf.mxu0
        %v2559 = vadd.f32 %v2462, %v2558
        %v2560 = vpop.f32.mrf.mxu0
        %v2561 = vpop.f32.mrf.mxu0
        %v2562 = vadd.f32 %v2465, %v2561
        %v2563 = vpop.f32.mrf.mxu0
        %2564 = vmatprep.mubr.bf16.mxu0 0
        %2565 = vmatmul.mubr.bf16.gmra.mxu0 %v2200
        %v2566 = vpop.f32.mrf.mxu0
        %v2567 = vadd.f32 %v2470, %v2566
        %v2568 = vpop.f32.mrf.mxu0
        %v2569 = vpop.f32.mrf.mxu0
        %v2570 = vadd.f32 %v2473, %v2569
        %v2571 = vpop.f32.mrf.mxu0
        %2572 = vmatprep.mubr.bf16.mxu0 0
        %2573 = vmatmul.mubr.bf16.gmra.mxu0 %v2201
        %v2574 = vpop.f32.mrf.mxu0
        %v2575 = vadd.f32 %v2478, %v2574
        %v2576 = vpop.f32.mrf.mxu0
        %v2577 = vpop.f32.mrf.mxu0
        %v2578 = vadd.f32 %v2481, %v2577
        %v2579 = vpop.f32.mrf.mxu0
        %2580 = vmatprep.mubr.bf16.mxu0 0
        %2581 = vmatmul.mubr.bf16.gmra.mxu0 %v2202
        %v2582 = vpop.f32.mrf.mxu0
        %v2583 = vadd.f32 %v2486, %v2582
        %v2584 = vpop.f32.mrf.mxu0
        %v2585 = vpop.f32.mrf.mxu0
        %v2586 = vadd.f32 %v2489, %v2585
        %v2587 = vpop.f32.mrf.mxu0
        %2588 = vdwg.mxu0
        %v2589 = vmul.f32 %v2527, 0.25
        %v2590 = vmul.f32 %v2530, 0.25
        %v2591 = vmul.f32 %v2535, 0.25
        %v2592 = vmul.f32 %v2538, 0.25
        %v2593 = vmul.f32 %v2543, 0.25
        %v2594 = vmul.f32 %v2546, 0.25
        %v2595 = vmul.f32 %v2551, 0.25
        %v2596 = vmul.f32 %v2554, 0.25
        %v2597 = vmul.f32 %v2559, 0.25
        %v2598 = vmul.f32 %v2562, 0.25
        %v2599 = vmul.f32 %v2567, 0.25
        %v2600 = vmul.f32 %v2570, 0.25
        %v2601 = vmul.f32 %v2575, 0.25
        %v2602 = vmul.f32 %v2578, 0.25
        %v2603 = vmul.f32 %v2583, 0.25
        %v2604 = vmul.f32 %v2586, 0.25
        %v2605 = vmul.f32 %v2589, %v801
        %v2606 = vmul.f32 %v2590, %v802
        %v2607 = vmul.f32 %v2591, %v803
        %v2608 = vmul.f32 %v2592, %v804
        %v2609 = vmul.f32 %v2593, %v805
        %v2610 = vmul.f32 %v2594, %v806
        %v2611 = vmul.f32 %v2595, %v807
        %v2612 = vmul.f32 %v2596, %v808
        %v2613 = vmul.f32 %v2597, %v809
        %v2614 = vmul.f32 %v2598, %v810
        %v2615 = vmul.f32 %v2599, %v811
        %v2616 = vmul.f32 %v2600, %v812
        %v2617 = vmul.f32 %v2601, %v813
        %v2618 = vmul.f32 %v2602, %v814
        %v2619 = vmul.f32 %v2603, %v815
        %v2620 = vmul.f32 %v2604, %v816
        %vm2621 = vcmask 130048
        %v2622 = vsel %vm2621, %v2605, 0.0
        %2623 = vadd.xlane.f32.xlu0 %v2622
        %v2624 = vpop.xlane.xlu0 %2623
        %v2625 = vsel %vm2621, %v2606, 0.0
        %2626 = vadd.xlane.f32.xlu0 %v2625
        %v2627 = vpop.xlane.xlu0 %2626
        %v2628 = vsel %vm2621, %v2607, 0.0
        %2629 = vadd.xlane.f32.xlu0 %v2628
        %v2630 = vpop.xlane.xlu0 %2629
        %v2631 = vsel %vm2621, %v2608, 0.0
        %2632 = vadd.xlane.f32.xlu0 %v2631
        %v2633 = vpop.xlane.xlu0 %2632
        %v2634 = vsel %vm2621, %v2609, 0.0
        %2635 = vadd.xlane.f32.xlu0 %v2634
        %v2636 = vpop.xlane.xlu0 %2635
        %v2637 = vsel %vm2621, %v2610, 0.0
        %2638 = vadd.xlane.f32.xlu0 %v2637
        %v2639 = vpop.xlane.xlu0 %2638
        %v2640 = vsel %vm2621, %v2611, 0.0
        %2641 = vadd.xlane.f32.xlu0 %v2640
        %v2642 = vpop.xlane.xlu0 %2641
        %v2643 = vsel %vm2621, %v2612, 0.0
        %2644 = vadd.xlane.f32.xlu0 %v2643
        %v2645 = vpop.xlane.xlu0 %2644
        %v2646 = vsel %vm2621, %v2613, 0.0
        %2647 = vadd.xlane.f32.xlu0 %v2646
        %v2648 = vpop.xlane.xlu0 %2647
        %v2649 = vsel %vm2621, %v2614, 0.0
        %2650 = vadd.xlane.f32.xlu0 %v2649
        %v2651 = vpop.xlane.xlu0 %2650
        %v2652 = vsel %vm2621, %v2615, 0.0
        %2653 = vadd.xlane.f32.xlu0 %v2652
        %v2654 = vpop.xlane.xlu0 %2653
        %v2655 = vsel %vm2621, %v2616, 0.0
        %2656 = vadd.xlane.f32.xlu0 %v2655
        %v2657 = vpop.xlane.xlu0 %2656
        %v2658 = vsel %vm2621, %v2617, 0.0
        %2659 = vadd.xlane.f32.xlu0 %v2658
        %v2660 = vpop.xlane.xlu0 %2659
        %v2661 = vsel %vm2621, %v2618, 0.0
        %2662 = vadd.xlane.f32.xlu0 %v2661
        %v2663 = vpop.xlane.xlu0 %2662
        %v2664 = vsel %vm2621, %v2619, 0.0
        %2665 = vadd.xlane.f32.xlu0 %v2664
        %v2666 = vpop.xlane.xlu0 %2665
        %v2667 = vsel %vm2621, %v2620, 0.0
        %2668 = vadd.xlane.f32.xlu0 %v2667
        %v2669 = vpop.xlane.xlu0 %2668
        %2686 = vrot.lane.b32.xlu0 %v801, 16
        %v2687 = vpop.permute.xlu0 %2686
        %2688 = vrot.lane.b32.xlu0 %v802, 16
        %v2689 = vpop.permute.xlu0 %2688
        %2690 = vrot.lane.b32.xlu0 %v803, 16
        %v2691 = vpop.permute.xlu0 %2690
        %2692 = vrot.lane.b32.xlu0 %v804, 16
        %v2693 = vpop.permute.xlu0 %2692
        %2694 = vrot.lane.b32.xlu0 %v805, 16
        %v2695 = vpop.permute.xlu0 %2694
        %2696 = vrot.lane.b32.xlu0 %v806, 16
        %v2697 = vpop.permute.xlu0 %2696
        %2698 = vrot.lane.b32.xlu0 %v807, 16
        %v2699 = vpop.permute.xlu0 %2698
        %2700 = vrot.lane.b32.xlu0 %v808, 16
        %v2701 = vpop.permute.xlu0 %2700
        %2702 = vrot.lane.b32.xlu0 %v809, 16
        %v2703 = vpop.permute.xlu0 %2702
        %2704 = vrot.lane.b32.xlu0 %v810, 16
        %v2705 = vpop.permute.xlu0 %2704
        %2706 = vrot.lane.b32.xlu0 %v811, 16
        %v2707 = vpop.permute.xlu0 %2706
        %2708 = vrot.lane.b32.xlu0 %v812, 16
        %v2709 = vpop.permute.xlu0 %2708
        %2710 = vrot.lane.b32.xlu0 %v813, 16
        %v2711 = vpop.permute.xlu0 %2710
        %2712 = vrot.lane.b32.xlu0 %v814, 16
        %v2713 = vpop.permute.xlu0 %2712
        %2714 = vrot.lane.b32.xlu0 %v815, 16
        %v2715 = vpop.permute.xlu0 %2714
        %2716 = vrot.lane.b32.xlu0 %v816, 16
        %v2717 = vpop.permute.xlu0 %2716
        %v2734 = vmul.f32 %v2589, %v2687
        %v2735 = vmul.f32 %v2590, %v2689
        %v2736 = vmul.f32 %v2591, %v2691
        %v2737 = vmul.f32 %v2592, %v2693
        %v2738 = vmul.f32 %v2593, %v2695
        %v2739 = vmul.f32 %v2594, %v2697
        %v2740 = vmul.f32 %v2595, %v2699
        %v2741 = vmul.f32 %v2596, %v2701
        %v2742 = vmul.f32 %v2597, %v2703
        %v2743 = vmul.f32 %v2598, %v2705
        %v2744 = vmul.f32 %v2599, %v2707
        %v2745 = vmul.f32 %v2600, %v2709
        %v2746 = vmul.f32 %v2601, %v2711
        %v2747 = vmul.f32 %v2602, %v2713
        %v2748 = vmul.f32 %v2603, %v2715
        %v2749 = vmul.f32 %v2604, %v2717
        %2766 = vrot.lane.b32.xlu0 %v2734, 112
        %v2767 = vpop.permute.xlu0 %2766
        %2768 = vrot.lane.b32.xlu0 %v2735, 112
        %v2769 = vpop.permute.xlu0 %2768
        %2770 = vrot.lane.b32.xlu0 %v2736, 112
        %v2771 = vpop.permute.xlu0 %2770
        %2772 = vrot.lane.b32.xlu0 %v2737, 112
        %v2773 = vpop.permute.xlu0 %2772
        %2774 = vrot.lane.b32.xlu0 %v2738, 112
        %v2775 = vpop.permute.xlu0 %2774
        %2776 = vrot.lane.b32.xlu0 %v2739, 112
        %v2777 = vpop.permute.xlu0 %2776
        %2778 = vrot.lane.b32.xlu0 %v2740, 112
        %v2779 = vpop.permute.xlu0 %2778
        %2780 = vrot.lane.b32.xlu0 %v2741, 112
        %v2781 = vpop.permute.xlu0 %2780
        %2782 = vrot.lane.b32.xlu0 %v2742, 112
        %v2783 = vpop.permute.xlu0 %2782
        %2784 = vrot.lane.b32.xlu0 %v2743, 112
        %v2785 = vpop.permute.xlu0 %2784
        %2786 = vrot.lane.b32.xlu0 %v2744, 112
        %v2787 = vpop.permute.xlu0 %2786
        %2788 = vrot.lane.b32.xlu0 %v2745, 112
        %v2789 = vpop.permute.xlu0 %2788
        %2790 = vrot.lane.b32.xlu0 %v2746, 112
        %v2791 = vpop.permute.xlu0 %2790
        %2792 = vrot.lane.b32.xlu0 %v2747, 112
        %v2793 = vpop.permute.xlu0 %2792
        %2794 = vrot.lane.b32.xlu0 %v2748, 112
        %v2795 = vpop.permute.xlu0 %2794
        %2796 = vrot.lane.b32.xlu0 %v2749, 112
        %v2797 = vpop.permute.xlu0 %2796
        %v2814 = vsel %vm2621, %v2767, 0.0
        %2815 = vadd.xlane.f32.xlu0 %v2814
        %v2816 = vpop.xlane.xlu0 %2815
        %v2817 = vsel %vm2621, %v2769, 0.0
        %2818 = vadd.xlane.f32.xlu0 %v2817
        %v2819 = vpop.xlane.xlu0 %2818
        %v2820 = vsel %vm2621, %v2771, 0.0
        %2821 = vadd.xlane.f32.xlu0 %v2820
        %v2822 = vpop.xlane.xlu0 %2821
        %v2823 = vsel %vm2621, %v2773, 0.0
        %2824 = vadd.xlane.f32.xlu0 %v2823
        %v2825 = vpop.xlane.xlu0 %2824
        %v2826 = vsel %vm2621, %v2775, 0.0
        %2827 = vadd.xlane.f32.xlu0 %v2826
        %v2828 = vpop.xlane.xlu0 %2827
        %v2829 = vsel %vm2621, %v2777, 0.0
        %2830 = vadd.xlane.f32.xlu0 %v2829
        %v2831 = vpop.xlane.xlu0 %2830
        %v2832 = vsel %vm2621, %v2779, 0.0
        %2833 = vadd.xlane.f32.xlu0 %v2832
        %v2834 = vpop.xlane.xlu0 %2833
        %v2835 = vsel %vm2621, %v2781, 0.0
        %2836 = vadd.xlane.f32.xlu0 %v2835
        %v2837 = vpop.xlane.xlu0 %2836
        %v2838 = vsel %vm2621, %v2783, 0.0
        %2839 = vadd.xlane.f32.xlu0 %v2838
        %v2840 = vpop.xlane.xlu0 %2839
        %v2841 = vsel %vm2621, %v2785, 0.0
        %2842 = vadd.xlane.f32.xlu0 %v2841
        %v2843 = vpop.xlane.xlu0 %2842
        %v2844 = vsel %vm2621, %v2787, 0.0
        %2845 = vadd.xlane.f32.xlu0 %v2844
        %v2846 = vpop.xlane.xlu0 %2845
        %v2847 = vsel %vm2621, %v2789, 0.0
        %2848 = vadd.xlane.f32.xlu0 %v2847
        %v2849 = vpop.xlane.xlu0 %2848
        %v2850 = vsel %vm2621, %v2791, 0.0
        %2851 = vadd.xlane.f32.xlu0 %v2850
        %v2852 = vpop.xlane.xlu0 %2851
        %v2853 = vsel %vm2621, %v2793, 0.0
        %2854 = vadd.xlane.f32.xlu0 %v2853
        %v2855 = vpop.xlane.xlu0 %2854
        %v2856 = vsel %vm2621, %v2795, 0.0
        %2857 = vadd.xlane.f32.xlu0 %v2856
        %v2858 = vpop.xlane.xlu0 %2857
        %v2859 = vsel %vm2621, %v2797, 0.0
        %2860 = vadd.xlane.f32.xlu0 %v2859
        %v2861 = vpop.xlane.xlu0 %2860
        %2878 = vrot.lane.b32.xlu0 %v2589, 16
        %v2879 = vpop.permute.xlu0 %2878
        %2880 = vrot.lane.b32.xlu0 %v2590, 16
        %v2881 = vpop.permute.xlu0 %2880
        %2882 = vrot.lane.b32.xlu0 %v2591, 16
        %v2883 = vpop.permute.xlu0 %2882
        %2884 = vrot.lane.b32.xlu0 %v2592, 16
        %v2885 = vpop.permute.xlu0 %2884
        %2886 = vrot.lane.b32.xlu0 %v2593, 16
        %v2887 = vpop.permute.xlu0 %2886
        %2888 = vrot.lane.b32.xlu0 %v2594, 16
        %v2889 = vpop.permute.xlu0 %2888
        %2890 = vrot.lane.b32.xlu0 %v2595, 16
        %v2891 = vpop.permute.xlu0 %2890
        %2892 = vrot.lane.b32.xlu0 %v2596, 16
        %v2893 = vpop.permute.xlu0 %2892
        %2894 = vrot.lane.b32.xlu0 %v2597, 16
        %v2895 = vpop.permute.xlu0 %2894
        %2896 = vrot.lane.b32.xlu0 %v2598, 16
        %v2897 = vpop.permute.xlu0 %2896
        %2898 = vrot.lane.b32.xlu0 %v2599, 16
        %v2899 = vpop.permute.xlu0 %2898
        %2900 = vrot.lane.b32.xlu0 %v2600, 16
        %v2901 = vpop.permute.xlu0 %2900
        %2902 = vrot.lane.b32.xlu0 %v2601, 16
        %v2903 = vpop.permute.xlu0 %2902
        %2904 = vrot.lane.b32.xlu0 %v2602, 16
        %v2905 = vpop.permute.xlu0 %2904
        %2906 = vrot.lane.b32.xlu0 %v2603, 16
        %v2907 = vpop.permute.xlu0 %2906
        %2908 = vrot.lane.b32.xlu0 %v2604, 16
        %v2909 = vpop.permute.xlu0 %2908
        %v2926 = vmul.f32 %v2589, %v2879
        %v2927 = vmul.f32 %v2590, %v2881
        %v2928 = vmul.f32 %v2591, %v2883
        %v2929 = vmul.f32 %v2592, %v2885
        %v2930 = vmul.f32 %v2593, %v2887
        %v2931 = vmul.f32 %v2594, %v2889
        %v2932 = vmul.f32 %v2595, %v2891
        %v2933 = vmul.f32 %v2596, %v2893
        %v2934 = vmul.f32 %v2597, %v2895
        %v2935 = vmul.f32 %v2598, %v2897
        %v2936 = vmul.f32 %v2599, %v2899
        %v2937 = vmul.f32 %v2600, %v2901
        %v2938 = vmul.f32 %v2601, %v2903
        %v2939 = vmul.f32 %v2602, %v2905
        %v2940 = vmul.f32 %v2603, %v2907
        %v2941 = vmul.f32 %v2604, %v2909
        %2958 = vrot.lane.b32.xlu0 %v2926, 112
        %v2959 = vpop.permute.xlu0 %2958
        %2960 = vrot.lane.b32.xlu0 %v2927, 112
        %v2961 = vpop.permute.xlu0 %2960
        %2962 = vrot.lane.b32.xlu0 %v2928, 112
        %v2963 = vpop.permute.xlu0 %2962
        %2964 = vrot.lane.b32.xlu0 %v2929, 112
        %v2965 = vpop.permute.xlu0 %2964
        %2966 = vrot.lane.b32.xlu0 %v2930, 112
        %v2967 = vpop.permute.xlu0 %2966
        %2968 = vrot.lane.b32.xlu0 %v2931, 112
        %v2969 = vpop.permute.xlu0 %2968
        %2970 = vrot.lane.b32.xlu0 %v2932, 112
        %v2971 = vpop.permute.xlu0 %2970
        %2972 = vrot.lane.b32.xlu0 %v2933, 112
        %v2973 = vpop.permute.xlu0 %2972
        %2974 = vrot.lane.b32.xlu0 %v2934, 112
        %v2975 = vpop.permute.xlu0 %2974
        %2976 = vrot.lane.b32.xlu0 %v2935, 112
        %v2977 = vpop.permute.xlu0 %2976
        %2978 = vrot.lane.b32.xlu0 %v2936, 112
        %v2979 = vpop.permute.xlu0 %2978
        %2980 = vrot.lane.b32.xlu0 %v2937, 112
        %v2981 = vpop.permute.xlu0 %2980
        %2982 = vrot.lane.b32.xlu0 %v2938, 112
        %v2983 = vpop.permute.xlu0 %2982
        %2984 = vrot.lane.b32.xlu0 %v2939, 112
        %v2985 = vpop.permute.xlu0 %2984
        %2986 = vrot.lane.b32.xlu0 %v2940, 112
        %v2987 = vpop.permute.xlu0 %2986
        %2988 = vrot.lane.b32.xlu0 %v2941, 112
        %v2989 = vpop.permute.xlu0 %2988
        %v3006 = vsel %vm2621, %v2959, 0.0
        %3007 = vadd.xlane.f32.xlu0 %v3006
        %v3008 = vpop.xlane.xlu0 %3007
        %v3009 = vsel %vm2621, %v2961, 0.0
        %3010 = vadd.xlane.f32.xlu0 %v3009
        %v3011 = vpop.xlane.xlu0 %3010
        %v3012 = vsel %vm2621, %v2963, 0.0
        %3013 = vadd.xlane.f32.xlu0 %v3012
        %v3014 = vpop.xlane.xlu0 %3013
        %v3015 = vsel %vm2621, %v2965, 0.0
        %3016 = vadd.xlane.f32.xlu0 %v3015
        %v3017 = vpop.xlane.xlu0 %3016
        %v3018 = vsel %vm2621, %v2967, 0.0
        %3019 = vadd.xlane.f32.xlu0 %v3018
        %v3020 = vpop.xlane.xlu0 %3019
        %v3021 = vsel %vm2621, %v2969, 0.0
        %3022 = vadd.xlane.f32.xlu0 %v3021
        %v3023 = vpop.xlane.xlu0 %3022
        %v3024 = vsel %vm2621, %v2971, 0.0
        %3025 = vadd.xlane.f32.xlu0 %v3024
        %v3026 = vpop.xlane.xlu0 %3025
        %v3027 = vsel %vm2621, %v2973, 0.0
        %3028 = vadd.xlane.f32.xlu0 %v3027
        %v3029 = vpop.xlane.xlu0 %3028
        %v3030 = vsel %vm2621, %v2975, 0.0
        %3031 = vadd.xlane.f32.xlu0 %v3030
        %v3032 = vpop.xlane.xlu0 %3031
        %v3033 = vsel %vm2621, %v2977, 0.0
        %3034 = vadd.xlane.f32.xlu0 %v3033
        %v3035 = vpop.xlane.xlu0 %3034
        %v3036 = vsel %vm2621, %v2979, 0.0
        %3037 = vadd.xlane.f32.xlu0 %v3036
        %v3038 = vpop.xlane.xlu0 %3037
        %v3039 = vsel %vm2621, %v2981, 0.0
        %3040 = vadd.xlane.f32.xlu0 %v3039
        %v3041 = vpop.xlane.xlu0 %3040
        %v3042 = vsel %vm2621, %v2983, 0.0
        %3043 = vadd.xlane.f32.xlu0 %v3042
        %v3044 = vpop.xlane.xlu0 %3043
        %v3045 = vsel %vm2621, %v2985, 0.0
        %3046 = vadd.xlane.f32.xlu0 %v3045
        %v3047 = vpop.xlane.xlu0 %3046
        %v3048 = vsel %vm2621, %v2987, 0.0
        %3049 = vadd.xlane.f32.xlu0 %v3048
        %v3050 = vpop.xlane.xlu0 %3049
        %v3051 = vsel %vm2621, %v2989, 0.0
        %3052 = vadd.xlane.f32.xlu0 %v3051
        %v3053 = vpop.xlane.xlu0 %3052
        %3054 = vrot.lane.b32.xlu0 %v801, 32
        %v3055 = vpop.permute.xlu0 %3054
        %3056 = vrot.lane.b32.xlu0 %v802, 32
        %v3057 = vpop.permute.xlu0 %3056
        %3058 = vrot.lane.b32.xlu0 %v803, 32
        %v3059 = vpop.permute.xlu0 %3058
        %3060 = vrot.lane.b32.xlu0 %v804, 32
        %v3061 = vpop.permute.xlu0 %3060
        %3062 = vrot.lane.b32.xlu0 %v805, 32
        %v3063 = vpop.permute.xlu0 %3062
        %3064 = vrot.lane.b32.xlu0 %v806, 32
        %v3065 = vpop.permute.xlu0 %3064
        %3066 = vrot.lane.b32.xlu0 %v807, 32
        %v3067 = vpop.permute.xlu0 %3066
        %3068 = vrot.lane.b32.xlu0 %v808, 32
        %v3069 = vpop.permute.xlu0 %3068
        %3070 = vrot.lane.b32.xlu0 %v809, 32
        %v3071 = vpop.permute.xlu0 %3070
        %3072 = vrot.lane.b32.xlu0 %v810, 32
        %v3073 = vpop.permute.xlu0 %3072
        %3074 = vrot.lane.b32.xlu0 %v811, 32
        %v3075 = vpop.permute.xlu0 %3074
        %3076 = vrot.lane.b32.xlu0 %v812, 32
        %v3077 = vpop.permute.xlu0 %3076
        %3078 = vrot.lane.b32.xlu0 %v813, 32
        %v3079 = vpop.permute.xlu0 %3078
        %3080 = vrot.lane.b32.xlu0 %v814, 32
        %v3081 = vpop.permute.xlu0 %3080
        %3082 = vrot.lane.b32.xlu0 %v815, 32
        %v3083 = vpop.permute.xlu0 %3082
        %3084 = vrot.lane.b32.xlu0 %v816, 32
        %v3085 = vpop.permute.xlu0 %3084
        %v3102 = vmul.f32 %v2589, %v3055
        %v3103 = vmul.f32 %v2590, %v3057
        %v3104 = vmul.f32 %v2591, %v3059
        %v3105 = vmul.f32 %v2592, %v3061
        %v3106 = vmul.f32 %v2593, %v3063
        %v3107 = vmul.f32 %v2594, %v3065
        %v3108 = vmul.f32 %v2595, %v3067
        %v3109 = vmul.f32 %v2596, %v3069
        %v3110 = vmul.f32 %v2597, %v3071
        %v3111 = vmul.f32 %v2598, %v3073
        %v3112 = vmul.f32 %v2599, %v3075
        %v3113 = vmul.f32 %v2600, %v3077
        %v3114 = vmul.f32 %v2601, %v3079
        %v3115 = vmul.f32 %v2602, %v3081
        %v3116 = vmul.f32 %v2603, %v3083
        %v3117 = vmul.f32 %v2604, %v3085
        %3134 = vrot.lane.b32.xlu0 %v3102, 96
        %v3135 = vpop.permute.xlu0 %3134
        %3136 = vrot.lane.b32.xlu0 %v3103, 96
        %v3137 = vpop.permute.xlu0 %3136
        %3138 = vrot.lane.b32.xlu0 %v3104, 96
        %v3139 = vpop.permute.xlu0 %3138
        %3140 = vrot.lane.b32.xlu0 %v3105, 96
        %v3141 = vpop.permute.xlu0 %3140
        %3142 = vrot.lane.b32.xlu0 %v3106, 96
        %v3143 = vpop.permute.xlu0 %3142
        %3144 = vrot.lane.b32.xlu0 %v3107, 96
        %v3145 = vpop.permute.xlu0 %3144
        %3146 = vrot.lane.b32.xlu0 %v3108, 96
        %v3147 = vpop.permute.xlu0 %3146
        %3148 = vrot.lane.b32.xlu0 %v3109, 96
        %v3149 = vpop.permute.xlu0 %3148
        %3150 = vrot.lane.b32.xlu0 %v3110, 96
        %v3151 = vpop.permute.xlu0 %3150
        %3152 = vrot.lane.b32.xlu0 %v3111, 96
        %v3153 = vpop.permute.xlu0 %3152
        %3154 = vrot.lane.b32.xlu0 %v3112, 96
        %v3155 = vpop.permute.xlu0 %3154
        %3156 = vrot.lane.b32.xlu0 %v3113, 96
        %v3157 = vpop.permute.xlu0 %3156
        %3158 = vrot.lane.b32.xlu0 %v3114, 96
        %v3159 = vpop.permute.xlu0 %3158
        %3160 = vrot.lane.b32.xlu0 %v3115, 96
        %v3161 = vpop.permute.xlu0 %3160
        %3162 = vrot.lane.b32.xlu0 %v3116, 96
        %v3163 = vpop.permute.xlu0 %3162
        %3164 = vrot.lane.b32.xlu0 %v3117, 96
        %v3165 = vpop.permute.xlu0 %3164
        %v3182 = vsel %vm2621, %v3135, 0.0
        %3183 = vadd.xlane.f32.xlu0 %v3182
        %v3184 = vpop.xlane.xlu0 %3183
        %v3185 = vsel %vm2621, %v3137, 0.0
        %3186 = vadd.xlane.f32.xlu0 %v3185
        %v3187 = vpop.xlane.xlu0 %3186
        %v3188 = vsel %vm2621, %v3139, 0.0
        %3189 = vadd.xlane.f32.xlu0 %v3188
        %v3190 = vpop.xlane.xlu0 %3189
        %v3191 = vsel %vm2621, %v3141, 0.0
        %3192 = vadd.xlane.f32.xlu0 %v3191
        %v3193 = vpop.xlane.xlu0 %3192
        %v3194 = vsel %vm2621, %v3143, 0.0
        %3195 = vadd.xlane.f32.xlu0 %v3194
        %v3196 = vpop.xlane.xlu0 %3195
        %v3197 = vsel %vm2621, %v3145, 0.0
        %3198 = vadd.xlane.f32.xlu0 %v3197
        %v3199 = vpop.xlane.xlu0 %3198
        %v3200 = vsel %vm2621, %v3147, 0.0
        %3201 = vadd.xlane.f32.xlu0 %v3200
        %v3202 = vpop.xlane.xlu0 %3201
        %v3203 = vsel %vm2621, %v3149, 0.0
        %3204 = vadd.xlane.f32.xlu0 %v3203
        %v3205 = vpop.xlane.xlu0 %3204
        %v3206 = vsel %vm2621, %v3151, 0.0
        %3207 = vadd.xlane.f32.xlu0 %v3206
        %v3208 = vpop.xlane.xlu0 %3207
        %v3209 = vsel %vm2621, %v3153, 0.0
        %3210 = vadd.xlane.f32.xlu0 %v3209
        %v3211 = vpop.xlane.xlu0 %3210
        %v3212 = vsel %vm2621, %v3155, 0.0
        %3213 = vadd.xlane.f32.xlu0 %v3212
        %v3214 = vpop.xlane.xlu0 %3213
        %v3215 = vsel %vm2621, %v3157, 0.0
        %3216 = vadd.xlane.f32.xlu0 %v3215
        %v3217 = vpop.xlane.xlu0 %3216
        %v3218 = vsel %vm2621, %v3159, 0.0
        %3219 = vadd.xlane.f32.xlu0 %v3218
        %v3220 = vpop.xlane.xlu0 %3219
        %v3221 = vsel %vm2621, %v3161, 0.0
        %3222 = vadd.xlane.f32.xlu0 %v3221
        %v3223 = vpop.xlane.xlu0 %3222
        %v3224 = vsel %vm2621, %v3163, 0.0
        %3225 = vadd.xlane.f32.xlu0 %v3224
        %v3226 = vpop.xlane.xlu0 %3225
        %v3227 = vsel %vm2621, %v3165, 0.0
        %3228 = vadd.xlane.f32.xlu0 %v3227
        %v3229 = vpop.xlane.xlu0 %3228
        %3230 = vrot.lane.b32.xlu0 %v2589, 32
        %v3231 = vpop.permute.xlu0 %3230
        %3232 = vrot.lane.b32.xlu0 %v2590, 32
        %v3233 = vpop.permute.xlu0 %3232
        %3234 = vrot.lane.b32.xlu0 %v2591, 32
        %v3235 = vpop.permute.xlu0 %3234
        %3236 = vrot.lane.b32.xlu0 %v2592, 32
        %v3237 = vpop.permute.xlu0 %3236
        %3238 = vrot.lane.b32.xlu0 %v2593, 32
        %v3239 = vpop.permute.xlu0 %3238
        %3240 = vrot.lane.b32.xlu0 %v2594, 32
        %v3241 = vpop.permute.xlu0 %3240
        %3242 = vrot.lane.b32.xlu0 %v2595, 32
        %v3243 = vpop.permute.xlu0 %3242
        %3244 = vrot.lane.b32.xlu0 %v2596, 32
        %v3245 = vpop.permute.xlu0 %3244
        %3246 = vrot.lane.b32.xlu0 %v2597, 32
        %v3247 = vpop.permute.xlu0 %3246
        %3248 = vrot.lane.b32.xlu0 %v2598, 32
        %v3249 = vpop.permute.xlu0 %3248
        %3250 = vrot.lane.b32.xlu0 %v2599, 32
        %v3251 = vpop.permute.xlu0 %3250
        %3252 = vrot.lane.b32.xlu0 %v2600, 32
        %v3253 = vpop.permute.xlu0 %3252
        %3254 = vrot.lane.b32.xlu0 %v2601, 32
        %v3255 = vpop.permute.xlu0 %3254
        %3256 = vrot.lane.b32.xlu0 %v2602, 32
        %v3257 = vpop.permute.xlu0 %3256
        %3258 = vrot.lane.b32.xlu0 %v2603, 32
        %v3259 = vpop.permute.xlu0 %3258
        %3260 = vrot.lane.b32.xlu0 %v2604, 32
        %v3261 = vpop.permute.xlu0 %3260
        %v3278 = vmul.f32 %v2589, %v3231
        %v3279 = vmul.f32 %v2590, %v3233
        %v3280 = vmul.f32 %v2591, %v3235
        %v3281 = vmul.f32 %v2592, %v3237
        %v3282 = vmul.f32 %v2593, %v3239
        %v3283 = vmul.f32 %v2594, %v3241
        %v3284 = vmul.f32 %v2595, %v3243
        %v3285 = vmul.f32 %v2596, %v3245
        %v3286 = vmul.f32 %v2597, %v3247
        %v3287 = vmul.f32 %v2598, %v3249
        %v3288 = vmul.f32 %v2599, %v3251
        %v3289 = vmul.f32 %v2600, %v3253
        %v3290 = vmul.f32 %v2601, %v3255
        %v3291 = vmul.f32 %v2602, %v3257
        %v3292 = vmul.f32 %v2603, %v3259
        %v3293 = vmul.f32 %v2604, %v3261
        %3310 = vrot.lane.b32.xlu0 %v3278, 96
        %v3311 = vpop.permute.xlu0 %3310
        %3312 = vrot.lane.b32.xlu0 %v3279, 96
        %v3313 = vpop.permute.xlu0 %3312
        %3314 = vrot.lane.b32.xlu0 %v3280, 96
        %v3315 = vpop.permute.xlu0 %3314
        %3316 = vrot.lane.b32.xlu0 %v3281, 96
        %v3317 = vpop.permute.xlu0 %3316
        %3318 = vrot.lane.b32.xlu0 %v3282, 96
        %v3319 = vpop.permute.xlu0 %3318
        %3320 = vrot.lane.b32.xlu0 %v3283, 96
        %v3321 = vpop.permute.xlu0 %3320
        %3322 = vrot.lane.b32.xlu0 %v3284, 96
        %v3323 = vpop.permute.xlu0 %3322
        %3324 = vrot.lane.b32.xlu0 %v3285, 96
        %v3325 = vpop.permute.xlu0 %3324
        %3326 = vrot.lane.b32.xlu0 %v3286, 96
        %v3327 = vpop.permute.xlu0 %3326
        %3328 = vrot.lane.b32.xlu0 %v3287, 96
        %v3329 = vpop.permute.xlu0 %3328
        %3330 = vrot.lane.b32.xlu0 %v3288, 96
        %v3331 = vpop.permute.xlu0 %3330
        %3332 = vrot.lane.b32.xlu0 %v3289, 96
        %v3333 = vpop.permute.xlu0 %3332
        %3334 = vrot.lane.b32.xlu0 %v3290, 96
        %v3335 = vpop.permute.xlu0 %3334
        %3336 = vrot.lane.b32.xlu0 %v3291, 96
        %v3337 = vpop.permute.xlu0 %3336
        %3338 = vrot.lane.b32.xlu0 %v3292, 96
        %v3339 = vpop.permute.xlu0 %3338
        %3340 = vrot.lane.b32.xlu0 %v3293, 96
        %v3341 = vpop.permute.xlu0 %3340
        %v3358 = vsel %vm2621, %v3311, 0.0
        %3359 = vadd.xlane.f32.xlu0 %v3358
        %v3360 = vpop.xlane.xlu0 %3359
        %v3361 = vsel %vm2621, %v3313, 0.0
        %3362 = vadd.xlane.f32.xlu0 %v3361
        %v3363 = vpop.xlane.xlu0 %3362
        %v3364 = vsel %vm2621, %v3315, 0.0
        %3365 = vadd.xlane.f32.xlu0 %v3364
        %v3366 = vpop.xlane.xlu0 %3365
        %v3367 = vsel %vm2621, %v3317, 0.0
        %3368 = vadd.xlane.f32.xlu0 %v3367
        %v3369 = vpop.xlane.xlu0 %3368
        %v3370 = vsel %vm2621, %v3319, 0.0
        %3371 = vadd.xlane.f32.xlu0 %v3370
        %v3372 = vpop.xlane.xlu0 %3371
        %v3373 = vsel %vm2621, %v3321, 0.0
        %3374 = vadd.xlane.f32.xlu0 %v3373
        %v3375 = vpop.xlane.xlu0 %3374
        %v3376 = vsel %vm2621, %v3323, 0.0
        %3377 = vadd.xlane.f32.xlu0 %v3376
        %v3378 = vpop.xlane.xlu0 %3377
        %v3379 = vsel %vm2621, %v3325, 0.0
        %3380 = vadd.xlane.f32.xlu0 %v3379
        %v3381 = vpop.xlane.xlu0 %3380
        %v3382 = vsel %vm2621, %v3327, 0.0
        %3383 = vadd.xlane.f32.xlu0 %v3382
        %v3384 = vpop.xlane.xlu0 %3383
        %v3385 = vsel %vm2621, %v3329, 0.0
        %3386 = vadd.xlane.f32.xlu0 %v3385
        %v3387 = vpop.xlane.xlu0 %3386
        %v3388 = vsel %vm2621, %v3331, 0.0
        %3389 = vadd.xlane.f32.xlu0 %v3388
        %v3390 = vpop.xlane.xlu0 %3389
        %v3391 = vsel %vm2621, %v3333, 0.0
        %3392 = vadd.xlane.f32.xlu0 %v3391
        %v3393 = vpop.xlane.xlu0 %3392
        %v3394 = vsel %vm2621, %v3335, 0.0
        %3395 = vadd.xlane.f32.xlu0 %v3394
        %v3396 = vpop.xlane.xlu0 %3395
        %v3397 = vsel %vm2621, %v3337, 0.0
        %3398 = vadd.xlane.f32.xlu0 %v3397
        %v3399 = vpop.xlane.xlu0 %3398
        %v3400 = vsel %vm2621, %v3339, 0.0
        %3401 = vadd.xlane.f32.xlu0 %v3400
        %v3402 = vpop.xlane.xlu0 %3401
        %v3403 = vsel %vm2621, %v3341, 0.0
        %3404 = vadd.xlane.f32.xlu0 %v3403
        %v3405 = vpop.xlane.xlu0 %3404
        %3406 = vrot.lane.b32.xlu0 %v2926, 96
        %v3407 = vpop.permute.xlu0 %3406
        %3408 = vrot.lane.b32.xlu0 %v2927, 96
        %v3409 = vpop.permute.xlu0 %3408
        %3410 = vrot.lane.b32.xlu0 %v2928, 96
        %v3411 = vpop.permute.xlu0 %3410
        %3412 = vrot.lane.b32.xlu0 %v2929, 96
        %v3413 = vpop.permute.xlu0 %3412
        %3414 = vrot.lane.b32.xlu0 %v2930, 96
        %v3415 = vpop.permute.xlu0 %3414
        %3416 = vrot.lane.b32.xlu0 %v2931, 96
        %v3417 = vpop.permute.xlu0 %3416
        %3418 = vrot.lane.b32.xlu0 %v2932, 96
        %v3419 = vpop.permute.xlu0 %3418
        %3420 = vrot.lane.b32.xlu0 %v2933, 96
        %v3421 = vpop.permute.xlu0 %3420
        %3422 = vrot.lane.b32.xlu0 %v2934, 96
        %v3423 = vpop.permute.xlu0 %3422
        %3424 = vrot.lane.b32.xlu0 %v2935, 96
        %v3425 = vpop.permute.xlu0 %3424
        %3426 = vrot.lane.b32.xlu0 %v2936, 96
        %v3427 = vpop.permute.xlu0 %3426
        %3428 = vrot.lane.b32.xlu0 %v2937, 96
        %v3429 = vpop.permute.xlu0 %3428
        %3430 = vrot.lane.b32.xlu0 %v2938, 96
        %v3431 = vpop.permute.xlu0 %3430
        %3432 = vrot.lane.b32.xlu0 %v2939, 96
        %v3433 = vpop.permute.xlu0 %3432
        %3434 = vrot.lane.b32.xlu0 %v2940, 96
        %v3435 = vpop.permute.xlu0 %3434
        %3436 = vrot.lane.b32.xlu0 %v2941, 96
        %v3437 = vpop.permute.xlu0 %3436
        %v3454 = vsel %vm2621, %v3407, 0.0
        %3455 = vadd.xlane.f32.xlu0 %v3454
        %v3456 = vpop.xlane.xlu0 %3455
        %v3457 = vsel %vm2621, %v3409, 0.0
        %3458 = vadd.xlane.f32.xlu0 %v3457
        %v3459 = vpop.xlane.xlu0 %3458
        %v3460 = vsel %vm2621, %v3411, 0.0
        %3461 = vadd.xlane.f32.xlu0 %v3460
        %v3462 = vpop.xlane.xlu0 %3461
        %v3463 = vsel %vm2621, %v3413, 0.0
        %3464 = vadd.xlane.f32.xlu0 %v3463
        %v3465 = vpop.xlane.xlu0 %3464
        %v3466 = vsel %vm2621, %v3415, 0.0
        %3467 = vadd.xlane.f32.xlu0 %v3466
        %v3468 = vpop.xlane.xlu0 %3467
        %v3469 = vsel %vm2621, %v3417, 0.0
        %3470 = vadd.xlane.f32.xlu0 %v3469
        %v3471 = vpop.xlane.xlu0 %3470
        %v3472 = vsel %vm2621, %v3419, 0.0
        %3473 = vadd.xlane.f32.xlu0 %v3472
        %v3474 = vpop.xlane.xlu0 %3473
        %v3475 = vsel %vm2621, %v3421, 0.0
        %3476 = vadd.xlane.f32.xlu0 %v3475
        %v3477 = vpop.xlane.xlu0 %3476
        %v3478 = vsel %vm2621, %v3423, 0.0
        %3479 = vadd.xlane.f32.xlu0 %v3478
        %v3480 = vpop.xlane.xlu0 %3479
        %v3481 = vsel %vm2621, %v3425, 0.0
        %3482 = vadd.xlane.f32.xlu0 %v3481
        %v3483 = vpop.xlane.xlu0 %3482
        %v3484 = vsel %vm2621, %v3427, 0.0
        %3485 = vadd.xlane.f32.xlu0 %v3484
        %v3486 = vpop.xlane.xlu0 %3485
        %v3487 = vsel %vm2621, %v3429, 0.0
        %3488 = vadd.xlane.f32.xlu0 %v3487
        %v3489 = vpop.xlane.xlu0 %3488
        %v3490 = vsel %vm2621, %v3431, 0.0
        %3491 = vadd.xlane.f32.xlu0 %v3490
        %v3492 = vpop.xlane.xlu0 %3491
        %v3493 = vsel %vm2621, %v3433, 0.0
        %3494 = vadd.xlane.f32.xlu0 %v3493
        %v3495 = vpop.xlane.xlu0 %3494
        %v3496 = vsel %vm2621, %v3435, 0.0
        %3497 = vadd.xlane.f32.xlu0 %v3496
        %v3498 = vpop.xlane.xlu0 %3497
        %v3499 = vsel %vm2621, %v3437, 0.0
        %3500 = vadd.xlane.f32.xlu0 %v3499
        %v3501 = vpop.xlane.xlu0 %3500
        %v3502 = vsel %vm2621, %v801, %v2624
        %v3503 = vsel %vm2621, %v802, %v2627
        %v3504 = vsel %vm2621, %v803, %v2630
        %v3505 = vsel %vm2621, %v804, %v2633
        %v3506 = vsel %vm2621, %v805, %v2636
        %v3507 = vsel %vm2621, %v806, %v2639
        %v3508 = vsel %vm2621, %v807, %v2642
        %v3509 = vsel %vm2621, %v808, %v2645
        %v3510 = vsel %vm2621, %v809, %v2648
        %v3511 = vsel %vm2621, %v810, %v2651
        %v3512 = vsel %vm2621, %v811, %v2654
        %v3513 = vsel %vm2621, %v812, %v2657
        %v3514 = vsel %vm2621, %v813, %v2660
        %v3515 = vsel %vm2621, %v814, %v2663
        %v3516 = vsel %vm2621, %v815, %v2666
        %v3517 = vsel %vm2621, %v816, %v2669
        %vm3518 = vcmask 138240
        %v3519 = vsel %vm3518, %v3502, %v2816
        %v3520 = vsel %vm3518, %v3503, %v2819
        %v3521 = vsel %vm3518, %v3504, %v2822
        %v3522 = vsel %vm3518, %v3505, %v2825
        %v3523 = vsel %vm3518, %v3506, %v2828
        %v3524 = vsel %vm3518, %v3507, %v2831
        %v3525 = vsel %vm3518, %v3508, %v2834
        %v3526 = vsel %vm3518, %v3509, %v2837
        %v3527 = vsel %vm3518, %v3510, %v2840
        %v3528 = vsel %vm3518, %v3511, %v2843
        %v3529 = vsel %vm3518, %v3512, %v2846
        %v3530 = vsel %vm3518, %v3513, %v2849
        %v3531 = vsel %vm3518, %v3514, %v2852
        %v3532 = vsel %vm3518, %v3515, %v2855
        %v3533 = vsel %vm3518, %v3516, %v2858
        %v3534 = vsel %vm3518, %v3517, %v2861
        %vm3535 = vcmask 146432
        %v3536 = vsel %vm3535, %v3519, %v3008
        %v3537 = vsel %vm3535, %v3520, %v3011
        %v3538 = vsel %vm3535, %v3521, %v3014
        %v3539 = vsel %vm3535, %v3522, %v3017
        %v3540 = vsel %vm3535, %v3523, %v3020
        %v3541 = vsel %vm3535, %v3524, %v3023
        %v3542 = vsel %vm3535, %v3525, %v3026
        %v3543 = vsel %vm3535, %v3526, %v3029
        %v3544 = vsel %vm3535, %v3527, %v3032
        %v3545 = vsel %vm3535, %v3528, %v3035
        %v3546 = vsel %vm3535, %v3529, %v3038
        %v3547 = vsel %vm3535, %v3530, %v3041
        %v3548 = vsel %vm3535, %v3531, %v3044
        %v3549 = vsel %vm3535, %v3532, %v3047
        %v3550 = vsel %vm3535, %v3533, %v3050
        %v3551 = vsel %vm3535, %v3534, %v3053
        %vm3552 = vcmask 154624
        %v3553 = vsel %vm3552, %v3536, %v3184
        %v3554 = vsel %vm3552, %v3537, %v3187
        %v3555 = vsel %vm3552, %v3538, %v3190
        %v3556 = vsel %vm3552, %v3539, %v3193
        %v3557 = vsel %vm3552, %v3540, %v3196
        %v3558 = vsel %vm3552, %v3541, %v3199
        %v3559 = vsel %vm3552, %v3542, %v3202
        %v3560 = vsel %vm3552, %v3543, %v3205
        %v3561 = vsel %vm3552, %v3544, %v3208
        %v3562 = vsel %vm3552, %v3545, %v3211
        %v3563 = vsel %vm3552, %v3546, %v3214
        %v3564 = vsel %vm3552, %v3547, %v3217
        %v3565 = vsel %vm3552, %v3548, %v3220
        %v3566 = vsel %vm3552, %v3549, %v3223
        %v3567 = vsel %vm3552, %v3550, %v3226
        %v3568 = vsel %vm3552, %v3551, %v3229
        %vm3569 = vcmask 162816
        %v3570 = vsel %vm3569, %v3553, %v3360
        %v3571 = vsel %vm3569, %v3554, %v3363
        %v3572 = vsel %vm3569, %v3555, %v3366
        %v3573 = vsel %vm3569, %v3556, %v3369
        %v3574 = vsel %vm3569, %v3557, %v3372
        %v3575 = vsel %vm3569, %v3558, %v3375
        %v3576 = vsel %vm3569, %v3559, %v3378
        %v3577 = vsel %vm3569, %v3560, %v3381
        %v3578 = vsel %vm3569, %v3561, %v3384
        %v3579 = vsel %vm3569, %v3562, %v3387
        %v3580 = vsel %vm3569, %v3563, %v3390
        %v3581 = vsel %vm3569, %v3564, %v3393
        %v3582 = vsel %vm3569, %v3565, %v3396
        %v3583 = vsel %vm3569, %v3566, %v3399
        %v3584 = vsel %vm3569, %v3567, %v3402
        %v3585 = vsel %vm3569, %v3568, %v3405
        %vm3586 = vcmask 171008
        %v3587 = vsel %vm3586, %v3570, %v3456
        %v3588 = vsel %vm3586, %v3571, %v3459
        %v3589 = vsel %vm3586, %v3572, %v3462
        %v3590 = vsel %vm3586, %v3573, %v3465
        %v3591 = vsel %vm3586, %v3574, %v3468
        %v3592 = vsel %vm3586, %v3575, %v3471
        %v3593 = vsel %vm3586, %v3576, %v3474
        %v3594 = vsel %vm3586, %v3577, %v3477
        %v3595 = vsel %vm3586, %v3578, %v3480
        %v3596 = vsel %vm3586, %v3579, %v3483
        %v3597 = vsel %vm3586, %v3580, %v3486
        %v3598 = vsel %vm3586, %v3581, %v3489
        %v3599 = vsel %vm3586, %v3582, %v3492
        %v3600 = vsel %vm3586, %v3583, %v3495
        %v3601 = vsel %vm3586, %v3584, %v3498
        %v3602 = vsel %vm3586, %v3585, %v3501
        %v3603 = vpack.c.bf16 %v3588, %v3587
        %v3604 = vpack.c.bf16 %v3590, %v3589
        %v3605 = vpack.c.bf16 %v3592, %v3591
        %v3606 = vpack.c.bf16 %v3594, %v3593
        %v3607 = vpack.c.bf16 %v3596, %v3595
        %v3608 = vpack.c.bf16 %v3598, %v3597
        %v3609 = vpack.c.bf16 %v3600, %v3599
        %v3610 = vpack.c.bf16 %v3602, %v3601
        %v3611 = vld [vmem:[%s7] sm:$0xf]
        %v3612 = vld [vmem:[%s7 + $0x4] sm:$0xf]
        %v3613 = vld [vmem:[%s7 + $0x8] sm:$0x7]
        %v3614 = vld [vmem:[%s8] sm:$0x1]
        %v3616 = vlaneseq
        %v3617 = vshrl.u32 %v3616, 7
        %v3618 = vsub.s32 0, %v3617
        %v3619 = vrot.slane %v3614, %v3618
        %v3624 = vunpack.c.l.b16 %v3611
        %v3625 = vunpack.c.l.b16 %v3612
        %v3626 = vunpack.c.l.b16 %v3613
        %v3627 = vpack.c.b16 %v3625, %v3624
        %v3628 = vpack.c.b16 %v3626, %v3626
        %vm3630 = vcmask 179200
        %v3632 = vsel %vm3630, %v3603, 0
        %v3635 = vsel %vm3630, %v3604, 0
        %v3638 = vsel %vm3630, %v3605, 0
        %v3641 = vsel %vm3630, %v3606, 0
        %v3644 = vsel %vm3630, %v3607, 0
        %v3647 = vsel %vm3630, %v3608, 0
        %v3650 = vsel %vm3630, %v3609, 0
        %v3653 = vsel %vm3630, %v3610, 0
        %vm3655 = vcmask 1042432
        %v3657 = vsel %vm3655, %v3628, 0
        %3659 = vmatprep.subr.bf16.mxu0 0
        %3660 = vmatpush1.bf16.msra.mxu0 0
        %3661 = vmatprep.subr.bf16.mxu0 0
        %3662 = vmatpush1.bf16.msra.mxu0 0
        %3663 = vmatprep.subr.bf16.mxu0 0
        %3664 = vmatpush1.bf16.msra.mxu0 0
        %3665 = vmatprep.subr.bf16.mxu0 0
        %3666 = vmatpush1.bf16.msra.mxu0 0
        %3667 = vmatprep.subr.bf16.mxu0 0
        %3668 = vmatpush1.bf16.msra.mxu0 0
        %3669 = vmatprep.subr.bf16.mxu0 0
        %3670 = vmatpush1.bf16.msra.mxu0 0
        %3671 = vmatprep.subr.bf16.mxu0 0
        %3672 = vmatpush1.bf16.msra.mxu0 %v3657
        %3673 = vmatprep.subr.bf16.mxu0 0
        %3674 = vmatpush1.bf16.msra.mxu0 %v3627
        %3675 = vmatprep.subr.bf16.mxu0 0
        %3676 = vmatpush2.bf16.msra.mxu0 0
        %3677 = vmatprep.subr.bf16.mxu0 0
        %3678 = vmatpush2.bf16.msra.mxu0 0
        %3679 = vmatprep.subr.bf16.mxu0 0
        %3680 = vmatpush2.bf16.msra.mxu0 0
        %3681 = vmatprep.subr.bf16.mxu0 0
        %3682 = vmatpush2.bf16.msra.mxu0 0
        %3683 = vmatprep.subr.bf16.mxu0 0
        %3684 = vmatpush2.bf16.msra.mxu0 0
        %3685 = vmatprep.subr.bf16.mxu0 0
        %3686 = vmatpush2.bf16.msra.mxu0 0
        %3687 = vmatprep.subr.bf16.mxu0 0
        %3688 = vmatpush2.bf16.msra.mxu0 0
        %3689 = vmatprep.subr.bf16.mxu0 0
        %3690 = vmatpush2.bf16.msra.mxu0 0
        %3691 = vmatprep.mubr.bf16.mxu0 0
        %3692 = vmatmul.mubr.bf16.gmra.mxu0 %v3632
        %v3693 = vpop.f32.mrf.mxu0
        %v3694 = vadd.f32 %v3619, %v3693
        %v3695 = vpop.f32.mrf.mxu0
        %v3696 = vpop.f32.mrf.mxu0
        %v3697 = vadd.f32 %v3619, %v3696
        %v3698 = vpop.f32.mrf.mxu0
        %3699 = vmatprep.mubr.bf16.mxu0 0
        %3700 = vmatmul.mubr.bf16.gmra.mxu0 %v3635
        %v3701 = vpop.f32.mrf.mxu0
        %v3702 = vadd.f32 %v3619, %v3701
        %v3703 = vpop.f32.mrf.mxu0
        %v3704 = vpop.f32.mrf.mxu0
        %v3705 = vadd.f32 %v3619, %v3704
        %v3706 = vpop.f32.mrf.mxu0
        %3707 = vmatprep.mubr.bf16.mxu0 0
        %3708 = vmatmul.mubr.bf16.gmra.mxu0 %v3638
        %v3709 = vpop.f32.mrf.mxu0
        %v3710 = vadd.f32 %v3619, %v3709
        %v3711 = vpop.f32.mrf.mxu0
        %v3712 = vpop.f32.mrf.mxu0
        %v3713 = vadd.f32 %v3619, %v3712
        %v3714 = vpop.f32.mrf.mxu0
        %3715 = vmatprep.mubr.bf16.mxu0 0
        %3716 = vmatmul.mubr.bf16.gmra.mxu0 %v3641
        %v3717 = vpop.f32.mrf.mxu0
        %v3718 = vadd.f32 %v3619, %v3717
        %v3719 = vpop.f32.mrf.mxu0
        %v3720 = vpop.f32.mrf.mxu0
        %v3721 = vadd.f32 %v3619, %v3720
        %v3722 = vpop.f32.mrf.mxu0
        %3723 = vmatprep.mubr.bf16.mxu0 0
        %3724 = vmatmul.mubr.bf16.gmra.mxu0 %v3644
        %v3725 = vpop.f32.mrf.mxu0
        %v3726 = vadd.f32 %v3619, %v3725
        %v3727 = vpop.f32.mrf.mxu0
        %v3728 = vpop.f32.mrf.mxu0
        %v3729 = vadd.f32 %v3619, %v3728
        %v3730 = vpop.f32.mrf.mxu0
        %3731 = vmatprep.mubr.bf16.mxu0 0
        %3732 = vmatmul.mubr.bf16.gmra.mxu0 %v3647
        %v3733 = vpop.f32.mrf.mxu0
        %v3734 = vadd.f32 %v3619, %v3733
        %v3735 = vpop.f32.mrf.mxu0
        %v3736 = vpop.f32.mrf.mxu0
        %v3737 = vadd.f32 %v3619, %v3736
        %v3738 = vpop.f32.mrf.mxu0
        %3739 = vmatprep.mubr.bf16.mxu0 0
        %3740 = vmatmul.mubr.bf16.gmra.mxu0 %v3650
        %v3741 = vpop.f32.mrf.mxu0
        %v3742 = vadd.f32 %v3619, %v3741
        %v3743 = vpop.f32.mrf.mxu0
        %v3744 = vpop.f32.mrf.mxu0
        %v3745 = vadd.f32 %v3619, %v3744
        %v3746 = vpop.f32.mrf.mxu0
        %3747 = vmatprep.mubr.bf16.mxu0 0
        %3748 = vmatmul.mubr.bf16.gmra.mxu0 %v3653
        %v3749 = vpop.f32.mrf.mxu0
        %v3750 = vadd.f32 %v3619, %v3749
        %v3751 = vpop.f32.mrf.mxu0
        %v3752 = vpop.f32.mrf.mxu0
        %v3753 = vadd.f32 %v3619, %v3752
        %v3754 = vpop.f32.mrf.mxu0
        %3755 = vdwg.mxu0
        %v3756 = vmax.f32 %v3694, 0.0
        %v3757 = vmax.f32 %v3697, 0.0
        %v3758 = vmax.f32 %v3702, 0.0
        %v3759 = vmax.f32 %v3705, 0.0
        %v3760 = vmax.f32 %v3710, 0.0
        %v3761 = vmax.f32 %v3713, 0.0
        %v3762 = vmax.f32 %v3718, 0.0
        %v3763 = vmax.f32 %v3721, 0.0
        %v3764 = vmax.f32 %v3726, 0.0
        %v3765 = vmax.f32 %v3729, 0.0
        %v3766 = vmax.f32 %v3734, 0.0
        %v3767 = vmax.f32 %v3737, 0.0
        %v3768 = vmax.f32 %v3742, 0.0
        %v3769 = vmax.f32 %v3745, 0.0
        %v3770 = vmax.f32 %v3750, 0.0
        %v3771 = vmax.f32 %v3753, 0.0
        %v3772 = vpack.c.bf16 %v3757, %v3756
        %v3773 = vpack.c.bf16 %v3759, %v3758
        %v3774 = vpack.c.bf16 %v3761, %v3760
        %v3775 = vpack.c.bf16 %v3763, %v3762
        %v3776 = vpack.c.bf16 %v3765, %v3764
        %v3777 = vpack.c.bf16 %v3767, %v3766
        %v3778 = vpack.c.bf16 %v3769, %v3768
        %v3779 = vpack.c.bf16 %v3771, %v3770
        %v3780 = vld [vmem:[%s9] sm:$0xf]
        %v3781 = vld [vmem:[%s9 + $0x4] sm:$0xf]
        %v3782 = vld [vmem:[%s9 + $0x8] sm:$0xf]
        %v3783 = vld [vmem:[%s9 + $0xc] sm:$0xf]
        %v3784 = vld [vmem:[%s9 + $0x10] sm:$0xf]
        %v3785 = vld [vmem:[%s9 + $0x14] sm:$0xf]
        %v3786 = vld [vmem:[%s9 + $0x18] sm:$0xf]
        %v3787 = vld [vmem:[%s9 + $0x1c] sm:$0xf]
        %v3788 = vld [vmem:[%s10] sm:$0x1]
        %v3790 = vlaneseq
        %v3791 = vshrl.u32 %v3790, 7
        %v3792 = vsub.s32 0, %v3791
        %v3793 = vrot.slane %v3788, %v3792
        %v3803 = vunpack.c.l.b16 %v3780
        %v3804 = vunpack.c.l.b16 %v3781
        %v3805 = vunpack.c.l.b16 %v3782
        %v3806 = vunpack.c.l.b16 %v3783
        %v3807 = vunpack.c.l.b16 %v3784
        %v3808 = vunpack.c.l.b16 %v3785
        %v3809 = vunpack.c.l.b16 %v3786
        %v3810 = vunpack.c.l.b16 %v3787
        %v3811 = vpack.c.b16 %v3804, %v3803
        %v3812 = vpack.c.b16 %v3806, %v3805
        %v3813 = vpack.c.b16 %v3808, %v3807
        %v3814 = vpack.c.b16 %v3810, %v3809
        %vm3819 = vcmask 523264
        %v3821 = vsel %vm3819, %v3772, 0
        %v3824 = vsel %vm3819, %v3773, 0
        %v3827 = vsel %vm3819, %v3774, 0
        %v3830 = vsel %vm3819, %v3775, 0
        %v3833 = vsel %vm3819, %v3776, 0
        %v3836 = vsel %vm3819, %v3777, 0
        %v3839 = vsel %vm3819, %v3778, 0
        %v3842 = vsel %vm3819, %v3779, 0
        %3844 = vmatprep.subr.bf16.mxu0 0
        %3845 = vmatpush1.bf16.msra.mxu0 0
        %3846 = vmatprep.subr.bf16.mxu0 0
        %3847 = vmatpush1.bf16.msra.mxu0 0
        %3848 = vmatprep.subr.bf16.mxu0 0
        %3849 = vmatpush1.bf16.msra.mxu0 0
        %3850 = vmatprep.subr.bf16.mxu0 0
        %3851 = vmatpush1.bf16.msra.mxu0 0
        %3852 = vmatprep.subr.bf16.mxu0 0
        %3853 = vmatpush1.bf16.msra.mxu0 %v3814
        %3854 = vmatprep.subr.bf16.mxu0 0
        %3855 = vmatpush1.bf16.msra.mxu0 %v3813
        %3856 = vmatprep.subr.bf16.mxu0 0
        %3857 = vmatpush1.bf16.msra.mxu0 %v3812
        %3858 = vmatprep.subr.bf16.mxu0 0
        %3859 = vmatpush1.bf16.msra.mxu0 %v3811
        %3860 = vmatprep.subr.bf16.mxu0 0
        %3861 = vmatpush2.bf16.msra.mxu0 0
        %3862 = vmatprep.subr.bf16.mxu0 0
        %3863 = vmatpush2.bf16.msra.mxu0 0
        %3864 = vmatprep.subr.bf16.mxu0 0
        %3865 = vmatpush2.bf16.msra.mxu0 0
        %3866 = vmatprep.subr.bf16.mxu0 0
        %3867 = vmatpush2.bf16.msra.mxu0 0
        %3868 = vmatprep.subr.bf16.mxu0 0
        %3869 = vmatpush2.bf16.msra.mxu0 0
        %3870 = vmatprep.subr.bf16.mxu0 0
        %3871 = vmatpush2.bf16.msra.mxu0 0
        %3872 = vmatprep.subr.bf16.mxu0 0
        %3873 = vmatpush2.bf16.msra.mxu0 0
        %3874 = vmatprep.subr.bf16.mxu0 0
        %3875 = vmatpush2.bf16.msra.mxu0 0
        %3876 = vmatprep.mubr.bf16.mxu0 0
        %3877 = vmatmul.mubr.bf16.gmra.mxu0 %v3821
        %v3878 = vpop.f32.mrf.mxu0
        %v3879 = vadd.f32 %v3793, %v3878
        %v3880 = vpop.f32.mrf.mxu0
        %v3881 = vpop.f32.mrf.mxu0
        %v3882 = vadd.f32 %v3793, %v3881
        %v3883 = vpop.f32.mrf.mxu0
        %3884 = vmatprep.mubr.bf16.mxu0 0
        %3885 = vmatmul.mubr.bf16.gmra.mxu0 %v3824
        %v3886 = vpop.f32.mrf.mxu0
        %v3887 = vadd.f32 %v3793, %v3886
        %v3888 = vpop.f32.mrf.mxu0
        %v3889 = vpop.f32.mrf.mxu0
        %v3890 = vadd.f32 %v3793, %v3889
        %v3891 = vpop.f32.mrf.mxu0
        %3892 = vmatprep.mubr.bf16.mxu0 0
        %3893 = vmatmul.mubr.bf16.gmra.mxu0 %v3827
        %v3894 = vpop.f32.mrf.mxu0
        %v3895 = vadd.f32 %v3793, %v3894
        %v3896 = vpop.f32.mrf.mxu0
        %v3897 = vpop.f32.mrf.mxu0
        %v3898 = vadd.f32 %v3793, %v3897
        %v3899 = vpop.f32.mrf.mxu0
        %3900 = vmatprep.mubr.bf16.mxu0 0
        %3901 = vmatmul.mubr.bf16.gmra.mxu0 %v3830
        %v3902 = vpop.f32.mrf.mxu0
        %v3903 = vadd.f32 %v3793, %v3902
        %v3904 = vpop.f32.mrf.mxu0
        %v3905 = vpop.f32.mrf.mxu0
        %v3906 = vadd.f32 %v3793, %v3905
        %v3907 = vpop.f32.mrf.mxu0
        %3908 = vmatprep.mubr.bf16.mxu0 0
        %3909 = vmatmul.mubr.bf16.gmra.mxu0 %v3833
        %v3910 = vpop.f32.mrf.mxu0
        %v3911 = vadd.f32 %v3793, %v3910
        %v3912 = vpop.f32.mrf.mxu0
        %v3913 = vpop.f32.mrf.mxu0
        %v3914 = vadd.f32 %v3793, %v3913
        %v3915 = vpop.f32.mrf.mxu0
        %3916 = vmatprep.mubr.bf16.mxu0 0
        %3917 = vmatmul.mubr.bf16.gmra.mxu0 %v3836
        %v3918 = vpop.f32.mrf.mxu0
        %v3919 = vadd.f32 %v3793, %v3918
        %v3920 = vpop.f32.mrf.mxu0
        %v3921 = vpop.f32.mrf.mxu0
        %v3922 = vadd.f32 %v3793, %v3921
        %v3923 = vpop.f32.mrf.mxu0
        %3924 = vmatprep.mubr.bf16.mxu0 0
        %3925 = vmatmul.mubr.bf16.gmra.mxu0 %v3839
        %v3926 = vpop.f32.mrf.mxu0
        %v3927 = vadd.f32 %v3793, %v3926
        %v3928 = vpop.f32.mrf.mxu0
        %v3929 = vpop.f32.mrf.mxu0
        %v3930 = vadd.f32 %v3793, %v3929
        %v3931 = vpop.f32.mrf.mxu0
        %3932 = vmatprep.mubr.bf16.mxu0 0
        %3933 = vmatmul.mubr.bf16.gmra.mxu0 %v3842
        %v3934 = vpop.f32.mrf.mxu0
        %v3935 = vadd.f32 %v3793, %v3934
        %v3936 = vpop.f32.mrf.mxu0
        %v3937 = vpop.f32.mrf.mxu0
        %v3938 = vadd.f32 %v3793, %v3937
        %v3939 = vpop.f32.mrf.mxu0
        %3940 = vdwg.mxu0
        %v3941 = vmax.f32 %v3879, 0.0
        %v3942 = vmax.f32 %v3882, 0.0
        %v3943 = vmax.f32 %v3887, 0.0
        %v3944 = vmax.f32 %v3890, 0.0
        %v3945 = vmax.f32 %v3895, 0.0
        %v3946 = vmax.f32 %v3898, 0.0
        %v3947 = vmax.f32 %v3903, 0.0
        %v3948 = vmax.f32 %v3906, 0.0
        %v3949 = vmax.f32 %v3911, 0.0
        %v3950 = vmax.f32 %v3914, 0.0
        %v3951 = vmax.f32 %v3919, 0.0
        %v3952 = vmax.f32 %v3922, 0.0
        %v3953 = vmax.f32 %v3927, 0.0
        %v3954 = vmax.f32 %v3930, 0.0
        %v3955 = vmax.f32 %v3935, 0.0
        %v3956 = vmax.f32 %v3938, 0.0
        %v3957 = vld [vmem:[%s11] sm:$0x1]
        %v3959 = vlaneseq
        %v3960 = vshrl.u32 %v3959, 7
        %v3961 = vsub.s32 0, %v3960
        %v3962 = vrot.slane %v3957, %v3961
        %v3964 = vmul.f32 %v3941, %v3962
        %v3965 = vmul.f32 %v3942, %v3962
        %v3966 = vmul.f32 %v3943, %v3962
        %v3967 = vmul.f32 %v3944, %v3962
        %v3968 = vmul.f32 %v3945, %v3962
        %v3969 = vmul.f32 %v3946, %v3962
        %v3970 = vmul.f32 %v3947, %v3962
        %v3971 = vmul.f32 %v3948, %v3962
        %v3972 = vmul.f32 %v3949, %v3962
        %v3973 = vmul.f32 %v3950, %v3962
        %v3974 = vmul.f32 %v3951, %v3962
        %v3975 = vmul.f32 %v3952, %v3962
        %v3976 = vmul.f32 %v3953, %v3962
        %v3977 = vmul.f32 %v3954, %v3962
        %v3978 = vmul.f32 %v3955, %v3962
        %v3979 = vmul.f32 %v3956, %v3962
        %v3980 = vsel %vm679, %v3964, 0.0
        %3981 = vadd.xlane.f32.xlu0 %v3980
        %v3982 = vpop.xlane.xlu0 %3981
        %v3983 = vsel %vm679, %v3965, 0.0
        %3984 = vadd.xlane.f32.xlu0 %v3983
        %v3985 = vpop.xlane.xlu0 %3984
        %v3986 = vsel %vm679, %v3966, 0.0
        %3987 = vadd.xlane.f32.xlu0 %v3986
        %v3988 = vpop.xlane.xlu0 %3987
        %v3989 = vsel %vm679, %v3967, 0.0
        %3990 = vadd.xlane.f32.xlu0 %v3989
        %v3991 = vpop.xlane.xlu0 %3990
        %v3992 = vsel %vm679, %v3968, 0.0
        %3993 = vadd.xlane.f32.xlu0 %v3992
        %v3994 = vpop.xlane.xlu0 %3993
        %v3995 = vsel %vm679, %v3969, 0.0
        %3996 = vadd.xlane.f32.xlu0 %v3995
        %v3997 = vpop.xlane.xlu0 %3996
        %v3998 = vsel %vm679, %v3970, 0.0
        %3999 = vadd.xlane.f32.xlu0 %v3998
        %v4000 = vpop.xlane.xlu0 %3999
        %v4001 = vsel %vm679, %v3971, 0.0
        %4002 = vadd.xlane.f32.xlu0 %v4001
        %v4003 = vpop.xlane.xlu0 %4002
        %v4004 = vsel %vm679, %v3972, 0.0
        %4005 = vadd.xlane.f32.xlu0 %v4004
        %v4006 = vpop.xlane.xlu0 %4005
        %v4007 = vsel %vm679, %v3973, 0.0
        %4008 = vadd.xlane.f32.xlu0 %v4007
        %v4009 = vpop.xlane.xlu0 %4008
        %v4010 = vsel %vm679, %v3974, 0.0
        %4011 = vadd.xlane.f32.xlu0 %v4010
        %v4012 = vpop.xlane.xlu0 %4011
        %v4013 = vsel %vm679, %v3975, 0.0
        %4014 = vadd.xlane.f32.xlu0 %v4013
        %v4015 = vpop.xlane.xlu0 %4014
        %v4016 = vsel %vm679, %v3976, 0.0
        %4017 = vadd.xlane.f32.xlu0 %v4016
        %v4018 = vpop.xlane.xlu0 %4017
        %v4019 = vsel %vm679, %v3977, 0.0
        %4020 = vadd.xlane.f32.xlu0 %v4019
        %v4021 = vpop.xlane.xlu0 %4020
        %v4022 = vsel %vm679, %v3978, 0.0
        %4023 = vadd.xlane.f32.xlu0 %v4022
        %v4024 = vpop.xlane.xlu0 %4023
        %v4025 = vsel %vm679, %v3979, 0.0
        %4026 = vadd.xlane.f32.xlu0 %v4025
        %v4027 = vpop.xlane.xlu0 %4026
        %v4028 = vld [vmem:[#allocation2] sm:$0x1]
        %4030 = vset.pattern.permute.xlu0 0
        %4031 = vperm.xlu0 %4030, %v4028
        %v4032 = vpop.permute.xlu0 %4031
        %v4034 = vlaneseq
        %v4035 = vshrl.u32 %v4034, 7
        %v4036 = vsub.s32 0, %v4035
        %v4037 = vrot.slane %v4032, %v4036
        %v4038 = vadd.f32 %v3982, %v4037
        %v4039 = vadd.f32 %v3985, %v4037
        %v4040 = vadd.f32 %v3988, %v4037
        %v4041 = vadd.f32 %v3991, %v4037
        %v4042 = vadd.f32 %v3994, %v4037
        %v4043 = vadd.f32 %v3997, %v4037
        %v4044 = vadd.f32 %v4000, %v4037
        %v4045 = vadd.f32 %v4003, %v4037
        %v4046 = vadd.f32 %v4006, %v4037
        %v4047 = vadd.f32 %v4009, %v4037
        %v4048 = vadd.f32 %v4012, %v4037
        %v4049 = vadd.f32 %v4015, %v4037
        %v4050 = vadd.f32 %v4018, %v4037
        %v4051 = vadd.f32 %v4021, %v4037
        %v4052 = vadd.f32 %v4024, %v4037
        %v4053 = vadd.f32 %v4027, %v4037
        %v4054 = vmax.f32 %v4038, 0.0
        %v4055 = vmax.f32 %v4039, 0.0
        %v4056 = vmax.f32 %v4040, 0.0
        %v4057 = vmax.f32 %v4041, 0.0
        %v4058 = vmax.f32 %v4042, 0.0
        %v4059 = vmax.f32 %v4043, 0.0
        %v4060 = vmax.f32 %v4044, 0.0
        %v4061 = vmax.f32 %v4045, 0.0
        %v4062 = vmax.f32 %v4046, 0.0
        %v4063 = vmax.f32 %v4047, 0.0
        %v4064 = vmax.f32 %v4048, 0.0
        %v4065 = vmax.f32 %v4049, 0.0
        %v4066 = vmax.f32 %v4050, 0.0
        %v4067 = vmax.f32 %v4051, 0.0
        %v4068 = vmax.f32 %v4052, 0.0
        %v4069 = vmax.f32 %v4053, 0.0
        %v4086 = vlaneseq
        %v4087 = vshrl.u32 %v4086, 7
        %v4088 = vsub.s32 %v834, %v4087
        %v4089 = vrot.slane %v4054, %v4088
        %v4090 = vadd.s32 %v834, 4294967288
        %v4091 = vlaneseq
        %v4092 = vshrl.u32 %v4091, 7
        %v4093 = vsub.s32 %v4090, %v4092
        %v4094 = vrot.slane %v4055, %v4093
        %vm4095 = vcmask 130112
        %v4096 = vsel %vm4095, %v4094, %v4089
        %v4097 = vadd.s32 %v834, 4294967280
        %v4098 = vlaneseq
        %v4099 = vshrl.u32 %v4098, 7
        %v4100 = vsub.s32 %v4097, %v4099
        %v4101 = vrot.slane %v4056, %v4100
        %vm4102 = vcmask 195712
        %v4103 = vsel %vm4102, %v4101, %v4096
        %v4104 = vadd.s32 %v834, 4294967272
        %v4105 = vlaneseq
        %v4106 = vshrl.u32 %v4105, 7
        %v4107 = vsub.s32 %v4104, %v4106
        %v4108 = vrot.slane %v4057, %v4107
        %vm4109 = vcmask 261312
        %v4110 = vsel %vm4109, %v4108, %v4103
        %v4111 = vadd.s32 %v834, 4294967264
        %v4112 = vlaneseq
        %v4113 = vshrl.u32 %v4112, 7
        %v4114 = vsub.s32 %v4111, %v4113
        %v4115 = vrot.slane %v4058, %v4114
        %vm4116 = vcmask 326912
        %v4117 = vsel %vm4116, %v4115, %v4110
        %v4118 = vadd.s32 %v834, 4294967256
        %v4119 = vlaneseq
        %v4120 = vshrl.u32 %v4119, 7
        %v4121 = vsub.s32 %v4118, %v4120
        %v4122 = vrot.slane %v4059, %v4121
        %vm4123 = vcmask 392512
        %v4124 = vsel %vm4123, %v4122, %v4117
        %v4125 = vadd.s32 %v834, 4294967248
        %v4126 = vlaneseq
        %v4127 = vshrl.u32 %v4126, 7
        %v4128 = vsub.s32 %v4125, %v4127
        %v4129 = vrot.slane %v4060, %v4128
        %vm4130 = vcmask 458112
        %v4131 = vsel %vm4130, %v4129, %v4124
        %v4132 = vadd.s32 %v834, 4294967240
        %v4133 = vlaneseq
        %v4134 = vshrl.u32 %v4133, 7
        %v4135 = vsub.s32 %v4132, %v4134
        %v4136 = vrot.slane %v4061, %v4135
        %vm4137 = vcmask 523712
        %v4138 = vsel %vm4137, %v4136, %v4131
        %v4139 = vadd.s32 %v834, 4294967232
        %v4140 = vlaneseq
        %v4141 = vshrl.u32 %v4140, 7
        %v4142 = vsub.s32 %v4139, %v4141
        %v4143 = vrot.slane %v4062, %v4142
        %vm4144 = vcmask 589312
        %v4145 = vsel %vm4144, %v4143, %v4138
        %v4146 = vadd.s32 %v834, 4294967224
        %v4147 = vlaneseq
        %v4148 = vshrl.u32 %v4147, 7
        %v4149 = vsub.s32 %v4146, %v4148
        %v4150 = vrot.slane %v4063, %v4149
        %vm4151 = vcmask 654912
        %v4152 = vsel %vm4151, %v4150, %v4145
        %v4153 = vadd.s32 %v834, 4294967216
        %v4154 = vlaneseq
        %v4155 = vshrl.u32 %v4154, 7
        %v4156 = vsub.s32 %v4153, %v4155
        %v4157 = vrot.slane %v4064, %v4156
        %vm4158 = vcmask 720512
        %v4159 = vsel %vm4158, %v4157, %v4152
        %v4160 = vadd.s32 %v834, 4294967208
        %v4161 = vlaneseq
        %v4162 = vshrl.u32 %v4161, 7
        %v4163 = vsub.s32 %v4160, %v4162
        %v4164 = vrot.slane %v4065, %v4163
        %vm4165 = vcmask 786112
        %v4166 = vsel %vm4165, %v4164, %v4159
        %v4167 = vadd.s32 %v834, 4294967200
        %v4168 = vlaneseq
        %v4169 = vshrl.u32 %v4168, 7
        %v4170 = vsub.s32 %v4167, %v4169
        %v4171 = vrot.slane %v4066, %v4170
        %vm4172 = vcmask 851712
        %v4173 = vsel %vm4172, %v4171, %v4166
        %v4174 = vadd.s32 %v834, 4294967192
        %v4175 = vlaneseq
        %v4176 = vshrl.u32 %v4175, 7
        %v4177 = vsub.s32 %v4174, %v4176
        %v4178 = vrot.slane %v4067, %v4177
        %vm4179 = vcmask 917312
        %v4180 = vsel %vm4179, %v4178, %v4173
        %v4181 = vadd.s32 %v834, 4294967184
        %v4182 = vlaneseq
        %v4183 = vshrl.u32 %v4182, 7
        %v4184 = vsub.s32 %v4181, %v4183
        %v4185 = vrot.slane %v4068, %v4184
        %vm4186 = vcmask 982912
        %v4187 = vsel %vm4186, %v4185, %v4180
        %v4188 = vadd.s32 %v834, 4294967176
        %v4189 = vlaneseq
        %v4190 = vshrl.u32 %v4189, 7
        %v4191 = vsub.s32 %v4188, %v4190
        %v4192 = vrot.slane %v4069, %v4191
        %vm4193 = vcmask 1048512
        %v4194 = vsel %vm4193, %v4192, %v4187
        %4196 = vst [vmem:[%s451] sm:$0x1] %v4194
        %s4197 = sand.u32 %s320, 1
        %s4198 = scalar_lea.sflag [#allocation4], %s4197
        %s4199 = sand.u32 %s320, 1
        %s4200 = scalar_lea.vmem [#allocation3], %s4199
        // Predicated region
        $region73: #{tpu_custom_call.1} parent=71 // pred_check
          %p4201 = pneg %p330
        $region74: #{tpu_custom_call.1} parent=71 // pred_check_branch
          %4203 = sbr.rel (%p4201) target = $region76
        $region75: #{tpu_custom_call.1} parent=71 // pred_region
          %s4205 = ssub.s32 16, 16
          %4206 = vsyncadd %s4198, %s4205
          %s4207 = smul.addr %s29, 16
          %s4208 = scalar_lea.hbm %s13, %s4207
          %s4210 = sshll.u32 %s4200, 4
          %s4211 = int_to_ptr.vmem [resolvable:$true] %s4210
          %4213 = dma.vmem_to_hbm [thread:$0]  %s4211, 16, %s4208, %s4198
        $region76: #{tpu_custom_call.1} parent=71 // pred_fallthru
          _
      $region72: #{tpu_custom_call.1} parent=5 // pred_fallthru
        _
      %p4214 = scmp.le.s32.totalorder 2, %s24
      // Predicated region
      $region77: #{tpu_custom_call.1} parent=5 // pred_check
        %p4215 = pneg %p4214
      $region78: #{tpu_custom_call.1} parent=5 // pred_check_branch
        %4217 = sbr.rel (%p4215) target = $region80
      $region79: #{tpu_custom_call.1} parent=5 // pred_region
        %s4218 = ssub.s32 %s24, 2
        // Predicated region
        $region81: #{tpu_custom_call.1} parent=79 // pred_check
          %p4219 = pneg %p336
        $region82: #{tpu_custom_call.1} parent=79 // pred_check_branch
          %4221 = sbr.rel (%p4219) target = $region84
        $region83: #{tpu_custom_call.1} parent=79 // pred_region
          %s4222 = sand.u32 %s321, 1
          %s4223 = scalar_lea.sflag [#allocation4], %s4222
          %s4224 = sand.u32 %s321, 1
          %s4225 = scalar_lea.vmem [#allocation3], %s4224
          %4226 = dma.done %s4223, 16
        $region84: #{tpu_custom_call.1} parent=79 // pred_fallthru
          _
      $region80: #{tpu_custom_call.1} parent=5 // pred_fallthru
        _
    $region6: #{tpu_custom_call.1} parent=1 // loop_footer
      %s28 = sadd.s32 1, %s24
    $region7: #{tpu_custom_call.1} parent=1 // loop_footer_branch
      %23 = sbr.rel target = $region3
    $region8: #{tpu_custom_call.1} parent=1 // loop_exit
      _
    %4227 = vsyncpa [#allocation4], 1
    %s4228 = scalar_lea.sflag [#allocation4], 1
    %4229 = vsyncpa %s4228, 1

</llo_original>
